<compile_context>
chip_gen: v7x
topology: tpu7x:2x2x1
jax: 0.10.0
libtpu: 0.0.40
codegen_flags: <defaults>
</compile_context>

<pallas_src>
import functools

import jax
import jax.numpy as jnp
from jax.experimental import pallas as pl
from jax.experimental.pallas import tpu as pltpu

_LANE = 128
_SUBLANE = 8


def _round_up(x, m):
    return ((x + m - 1) // m) * m


def _pad_to(x, shape):
    return jnp.pad(x, [(0, s - d) for d, s in zip(x.shape, shape)])


def _epilogue_dtype():
    """bf16 VPU epilogues on v6e/v7x; f32 on v5e and older (no bf16 VPU path)."""
    try:
        kind = jax.devices()[0].device_kind.lower()
    except Exception:
        return jnp.float32
    return jnp.bfloat16 if ("v6" in kind or "v7" in kind) else jnp.float32


# -----------------------------------------------------------------------------
# Kernel: one batch tile (TB rows / TB*N color rows) per grid step; weights are
# resident (single-buffered) in VMEM.  All matmuls are bf16 x bf16 -> f32 MXU.
# -----------------------------------------------------------------------------
def _visual_analyzer_kernel(
    dims,                                # static: (VF_pad, P_pad, H_pad, N, epi_dtype)
    colors_ref, typo_ref, layout_ref,
    # color encoder:      3 -> 64 -> 128 -> palette           (layer 1 on the VPU)
    cw1, cb1, cw2, cb2, cw3, cb3,
    # typography encoder: T -> 256 -> 512 -> hidden//2
    tw1, tb1, tw2, tb2, tw3, tb3,
    # layout encoder:     L -> 256 -> 512 -> hidden//2
    lw1, lb1, lw2, lb2, lw3, lb3,
    # visual fusion, split by input section: palette | typo | layout
    fwc, fwt, fwl, fb,
    out_ref,
):
    vf_w, p_w, h_w, n_colors, epi = dims
    bf16 = jnp.bfloat16
    f32 = jnp.float32

    def dense(x, w_ref, b_ref, act=False):
        # bf16 operands -> single-pass MXU, f32 accumulation; epilogue in epi dtype.
        y = jnp.dot(x.astype(bf16), w_ref[...], preferred_element_type=f32)
        y = y.astype(epi) + b_ref[...]
        return jnp.maximum(y, 0.0) if act else y

    # ---- color path -------------------------------------------------------
    # Layer 1 has K=3: three broadcast FMAs on the (otherwise idle) VPU instead
    # of a 3-lane-wide MXU matmul.
    c = colors_ref[...].astype(epi)              # (TM, 3)
    w1 = cw1[...]                                # (3, C1)  epi
    h = (c[:, 0:1] * w1[0:1, :]
         + c[:, 1:2] * w1[1:2, :]
         + c[:, 2:3] * w1[2:3, :]
         + cb1[...])
    h = jnp.maximum(h, 0.0)
    h = dense(h, cw2, cb2, act=True)
    ce = dense(h, cw3, cb3)                      # (TM, P_pad) epi
    # mean over the N colors of each batch row: (TB, N, P_pad) sublane reduce on the
    # XLU with f32 accumulation (replaces the old averaging-matrix matmul).
    cs = jnp.sum(ce.reshape(-1, n_colors, ce.shape[-1]), axis=1,
                 dtype=f32) * (1.0 / n_colors)   # (TB, P_pad) f32

    # ---- typography path (Dropout == identity at inference) ---------------
    h = dense(typo_ref[...], tw1, tb1, act=True)
    h = dense(h, tw2, tb2, act=True)
    te = dense(h, tw3, tb3)                      # (TB, H_pad) epi

    # ---- layout path -------------------------------------------------------
    h = dense(layout_ref[...], lw1, lb1, act=True)
    h = dense(h, lw2, lb2, act=True)
    le = dense(h, lw3, lb3)                      # (TB, H_pad) epi

    # ---- fusion: split-weight accumulation instead of jnp.concatenate ------
    vf = (jnp.dot(cs.astype(bf16), fwc[...], preferred_element_type=f32)
          + jnp.dot(te.astype(bf16), fwt[...], preferred_element_type=f32)
          + jnp.dot(le.astype(bf16), fwl[...], preferred_element_type=f32)
          + fb[...])                             # (TB, VF_pad) f32

    # ---- lane-dense slab stores (all offsets/widths are multiples of 128) --
    out_ref[:, 0:vf_w] = vf
    out_ref[:, vf_w:vf_w + p_w] = cs
    out_ref[:, vf_w + p_w:vf_w + p_w + h_w] = te.astype(f32)
    out_ref[:, vf_w + p_w + h_w:vf_w + p_w + 2 * h_w] = le.astype(f32)


# -----------------------------------------------------------------------------
# Parameter init (deterministic, PyTorch-Linear-style uniform(-1/sqrt(fan_in)))
# -----------------------------------------------------------------------------
def _linear_params(key, fan_in, fan_out):
    kw, kb = jax.random.split(key)
    bound = 1.0 / (fan_in ** 0.5)
    w = jax.random.uniform(kw, (fan_in, fan_out), jnp.float32, -bound, bound)
    b = jax.random.uniform(kb, (fan_out,), jnp.float32, -bound, bound)
    return w, b


def init_visual_analyzer_params(key, *, hidden_size, color_palette_size,
                                typography_features, layout_features,
                                visual_feature_dim):
    keys = jax.random.split(key, 10)
    half = hidden_size // 2
    params = []
    params += _linear_params(keys[0], 3, 64)
    params += _linear_params(keys[1], 64, 128)
    params += _linear_params(keys[2], 128, color_palette_size)
    params += _linear_params(keys[3], typography_features, 256)
    params += _linear_params(keys[4], 256, 512)
    params += _linear_params(keys[5], 512, half)
    params += _linear_params(keys[6], layout_features, 256)
    params += _linear_params(keys[7], 256, 512)
    params += _linear_params(keys[8], 512, half)
    params += _linear_params(keys[9], color_palette_size + hidden_size,
                             visual_feature_dim)
    return tuple(params)


# -----------------------------------------------------------------------------
# Wrapper: pads to TPU-friendly shapes, splits the fusion weight, and slices /
# unpads the lane-dense output slab.
# -----------------------------------------------------------------------------
def visual_analyzer_forward(colors, typography_features, layout_features, params,
                            *, hidden_size, color_palette_size, visual_feature_dim,
                            epilogue_dtype=None):
    (cw1, cb1, cw2, cb2, cw3, cb3,
     tw1, tb1, tw2, tb2, tw3, tb3,
     lw1, lb1, lw2, lb2, lw3, lb3,
     fw, fb) = params

    B, N, _ = colors.shape
    half = hidden_size // 2
    T = typography_features.shape[-1]
    L = layout_features.shape[-1]
    P = color_palette_size
    f32, bf16 = jnp.float32, jnp.bfloat16
    epi = _epilogue_dtype() if epilogue_dtype is None else epilogue_dtype

    # padded (lane-aligned) feature dims
    C1 = _round_up(cw1.shape[1], _LANE)          # 64  -> 128
    C2 = _round_up(cw2.shape[1], _LANE)          # 128
    P_pad = _round_up(P, _LANE)
    T_pad = _round_up(T, _LANE)
    L_pad = _round_up(L, _LANE)
    E1 = _round_up(tw1.shape[1], _LANE)          # 256
    E2 = _round_up(tw2.shape[1], _LANE)          # 512
    H_pad = _round_up(half, _LANE)
    VF_pad = _round_up(visual_feature_dim, _LANE)
    TOT = VF_pad + P_pad + 2 * H_pad

    # batch padding / tiling: pad B to >=8 (sublane).  Pick TB so the "parallel"
    # grid has >=2 steps whenever the batch allows it (keeps both v7x TCs busy).
    B_pad = _round_up(B, _SUBLANE)
    if B_pad >= 2 * _SUBLANE:
        TB = min(256, _round_up((B_pad + 1) // 2, _SUBLANE))
    else:
        TB = B_pad
    B_pad = _round_up(B_pad, TB)
    TM = TB * N
    M = B_pad * N

    # ---- pad & cast parameters (bf16 matmul weights, epilogue-dtype biases) -
    def w_pad(w, r, c, dt=bf16):
        return _pad_to(w.astype(dt), (r, c))

    def b_pad(b, c, dt):
        return _pad_to(b.reshape(1, -1).astype(dt), (1, c))

    padded_params = [
        w_pad(cw1, 3, C1, epi), b_pad(cb1, C1, epi),     # layer 1 runs on the VPU
        w_pad(cw2, C1, C2), b_pad(cb2, C2, epi),
        w_pad(cw3, C2, P_pad), b_pad(cb3, P_pad, epi),
        w_pad(tw1, T_pad, E1), b_pad(tb1, E1, epi),
        w_pad(tw2, E1, E2), b_pad(tb2, E2, epi),
        w_pad(tw3, E2, H_pad), b_pad(tb3, H_pad, epi),
        w_pad(lw1, L_pad, E1), b_pad(lb1, E1, epi),
        w_pad(lw2, E1, E2), b_pad(lb2, E2, epi),
        w_pad(lw3, E2, H_pad), b_pad(lb3, H_pad, epi),
        # fusion weight split by input section.  PyTorch concat order is
        # cat([color_summary, cat([typo_emb, layout_emb])]) -> [color | typo | layout].
        w_pad(fw[:P], P_pad, VF_pad),
        w_pad(fw[P:P + half], H_pad, VF_pad),
        w_pad(fw[P + half:], H_pad, VF_pad),
        b_pad(fb, VF_pad, f32),
    ]

    # ---- pad inputs (colors in bf16: halves the lane-padded (TM,3) VMEM/DMA) -
    colors_flat = _pad_to(colors.reshape(B * N, 3).astype(bf16), (M, 3))
    typo_p = _pad_to(typography_features.astype(bf16), (B_pad, T_pad))
    layout_p = _pad_to(layout_features.astype(bf16), (B_pad, L_pad))

    # ---- grid / specs -------------------------------------------------------
    tile_map = lambda i: (i, 0)
    res_map = lambda i: (0, 0)

    def resident_spec(shape):
        # Constant index_map -> block never re-fetched; single-buffer to halve
        # resident VMEM.  Fall back gracefully if pipeline_mode is unavailable.
        try:
            return pl.BlockSpec(shape, res_map, pipeline_mode=pl.Buffered(1))
        except TypeError:
            return pl.BlockSpec(shape, res_map)

    in_specs = [
        pl.BlockSpec((TM, 3), tile_map),
        pl.BlockSpec((TB, T_pad), tile_map),
        pl.BlockSpec((TB, L_pad), tile_map),
    ] + [resident_spec(p.shape) for p in padded_params]
    out_specs = pl.BlockSpec((TB, TOT), tile_map)

    # advisory cost estimate (helps XLA schedule the custom call)
    mm = [
        (M, C1, C2), (M, C2, P_pad),
        (B_pad, T_pad, E1), (B_pad, E1, E2), (B_pad, E2, H_pad),
        (B_pad, L_pad, E1), (B_pad, E1, E2), (B_pad, E2, H_pad),
        (B_pad, P_pad, VF_pad), (B_pad, H_pad, VF_pad), (B_pad, H_pad, VF_pad),
    ]
    flops = int(sum(2 * m * k * n for m, k, n in mm)) + int(2 * M * 3 * C1)
    in_bytes = int(sum(a.size * a.dtype.itemsize
                       for a in [colors_flat, typo_p, layout_p] + padded_params))
    cost = pl.CostEstimate(flops=flops, transcendentals=0,
                           bytes_accessed=in_bytes + int(B_pad * TOT * 4))

    kernel = functools.partial(_visual_analyzer_kernel,
                               (VF_pad, P_pad, H_pad, N, epi))
    slab = pl.pallas_call(
        kernel,
        out_shape=jax.ShapeDtypeStruct((B_pad, TOT), f32),
        grid=(B_pad // TB,),
        in_specs=in_specs,
        out_specs=out_specs,
        compiler_params=pltpu.CompilerParams(
            dimension_semantics=("parallel",),
            vmem_limit_bytes=32 * 1024 * 1024,
        ),
        cost_estimate=cost,
    )(colors_flat, typo_p, layout_p, *padded_params)

    # slice the lane-dense slab back into the four (unpadded) outputs
    vf = slab[:B, :visual_feature_dim]
    cp = slab[:B, VF_pad:VF_pad + P]
    te = slab[:B, VF_pad + P_pad:VF_pad + P_pad + half]
    le = slab[:B, VF_pad + P_pad + H_pad:VF_pad + P_pad + H_pad + half]
    return {
        "visual_features": vf,
        "color_palette": cp,
        "typography_embedding": te,
        "layout_embedding": le,
    }


# -----------------------------------------------------------------------------
# Pure-JAX reference mirroring the kernel's dtype choices (bf16 matmuls with f32
# accumulation, epilogue dtype `epi`, f32 color mean / fusion output).
# -----------------------------------------------------------------------------
def _reference_forward(colors, typo, layout, params, epi):
    (cw1, cb1, cw2, cb2, cw3, cb3,
     tw1, tb1, tw2, tb2, tw3, tb3,
     lw1, lb1, lw2, lb2, lw3, lb3,
     fw, fb) = params
    bf16, f32 = jnp.bfloat16, jnp.float32

    def dense(x, w, b, act=False):
        y = jnp.dot(x.astype(bf16), w.astype(bf16), preferred_element_type=f32)
        y = y.astype(epi) + b.astype(epi)
        return jnp.maximum(y, 0.0) if act else y

    B, N, _ = colors.shape
    P = cw3.shape[1]
    half = tw3.shape[1]

    c = colors.reshape(B * N, 3).astype(bf16).astype(epi)
    w1 = cw1.astype(epi)
    h = (c[:, 0:1] * w1[0:1, :]
         + c[:, 1:2] * w1[1:2, :]
         + c[:, 2:3] * w1[2:3, :]
         + cb1.astype(epi))
    h = jnp.maximum(h, 0.0)
    h = dense(h, cw2, cb2, act=True)
    ce = dense(h, cw3, cb3)
    cs = jnp.sum(ce.reshape(B, N, P), axis=1, dtype=f32) * (1.0 / N)

    h = dense(typo, tw1, tb1, act=True)
    h = dense(h, tw2, tb2, act=True)
    te = dense(h, tw3, tb3)

    h = dense(layout, lw1, lb1, act=True)
    h = dense(h, lw2, lb2, act=True)
    le = dense(h, lw3, lb3)

    vf = (jnp.dot(cs.astype(bf16), fw[:P].astype(bf16), preferred_element_type=f32)
          + jnp.dot(te.astype(bf16), fw[P:P + half].astype(bf16), preferred_element_type=f32)
          + jnp.dot(le.astype(bf16), fw[P + half:].astype(bf16), preferred_element_type=f32)
          + fb)
    return vf, cs, te.astype(f32), le.astype(f32)


if __name__ == "__main__":
    # Small config consistent with BrandAnalyzerArgs (scaled down).
    hidden_size = 64          # -> encoder outputs hidden_size // 2 = 32
    color_palette_size = 16
    typography_feat_dim = 32
    layout_feat_dim = 32
    visual_feature_dim = 128

    B, N_COLORS = 2, 8

    key = jax.random.PRNGKey(0)
    k_c, k_t, k_l, k_p = jax.random.split(key, 4)
    colors = jax.random.uniform(k_c, (B, N_COLORS, 3), jnp.float32)
    typo = jax.random.normal(k_t, (B, typography_feat_dim), jnp.float32)
    layout = jax.random.normal(k_l, (B, layout_feat_dim), jnp.float32)

    params = init_visual_analyzer_params(
        k_p,
        hidden_size=hidden_size,
        color_palette_size=color_palette_size,
        typography_features=typography_feat_dim,
        layout_features=layout_feat_dim,
        visual_feature_dim=visual_feature_dim,
    )

    epi = _epilogue_dtype()
    out = visual_analyzer_forward(
        colors, typo, layout, params,
        hidden_size=hidden_size,
        color_palette_size=color_palette_size,
        visual_feature_dim=visual_feature_dim,
        epilogue_dtype=epi,
    )
    jax.block_until_ready(out)

    # sanity check vs pure-JAX reference (same bf16/f32/epilogue mix as the kernel)
    ref_vf, ref_cp, ref_te, ref_le = _reference_forward(colors, typo, layout, params, epi)
    assert jnp.allclose(out["visual_features"], ref_vf, atol=2e-2, rtol=2e-2)
    assert jnp.allclose(out["color_palette"], ref_cp, atol=2e-2, rtol=2e-2)
    assert jnp.allclose(out["typography_embedding"], ref_te, atol=2e-2, rtol=2e-2)
    assert jnp.allclose(out["layout_embedding"], ref_le, atol=2e-2, rtol=2e-2)

    print("KERNEL_OK")
</pallas_src>

<mosaic_0001>
module attributes {stable_mosaic.version = 11 : i64} {
  func.func @_visual_analyzer_kernel(%arg0: i32, %arg1: memref<64x3xbf16, #tpu.memory_space<vmem>>, %arg2: memref<8x128xbf16, #tpu.memory_space<vmem>>, %arg3: memref<8x128xbf16, #tpu.memory_space<vmem>>, %arg4: memref<3x128xf32, #tpu.memory_space<vmem>>, %arg5: memref<1x128xf32, #tpu.memory_space<vmem>>, %arg6: memref<128x128xbf16, #tpu.memory_space<vmem>>, %arg7: memref<1x128xf32, #tpu.memory_space<vmem>>, %arg8: memref<128x128xbf16, #tpu.memory_space<vmem>>, %arg9: memref<1x128xf32, #tpu.memory_space<vmem>>, %arg10: memref<128x256xbf16, #tpu.memory_space<vmem>>, %arg11: memref<1x256xf32, #tpu.memory_space<vmem>>, %arg12: memref<256x512xbf16, #tpu.memory_space<vmem>>, %arg13: memref<1x512xf32, #tpu.memory_space<vmem>>, %arg14: memref<512x128xbf16, #tpu.memory_space<vmem>>, %arg15: memref<1x128xf32, #tpu.memory_space<vmem>>, %arg16: memref<128x256xbf16, #tpu.memory_space<vmem>>, %arg17: memref<1x256xf32, #tpu.memory_space<vmem>>, %arg18: memref<256x512xbf16, #tpu.memory_space<vmem>>, %arg19: memref<1x512xf32, #tpu.memory_space<vmem>>, %arg20: memref<512x128xbf16, #tpu.memory_space<vmem>>, %arg21: memref<1x128xf32, #tpu.memory_space<vmem>>, %arg22: memref<128x128xbf16, #tpu.memory_space<vmem>>, %arg23: memref<128x128xbf16, #tpu.memory_space<vmem>>, %arg24: memref<128x128xbf16, #tpu.memory_space<vmem>>, %arg25: memref<1x128xf32, #tpu.memory_space<vmem>>, %arg26: memref<8x512xf32, #tpu.memory_space<vmem>>) attributes {dimension_semantics = [#tpu.dimension_semantics<parallel>], iteration_bounds = array<i64: 1>, scalar_prefetch = 0 : i64, scratch_operands = 0 : i64, tpu.core_type = #tpu.core_type<tc>, window_params = [{transform_indices = @transform_0, window_bounds = array<i64: 64, 3>}, {transform_indices = @transform_1, window_bounds = array<i64: 8, 128>}, {transform_indices = @transform_2, window_bounds = array<i64: 8, 128>}, {pipeline_mode = #tpu.pipeline_mode<synchronous>, transform_indices = @transform_3, window_bounds = array<i64: 3, 128>}, {pipeline_mode = #tpu.pipeline_mode<synchronous>, transform_indices = @transform_4, window_bounds = array<i64: 1, 128>}, {pipeline_mode = #tpu.pipeline_mode<synchronous>, transform_indices = @transform_5, window_bounds = array<i64: 128, 128>}, {pipeline_mode = #tpu.pipeline_mode<synchronous>, transform_indices = @transform_6, window_bounds = array<i64: 1, 128>}, {pipeline_mode = #tpu.pipeline_mode<synchronous>, transform_indices = @transform_7, window_bounds = array<i64: 128, 128>}, {pipeline_mode = #tpu.pipeline_mode<synchronous>, transform_indices = @transform_8, window_bounds = array<i64: 1, 128>}, {pipeline_mode = #tpu.pipeline_mode<synchronous>, transform_indices = @transform_9, window_bounds = array<i64: 128, 256>}, {pipeline_mode = #tpu.pipeline_mode<synchronous>, transform_indices = @transform_10, window_bounds = array<i64: 1, 256>}, {pipeline_mode = #tpu.pipeline_mode<synchronous>, transform_indices = @transform_11, window_bounds = array<i64: 256, 512>}, {pipeline_mode = #tpu.pipeline_mode<synchronous>, transform_indices = @transform_12, window_bounds = array<i64: 1, 512>}, {pipeline_mode = #tpu.pipeline_mode<synchronous>, transform_indices = @transform_13, window_bounds = array<i64: 512, 128>}, {pipeline_mode = #tpu.pipeline_mode<synchronous>, transform_indices = @transform_14, window_bounds = array<i64: 1, 128>}, {pipeline_mode = #tpu.pipeline_mode<synchronous>, transform_indices = @transform_15, window_bounds = array<i64: 128, 256>}, {pipeline_mode = #tpu.pipeline_mode<synchronous>, transform_indices = @transform_16, window_bounds = array<i64: 1, 256>}, {pipeline_mode = #tpu.pipeline_mode<synchronous>, transform_indices = @transform_17, window_bounds = array<i64: 256, 512>}, {pipeline_mode = #tpu.pipeline_mode<synchronous>, transform_indices = @transform_18, window_bounds = array<i64: 1, 512>}, {pipeline_mode = #tpu.pipeline_mode<synchronous>, transform_indices = @transform_19, window_bounds = array<i64: 512, 128>}, {pipeline_mode = #tpu.pipeline_mode<synchronous>, transform_indices = @transform_20, window_bounds = array<i64: 1, 128>}, {pipeline_mode = #tpu.pipeline_mode<synchronous>, transform_indices = @transform_21, window_bounds = array<i64: 128, 128>}, {pipeline_mode = #tpu.pipeline_mode<synchronous>, transform_indices = @transform_22, window_bounds = array<i64: 128, 128>}, {pipeline_mode = #tpu.pipeline_mode<synchronous>, transform_indices = @transform_23, window_bounds = array<i64: 128, 128>}, {pipeline_mode = #tpu.pipeline_mode<synchronous>, transform_indices = @transform_24, window_bounds = array<i64: 1, 128>}, {transform_indices = @transform_25, window_bounds = array<i64: 8, 512>}]} {
    %c0 = arith.constant 0 : index
    %c0_0 = arith.constant 0 : index
    %0 = vector.load %arg1[%c0, %c0_0] : memref<64x3xbf16, #tpu.memory_space<vmem>>, vector<64x3xbf16>
    %1 = arith.extf %0 : vector<64x3xbf16> to vector<64x3xf32>
    %c0_1 = arith.constant 0 : index
    %c0_2 = arith.constant 0 : index
    %2 = vector.load %arg4[%c0_1, %c0_2] : memref<3x128xf32, #tpu.memory_space<vmem>>, vector<3x128xf32>
    %3 = vector.extract_strided_slice %1 {offsets = [0, 0], sizes = [64, 1], strides = [1, 1]} : vector<64x3xf32> to vector<64x1xf32>
    %4 = vector.extract_strided_slice %2 {offsets = [0, 0], sizes = [1, 128], strides = [1, 1]} : vector<3x128xf32> to vector<1x128xf32>
    %5 = vector.broadcast %3 : vector<64x1xf32> to vector<64x128xf32>
    %6 = vector.broadcast %4 : vector<1x128xf32> to vector<64x128xf32>
    %7 = arith.mulf %5, %6 : vector<64x128xf32>
    %8 = vector.extract_strided_slice %1 {offsets = [0, 1], sizes = [64, 1], strides = [1, 1]} : vector<64x3xf32> to vector<64x1xf32>
    %9 = vector.extract_strided_slice %2 {offsets = [1, 0], sizes = [1, 128], strides = [1, 1]} : vector<3x128xf32> to vector<1x128xf32>
    %10 = vector.broadcast %8 : vector<64x1xf32> to vector<64x128xf32>
    %11 = vector.broadcast %9 : vector<1x128xf32> to vector<64x128xf32>
    %12 = arith.mulf %10, %11 : vector<64x128xf32>
    %13 = arith.addf %7, %12 : vector<64x128xf32>
    %14 = vector.extract_strided_slice %1 {offsets = [0, 2], sizes = [64, 1], strides = [1, 1]} : vector<64x3xf32> to vector<64x1xf32>
    %15 = vector.extract_strided_slice %2 {offsets = [2, 0], sizes = [1, 128], strides = [1, 1]} : vector<3x128xf32> to vector<1x128xf32>
    %16 = vector.broadcast %14 : vector<64x1xf32> to vector<64x128xf32>
    %17 = vector.broadcast %15 : vector<1x128xf32> to vector<64x128xf32>
    %18 = arith.mulf %16, %17 : vector<64x128xf32>
    %19 = arith.addf %13, %18 : vector<64x128xf32>
    %c0_3 = arith.constant 0 : index
    %c0_4 = arith.constant 0 : index
    %20 = vector.load %arg5[%c0_3, %c0_4] : memref<1x128xf32, #tpu.memory_space<vmem>>, vector<1x128xf32>
    %21 = vector.broadcast %20 : vector<1x128xf32> to vector<64x128xf32>
    %22 = arith.addf %19, %21 : vector<64x128xf32>
    %cst = arith.constant 0.000000e+00 : f32
    %23 = vector.broadcast %cst : f32 to vector<64x128xf32>
    %24 = arith.maximumf %22, %23 : vector<64x128xf32>
    %25 = arith.truncf %24 : vector<64x128xf32> to vector<64x128xbf16>
    %c0_5 = arith.constant 0 : index
    %c0_6 = arith.constant 0 : index
    %26 = vector.load %arg6[%c0_5, %c0_6] : memref<128x128xbf16, #tpu.memory_space<vmem>>, vector<128x128xbf16>
    %cst_7 = arith.constant dense<0.000000e+00> : vector<64x128xf32>
    %27 = tpu.matmul %25, %26, %cst_7 {dimension_numbers = #tpu.dot_dimension_numbers<[1], [0], [0], [1], [0, 0, 1, 1], [], []>} : vector<64x128xbf16>, vector<128x128xbf16>, vector<64x128xf32> -> vector<64x128xf32>
    %c0_8 = arith.constant 0 : index
    %c0_9 = arith.constant 0 : index
    %28 = vector.load %arg7[%c0_8, %c0_9] : memref<1x128xf32, #tpu.memory_space<vmem>>, vector<1x128xf32>
    %29 = vector.broadcast %28 : vector<1x128xf32> to vector<64x128xf32>
    %30 = arith.addf %27, %29 : vector<64x128xf32>
    %cst_10 = arith.constant 0.000000e+00 : f32
    %31 = vector.broadcast %cst_10 : f32 to vector<64x128xf32>
    %32 = arith.maximumf %30, %31 : vector<64x128xf32>
    %33 = arith.truncf %32 : vector<64x128xf32> to vector<64x128xbf16>
    %c0_11 = arith.constant 0 : index
    %c0_12 = arith.constant 0 : index
    %34 = vector.load %arg8[%c0_11, %c0_12] : memref<128x128xbf16, #tpu.memory_space<vmem>>, vector<128x128xbf16>
    %cst_13 = arith.constant dense<0.000000e+00> : vector<64x128xf32>
    %35 = tpu.matmul %33, %34, %cst_13 {dimension_numbers = #tpu.dot_dimension_numbers<[1], [0], [0], [1], [0, 0, 1, 1], [], []>} : vector<64x128xbf16>, vector<128x128xbf16>, vector<64x128xf32> -> vector<64x128xf32>
    %c0_14 = arith.constant 0 : index
    %c0_15 = arith.constant 0 : index
    %36 = vector.load %arg9[%c0_14, %c0_15] : memref<1x128xf32, #tpu.memory_space<vmem>>, vector<1x128xf32>
    %37 = vector.broadcast %36 : vector<1x128xf32> to vector<64x128xf32>
    %38 = arith.addf %35, %37 : vector<64x128xf32>
    %39 = vector.shape_cast %38 : vector<64x128xf32> to vector<8x8x128xf32>
    %cst_16 = arith.constant dense<0.000000e+00> : vector<8x128xf32>
    %40 = vector.multi_reduction <add>, %39, %cst_16 [1] : vector<8x8x128xf32> to vector<8x128xf32>
    %cst_17 = arith.constant 1.250000e-01 : f32
    %41 = vector.broadcast %cst_17 : f32 to vector<8x128xf32>
    %42 = arith.mulf %40, %41 : vector<8x128xf32>
    %c0_18 = arith.constant 0 : index
    %c0_19 = arith.constant 0 : index
    %43 = vector.load %arg2[%c0_18, %c0_19] : memref<8x128xbf16, #tpu.memory_space<vmem>>, vector<8x128xbf16>
    %c0_20 = arith.constant 0 : index
    %c0_21 = arith.constant 0 : index
    %44 = vector.load %arg10[%c0_20, %c0_21] : memref<128x256xbf16, #tpu.memory_space<vmem>>, vector<128x256xbf16>
    %cst_22 = arith.constant dense<0.000000e+00> : vector<8x256xf32>
    %45 = tpu.matmul %43, %44, %cst_22 {dimension_numbers = #tpu.dot_dimension_numbers<[1], [0], [0], [1], [0, 0, 1, 1], [], []>} : vector<8x128xbf16>, vector<128x256xbf16>, vector<8x256xf32> -> vector<8x256xf32>
    %c0_23 = arith.constant 0 : index
    %c0_24 = arith.constant 0 : index
    %46 = vector.load %arg11[%c0_23, %c0_24] : memref<1x256xf32, #tpu.memory_space<vmem>>, vector<1x256xf32>
    %47 = vector.broadcast %46 : vector<1x256xf32> to vector<8x256xf32>
    %48 = arith.addf %45, %47 : vector<8x256xf32>
    %cst_25 = arith.constant 0.000000e+00 : f32
    %49 = vector.broadcast %cst_25 : f32 to vector<8x256xf32>
    %50 = arith.maximumf %48, %49 : vector<8x256xf32>
    %51 = arith.truncf %50 : vector<8x256xf32> to vector<8x256xbf16>
    %c0_26 = arith.constant 0 : index
    %c0_27 = arith.constant 0 : index
    %52 = vector.load %arg12[%c0_26, %c0_27] : memref<256x512xbf16, #tpu.memory_space<vmem>>, vector<256x512xbf16>
    %cst_28 = arith.constant dense<0.000000e+00> : vector<8x512xf32>
    %53 = tpu.matmul %51, %52, %cst_28 {dimension_numbers = #tpu.dot_dimension_numbers<[1], [0], [0], [1], [0, 0, 1, 1], [], []>} : vector<8x256xbf16>, vector<256x512xbf16>, vector<8x512xf32> -> vector<8x512xf32>
    %c0_29 = arith.constant 0 : index
    %c0_30 = arith.constant 0 : index
    %54 = vector.load %arg13[%c0_29, %c0_30] : memref<1x512xf32, #tpu.memory_space<vmem>>, vector<1x512xf32>
    %55 = vector.broadcast %54 : vector<1x512xf32> to vector<8x512xf32>
    %56 = arith.addf %53, %55 : vector<8x512xf32>
    %cst_31 = arith.constant 0.000000e+00 : f32
    %57 = vector.broadcast %cst_31 : f32 to vector<8x512xf32>
    %58 = arith.maximumf %56, %57 : vector<8x512xf32>
    %59 = arith.truncf %58 : vector<8x512xf32> to vector<8x512xbf16>
    %c0_32 = arith.constant 0 : index
    %c0_33 = arith.constant 0 : index
    %60 = vector.load %arg14[%c0_32, %c0_33] : memref<512x128xbf16, #tpu.memory_space<vmem>>, vector<512x128xbf16>
    %cst_34 = arith.constant dense<0.000000e+00> : vector<8x128xf32>
    %61 = tpu.matmul %59, %60, %cst_34 {dimension_numbers = #tpu.dot_dimension_numbers<[1], [0], [0], [1], [0, 0, 1, 1], [], []>} : vector<8x512xbf16>, vector<512x128xbf16>, vector<8x128xf32> -> vector<8x128xf32>
    %c0_35 = arith.constant 0 : index
    %c0_36 = arith.constant 0 : index
    %62 = vector.load %arg15[%c0_35, %c0_36] : memref<1x128xf32, #tpu.memory_space<vmem>>, vector<1x128xf32>
    %63 = vector.broadcast %62 : vector<1x128xf32> to vector<8x128xf32>
    %64 = arith.addf %61, %63 : vector<8x128xf32>
    %c0_37 = arith.constant 0 : index
    %c0_38 = arith.constant 0 : index
    %65 = vector.load %arg3[%c0_37, %c0_38] : memref<8x128xbf16, #tpu.memory_space<vmem>>, vector<8x128xbf16>
    %c0_39 = arith.constant 0 : index
    %c0_40 = arith.constant 0 : index
    %66 = vector.load %arg16[%c0_39, %c0_40] : memref<128x256xbf16, #tpu.memory_space<vmem>>, vector<128x256xbf16>
    %cst_41 = arith.constant dense<0.000000e+00> : vector<8x256xf32>
    %67 = tpu.matmul %65, %66, %cst_41 {dimension_numbers = #tpu.dot_dimension_numbers<[1], [0], [0], [1], [0, 0, 1, 1], [], []>} : vector<8x128xbf16>, vector<128x256xbf16>, vector<8x256xf32> -> vector<8x256xf32>
    %c0_42 = arith.constant 0 : index
    %c0_43 = arith.constant 0 : index
    %68 = vector.load %arg17[%c0_42, %c0_43] : memref<1x256xf32, #tpu.memory_space<vmem>>, vector<1x256xf32>
    %69 = vector.broadcast %68 : vector<1x256xf32> to vector<8x256xf32>
    %70 = arith.addf %67, %69 : vector<8x256xf32>
    %cst_44 = arith.constant 0.000000e+00 : f32
    %71 = vector.broadcast %cst_44 : f32 to vector<8x256xf32>
    %72 = arith.maximumf %70, %71 : vector<8x256xf32>
    %73 = arith.truncf %72 : vector<8x256xf32> to vector<8x256xbf16>
    %c0_45 = arith.constant 0 : index
    %c0_46 = arith.constant 0 : index
    %74 = vector.load %arg18[%c0_45, %c0_46] : memref<256x512xbf16, #tpu.memory_space<vmem>>, vector<256x512xbf16>
    %cst_47 = arith.constant dense<0.000000e+00> : vector<8x512xf32>
    %75 = tpu.matmul %73, %74, %cst_47 {dimension_numbers = #tpu.dot_dimension_numbers<[1], [0], [0], [1], [0, 0, 1, 1], [], []>} : vector<8x256xbf16>, vector<256x512xbf16>, vector<8x512xf32> -> vector<8x512xf32>
    %c0_48 = arith.constant 0 : index
    %c0_49 = arith.constant 0 : index
    %76 = vector.load %arg19[%c0_48, %c0_49] : memref<1x512xf32, #tpu.memory_space<vmem>>, vector<1x512xf32>
    %77 = vector.broadcast %76 : vector<1x512xf32> to vector<8x512xf32>
    %78 = arith.addf %75, %77 : vector<8x512xf32>
    %cst_50 = arith.constant 0.000000e+00 : f32
    %79 = vector.broadcast %cst_50 : f32 to vector<8x512xf32>
    %80 = arith.maximumf %78, %79 : vector<8x512xf32>
    %81 = arith.truncf %80 : vector<8x512xf32> to vector<8x512xbf16>
    %c0_51 = arith.constant 0 : index
    %c0_52 = arith.constant 0 : index
    %82 = vector.load %arg20[%c0_51, %c0_52] : memref<512x128xbf16, #tpu.memory_space<vmem>>, vector<512x128xbf16>
    %cst_53 = arith.constant dense<0.000000e+00> : vector<8x128xf32>
    %83 = tpu.matmul %81, %82, %cst_53 {dimension_numbers = #tpu.dot_dimension_numbers<[1], [0], [0], [1], [0, 0, 1, 1], [], []>} : vector<8x512xbf16>, vector<512x128xbf16>, vector<8x128xf32> -> vector<8x128xf32>
    %c0_54 = arith.constant 0 : index
    %c0_55 = arith.constant 0 : index
    %84 = vector.load %arg21[%c0_54, %c0_55] : memref<1x128xf32, #tpu.memory_space<vmem>>, vector<1x128xf32>
    %85 = vector.broadcast %84 : vector<1x128xf32> to vector<8x128xf32>
    %86 = arith.addf %83, %85 : vector<8x128xf32>
    %87 = arith.truncf %42 : vector<8x128xf32> to vector<8x128xbf16>
    %c0_56 = arith.constant 0 : index
    %c0_57 = arith.constant 0 : index
    %88 = vector.load %arg22[%c0_56, %c0_57] : memref<128x128xbf16, #tpu.memory_space<vmem>>, vector<128x128xbf16>
    %cst_58 = arith.constant dense<0.000000e+00> : vector<8x128xf32>
    %89 = tpu.matmul %87, %88, %cst_58 {dimension_numbers = #tpu.dot_dimension_numbers<[1], [0], [0], [1], [0, 0, 1, 1], [], []>} : vector<8x128xbf16>, vector<128x128xbf16>, vector<8x128xf32> -> vector<8x128xf32>
    %90 = arith.truncf %64 : vector<8x128xf32> to vector<8x128xbf16>
    %c0_59 = arith.constant 0 : index
    %c0_60 = arith.constant 0 : index
    %91 = vector.load %arg23[%c0_59, %c0_60] : memref<128x128xbf16, #tpu.memory_space<vmem>>, vector<128x128xbf16>
    %cst_61 = arith.constant dense<0.000000e+00> : vector<8x128xf32>
    %92 = tpu.matmul %90, %91, %cst_61 {dimension_numbers = #tpu.dot_dimension_numbers<[1], [0], [0], [1], [0, 0, 1, 1], [], []>} : vector<8x128xbf16>, vector<128x128xbf16>, vector<8x128xf32> -> vector<8x128xf32>
    %93 = arith.addf %89, %92 : vector<8x128xf32>
    %94 = arith.truncf %86 : vector<8x128xf32> to vector<8x128xbf16>
    %c0_62 = arith.constant 0 : index
    %c0_63 = arith.constant 0 : index
    %95 = vector.load %arg24[%c0_62, %c0_63] : memref<128x128xbf16, #tpu.memory_space<vmem>>, vector<128x128xbf16>
    %cst_64 = arith.constant dense<0.000000e+00> : vector<8x128xf32>
    %96 = tpu.matmul %94, %95, %cst_64 {dimension_numbers = #tpu.dot_dimension_numbers<[1], [0], [0], [1], [0, 0, 1, 1], [], []>} : vector<8x128xbf16>, vector<128x128xbf16>, vector<8x128xf32> -> vector<8x128xf32>
    %97 = arith.addf %93, %96 : vector<8x128xf32>
    %c0_65 = arith.constant 0 : index
    %c0_66 = arith.constant 0 : index
    %98 = vector.load %arg25[%c0_65, %c0_66] : memref<1x128xf32, #tpu.memory_space<vmem>>, vector<1x128xf32>
    %99 = vector.broadcast %98 : vector<1x128xf32> to vector<8x128xf32>
    %100 = arith.addf %97, %99 : vector<8x128xf32>
    %c0_67 = arith.constant 0 : index
    %c0_68 = arith.constant 0 : index
    %101 = vector.load %arg26[%c0_67, %c0_68] : memref<8x512xf32, #tpu.memory_space<vmem>>, vector<8x128xf32>
    tpu.vector_store %arg26[%c0_67, %c0_68], %100 {strides = array<i32>} : memref<8x512xf32, #tpu.memory_space<vmem>>, vector<8x128xf32>,
    %c0_69 = arith.constant 0 : index
    %c128 = arith.constant 128 : index
    %102 = vector.load %arg26[%c0_69, %c128] : memref<8x512xf32, #tpu.memory_space<vmem>>, vector<8x128xf32>
    tpu.vector_store %arg26[%c0_69, %c128], %42 {strides = array<i32>} : memref<8x512xf32, #tpu.memory_space<vmem>>, vector<8x128xf32>,
    %c0_70 = arith.constant 0 : index
    %c256 = arith.constant 256 : index
    %103 = vector.load %arg26[%c0_70, %c256] : memref<8x512xf32, #tpu.memory_space<vmem>>, vector<8x128xf32>
    tpu.vector_store %arg26[%c0_70, %c256], %64 {strides = array<i32>} : memref<8x512xf32, #tpu.memory_space<vmem>>, vector<8x128xf32>,
    %c0_71 = arith.constant 0 : index
    %c384 = arith.constant 384 : index
    %104 = vector.load %arg26[%c0_71, %c384] : memref<8x512xf32, #tpu.memory_space<vmem>>, vector<8x128xf32>
    tpu.vector_store %arg26[%c0_71, %c384], %86 {strides = array<i32>} : memref<8x512xf32, #tpu.memory_space<vmem>>, vector<8x128xf32>,
    return
  }
  func.func @transform_0(%arg0: i32) -> (i32, i32) {
    %c0_i32 = arith.constant 0 : i32
    %c0_i32_0 = arith.constant 0 : i32
    return %arg0, %c0_i32 : i32, i32
  }
  func.func @transform_1(%arg0: i32) -> (i32, i32) {
    %c0_i32 = arith.constant 0 : i32
    %c0_i32_0 = arith.constant 0 : i32
    return %arg0, %c0_i32 : i32, i32
  }
  func.func @transform_2(%arg0: i32) -> (i32, i32) {
    %c0_i32 = arith.constant 0 : i32
    %c0_i32_0 = arith.constant 0 : i32
    return %arg0, %c0_i32 : i32, i32
  }
  func.func @transform_3(%arg0: i32) -> (i32, i32) {
    %c0_i32 = arith.constant 0 : i32
    %c0_i32_0 = arith.constant 0 : i32
    %c0_i32_1 = arith.constant 0 : i32
    return %c0_i32, %c0_i32_0 : i32, i32
  }
  func.func @transform_4(%arg0: i32) -> (i32, i32) {
    %c0_i32 = arith.constant 0 : i32
    %c0_i32_0 = arith.constant 0 : i32
    %c0_i32_1 = arith.constant 0 : i32
    return %c0_i32, %c0_i32_0 : i32, i32
  }
  func.func @transform_5(%arg0: i32) -> (i32, i32) {
    %c0_i32 = arith.constant 0 : i32
    %c0_i32_0 = arith.constant 0 : i32
    %c0_i32_1 = arith.constant 0 : i32
    return %c0_i32, %c0_i32_0 : i32, i32
  }
  func.func @transform_6(%arg0: i32) -> (i32, i32) {
    %c0_i32 = arith.constant 0 : i32
    %c0_i32_0 = arith.constant 0 : i32
    %c0_i32_1 = arith.constant 0 : i32
    return %c0_i32, %c0_i32_0 : i32, i32
  }
  func.func @transform_7(%arg0: i32) -> (i32, i32) {
    %c0_i32 = arith.constant 0 : i32
    %c0_i32_0 = arith.constant 0 : i32
    %c0_i32_1 = arith.constant 0 : i32
    return %c0_i32, %c0_i32_0 : i32, i32
  }
  func.func @transform_8(%arg0: i32) -> (i32, i32) {
    %c0_i32 = arith.constant 0 : i32
    %c0_i32_0 = arith.constant 0 : i32
    %c0_i32_1 = arith.constant 0 : i32
    return %c0_i32, %c0_i32_0 : i32, i32
  }
  func.func @transform_9(%arg0: i32) -> (i32, i32) {
    %c0_i32 = arith.constant 0 : i32
    %c0_i32_0 = arith.constant 0 : i32
    %c0_i32_1 = arith.constant 0 : i32
    return %c0_i32, %c0_i32_0 : i32, i32
  }
  func.func @transform_10(%arg0: i32) -> (i32, i32) {
    %c0_i32 = arith.constant 0 : i32
    %c0_i32_0 = arith.constant 0 : i32
    %c0_i32_1 = arith.constant 0 : i32
    return %c0_i32, %c0_i32_0 : i32, i32
  }
  func.func @transform_11(%arg0: i32) -> (i32, i32) {
    %c0_i32 = arith.constant 0 : i32
    %c0_i32_0 = arith.constant 0 : i32
    %c0_i32_1 = arith.constant 0 : i32
    return %c0_i32, %c0_i32_0 : i32, i32
  }
  func.func @transform_12(%arg0: i32) -> (i32, i32) {
    %c0_i32 = arith.constant 0 : i32
    %c0_i32_0 = arith.constant 0 : i32
    %c0_i32_1 = arith.constant 0 : i32
    return %c0_i32, %c0_i32_0 : i32, i32
  }
  func.func @transform_13(%arg0: i32) -> (i32, i32) {
    %c0_i32 = arith.constant 0 : i32
    %c0_i32_0 = arith.constant 0 : i32
    %c0_i32_1 = arith.constant 0 : i32
    return %c0_i32, %c0_i32_0 : i32, i32
  }
  func.func @transform_14(%arg0: i32) -> (i32, i32) {
    %c0_i32 = arith.constant 0 : i32
    %c0_i32_0 = arith.constant 0 : i32
    %c0_i32_1 = arith.constant 0 : i32
    return %c0_i32, %c0_i32_0 : i32, i32
  }
  func.func @transform_15(%arg0: i32) -> (i32, i32) {
    %c0_i32 = arith.constant 0 : i32
    %c0_i32_0 = arith.constant 0 : i32
    %c0_i32_1 = arith.constant 0 : i32
    return %c0_i32, %c0_i32_0 : i32, i32
  }
  func.func @transform_16(%arg0: i32) -> (i32, i32) {
    %c0_i32 = arith.constant 0 : i32
    %c0_i32_0 = arith.constant 0 : i32
    %c0_i32_1 = arith.constant 0 : i32
    return %c0_i32, %c0_i32_0 : i32, i32
  }
  func.func @transform_17(%arg0: i32) -> (i32, i32) {
    %c0_i32 = arith.constant 0 : i32
    %c0_i32_0 = arith.constant 0 : i32
    %c0_i32_1 = arith.constant 0 : i32
    return %c0_i32, %c0_i32_0 : i32, i32
  }
  func.func @transform_18(%arg0: i32) -> (i32, i32) {
    %c0_i32 = arith.constant 0 : i32
    %c0_i32_0 = arith.constant 0 : i32
    %c0_i32_1 = arith.constant 0 : i32
    return %c0_i32, %c0_i32_0 : i32, i32
  }
  func.func @transform_19(%arg0: i32) -> (i32, i32) {
    %c0_i32 = arith.constant 0 : i32
    %c0_i32_0 = arith.constant 0 : i32
    %c0_i32_1 = arith.constant 0 : i32
    return %c0_i32, %c0_i32_0 : i32, i32
  }
  func.func @transform_20(%arg0: i32) -> (i32, i32) {
    %c0_i32 = arith.constant 0 : i32
    %c0_i32_0 = arith.constant 0 : i32
    %c0_i32_1 = arith.constant 0 : i32
    return %c0_i32, %c0_i32_0 : i32, i32
  }
  func.func @transform_21(%arg0: i32) -> (i32, i32) {
    %c0_i32 = arith.constant 0 : i32
    %c0_i32_0 = arith.constant 0 : i32
    %c0_i32_1 = arith.constant 0 : i32
    return %c0_i32, %c0_i32_0 : i32, i32
  }
  func.func @transform_22(%arg0: i32) -> (i32, i32) {
    %c0_i32 = arith.constant 0 : i32
    %c0_i32_0 = arith.constant 0 : i32
    %c0_i32_1 = arith.constant 0 : i32
    return %c0_i32, %c0_i32_0 : i32, i32
  }
  func.func @transform_23(%arg0: i32) -> (i32, i32) {
    %c0_i32 = arith.constant 0 : i32
    %c0_i32_0 = arith.constant 0 : i32
    %c0_i32_1 = arith.constant 0 : i32
    return %c0_i32, %c0_i32_0 : i32, i32
  }
  func.func @transform_24(%arg0: i32) -> (i32, i32) {
    %c0_i32 = arith.constant 0 : i32
    %c0_i32_0 = arith.constant 0 : i32
    %c0_i32_1 = arith.constant 0 : i32
    return %c0_i32, %c0_i32_0 : i32, i32
  }
  func.func @transform_25(%arg0: i32) -> (i32, i32) {
    %c0_i32 = arith.constant 0 : i32
    %c0_i32_0 = arith.constant 0 : i32
    return %arg0, %c0_i32 : i32, i32
  }
}

</mosaic_0001>

<llo_original>
// kernel: tpu_custom_call.1
$region0: #{tpu_custom_call.1}
  #allocation0 [shape = 'u32[]', space=smem, size = 0x4, offset = 0x4, fixed_abs, tag = 'smem constant byte address 0x4 - core index']
  #allocation1 [shape = 'u32[144,128]{1,0:T(1,128)}', space=vmem, size = 0x12000, scoped, tag = 'internal scratch']
  %s0 = inlined_call_operand.vmem [shape: bf16[64,3], index: 0, kind: input, shape index: {}]
  %s1 = inlined_call_operand.vmem [shape: bf16[8,128], index: 1, kind: input, shape index: {}]
  %s2 = inlined_call_operand.vmem [shape: bf16[8,128], index: 2, kind: input, shape index: {}]
  %s3 = inlined_call_operand.vmem [shape: f32[3,128], index: 3, kind: input, shape index: {}]
  %s4 = inlined_call_operand.vmem [shape: f32[1,128], index: 4, kind: input, shape index: {}]
  %s5 = inlined_call_operand.hbm [shape: bf16[128,128], index: 5, kind: input, shape index: {}]
  %s6 = inlined_call_operand.vmem [shape: f32[1,128], index: 6, kind: input, shape index: {}]
  %s7 = inlined_call_operand.hbm [shape: bf16[128,128], index: 7, kind: input, shape index: {}]
  %s8 = inlined_call_operand.vmem [shape: f32[1,128], index: 8, kind: input, shape index: {}]
  %s9 = inlined_call_operand.hbm [shape: bf16[128,256], index: 9, kind: input, shape index: {}]
  %s10 = inlined_call_operand.vmem [shape: f32[1,256], index: 10, kind: input, shape index: {}]
  %s11 = inlined_call_operand.hbm [shape: bf16[256,512], index: 11, kind: input, shape index: {}]
  %s12 = inlined_call_operand.vmem [shape: f32[1,512], index: 12, kind: input, shape index: {}]
  %s13 = inlined_call_operand.hbm [shape: bf16[512,128], index: 13, kind: input, shape index: {}]
  %s14 = inlined_call_operand.vmem [shape: f32[1,128], index: 14, kind: input, shape index: {}]
  %s15 = inlined_call_operand.hbm [shape: bf16[128,256], index: 15, kind: input, shape index: {}]
  %s16 = inlined_call_operand.vmem [shape: f32[1,256], index: 16, kind: input, shape index: {}]
  %s17 = inlined_call_operand.hbm [shape: bf16[256,512], index: 17, kind: input, shape index: {}]
  %s18 = inlined_call_operand.vmem [shape: f32[1,512], index: 18, kind: input, shape index: {}]
  %s19 = inlined_call_operand.hbm [shape: bf16[512,128], index: 19, kind: input, shape index: {}]
  %s20 = inlined_call_operand.vmem [shape: f32[1,128], index: 20, kind: input, shape index: {}]
  %s21 = inlined_call_operand.vmem [shape: bf16[128,128], index: 21, kind: input, shape index: {}]
  %s22 = inlined_call_operand.hbm [shape: bf16[128,128], index: 22, kind: input, shape index: {}]
  %s23 = inlined_call_operand.hbm [shape: bf16[128,128], index: 23, kind: input, shape index: {}]
  %s24 = inlined_call_operand.vmem [shape: f32[1,128], index: 24, kind: input, shape index: {}]
  %s25 = inlined_call_operand.hbm [shape: f32[8,512], index: 25, kind: output, shape index: {}]
  %s26 = sld [smem:[#allocation0]]
  $region150: #{tpu_custom_call.1} parent=0
    _
  %s28 = ssub.s32 1, %s26
  %s29 = scalar_select 0, %s28, %s26
  $region1: #{tpu_custom_call.1} parent=0
    #allocation2 [shape = 'u8[32768]{0}', space=vmem, size = 0x8000, scoped, tag = 'input window, operand 5, single buffered']
    #allocation3 [shape = 's32[1]{0}', space=sflag, size = 0x4, scoped, tag = 'scoped memory for tpu_custom_call.1']
    #allocation4 [shape = 's32[1]{0}', space=sflag, size = 0x4, scoped, tag = 'scoped memory for tpu_custom_call.1']
    #allocation5 [shape = 'u8[32768]{0}', space=vmem, size = 0x8000, scoped, tag = 'input window, operand 7, single buffered']
    #allocation6 [shape = 's32[1]{0}', space=sflag, size = 0x4, scoped, tag = 'scoped memory for tpu_custom_call.1']
    #allocation7 [shape = 'u8[65536]{0}', space=vmem, size = 0x10000, scoped, tag = 'input window, operand 9, single buffered']
    #allocation8 [shape = 'u8[262144]{0}', space=vmem, size = 0x40000, scoped, tag = 'input window, operand 11, single buffered']
    #allocation9 [shape = 's32[1]{0}', space=sflag, size = 0x4, scoped, tag = 'scoped memory for tpu_custom_call.1']
    #allocation10 [shape = 'u8[131072]{0}', space=vmem, size = 0x20000, scoped, tag = 'input window, operand 13, single buffered']
    #allocation11 [shape = 'u8[65536]{0}', space=vmem, size = 0x10000, scoped, tag = 'input window, operand 15, single buffered']
    #allocation12 [shape = 's32[1]{0}', space=sflag, size = 0x4, scoped, tag = 'scoped memory for tpu_custom_call.1']
    #allocation13 [shape = 'u8[262144]{0}', space=vmem, size = 0x40000, scoped, tag = 'input window, operand 17, single buffered']
    #allocation14 [shape = 'u8[131072]{0}', space=vmem, size = 0x20000, scoped, tag = 'input window, operand 19, single buffered']
    #allocation15 [shape = 's32[1]{0}', space=sflag, size = 0x4, scoped, tag = 'scoped memory for tpu_custom_call.1']
    #allocation16 [shape = 'u8[32768]{0}', space=vmem, size = 0x8000, scoped, tag = 'input window, operand 22, single buffered']
    #allocation17 [shape = 'u8[32768]{0}', space=vmem, size = 0x8000, scoped, tag = 'input window, operand 23, single buffered']
    #allocation18 [shape = 's32[1]{0}', space=sflag, size = 0x4, scoped, tag = 'scoped memory for tpu_custom_call.1']
    #allocation19 [shape = 'u8[16384]{0}', space=vmem, size = 0x4000, scoped, tag = 'output window, operand 0, single buffered']
    %30 = vsyncpa [#allocation3], 0
    %31 = vsyncpa [#allocation6], 0
    %32 = vsyncpa [#allocation9], 0
    %33 = vsyncpa [#allocation12], 0
    %34 = vsyncpa [#allocation15], 0
    %35 = vsyncpa [#allocation18], 0
    %36 = vsyncpa [#allocation4], 0
    // Predicated region
    $region2: #{tpu_custom_call.1} parent=1 // pred_check
      _
    $region3: #{tpu_custom_call.1} parent=1 // pred_check_branch
      %38 = sbr.rel (0) target = $region5
    $region4: #{tpu_custom_call.1} parent=1 // pred_region
      _
    $region5: #{tpu_custom_call.1} parent=1 // pred_fallthru
      _
    // Predicated region
    $region6: #{tpu_custom_call.1} parent=1 // pred_check
      _
    $region7: #{tpu_custom_call.1} parent=1 // pred_check_branch
      %40 = sbr.rel (0) target = $region9
    $region8: #{tpu_custom_call.1} parent=1 // pred_region
      _
    $region9: #{tpu_custom_call.1} parent=1 // pred_fallthru
      _
    // Predicated region
    $region10: #{tpu_custom_call.1} parent=1 // pred_check
      _
    $region11: #{tpu_custom_call.1} parent=1 // pred_check_branch
      %42 = sbr.rel (0) target = $region13
    $region12: #{tpu_custom_call.1} parent=1 // pred_region
      _
    $region13: #{tpu_custom_call.1} parent=1 // pred_fallthru
      _
    // Predicated region
    $region14: #{tpu_custom_call.1} parent=1 // pred_check
      _
    $region15: #{tpu_custom_call.1} parent=1 // pred_check_branch
      %44 = sbr.rel (0) target = $region17
    $region16: #{tpu_custom_call.1} parent=1 // pred_region
      _
    $region17: #{tpu_custom_call.1} parent=1 // pred_fallthru
      _
    // Predicated region
    $region18: #{tpu_custom_call.1} parent=1 // pred_check
      _
    $region19: #{tpu_custom_call.1} parent=1 // pred_check_branch
      %46 = sbr.rel (0) target = $region21
    $region20: #{tpu_custom_call.1} parent=1 // pred_region
      _
    $region21: #{tpu_custom_call.1} parent=1 // pred_fallthru
      _
    // Predicated region
    $region22: #{tpu_custom_call.1} parent=1 // pred_check
      _
    $region23: #{tpu_custom_call.1} parent=1 // pred_check_branch
      %48 = sbr.rel (0) target = $region25
    $region24: #{tpu_custom_call.1} parent=1 // pred_region
      %s50 = ssub.s32 1024, 1024
      %51 = vsyncadd [#allocation3], %s50
      %s52 = sshll.u32 [#allocation2], 4
      %s53 = int_to_ptr.vmem [resolvable:$true] %s52
      %58 = dma.hbm_to_vmem [thread:$0]  %s5, 1024, %s53, [#allocation3], 64, 64, 4
    $region25: #{tpu_custom_call.1} parent=1 // pred_fallthru
      _
    // Predicated region
    $region26: #{tpu_custom_call.1} parent=1 // pred_check
      _
    $region27: #{tpu_custom_call.1} parent=1 // pred_check_branch
      %60 = sbr.rel (0) target = $region29
    $region28: #{tpu_custom_call.1} parent=1 // pred_region
      _
    $region29: #{tpu_custom_call.1} parent=1 // pred_fallthru
      _
    // Predicated region
    $region30: #{tpu_custom_call.1} parent=1 // pred_check
      _
    $region31: #{tpu_custom_call.1} parent=1 // pred_check_branch
      %62 = sbr.rel (0) target = $region33
    $region32: #{tpu_custom_call.1} parent=1 // pred_region
      %s64 = ssub.s32 1024, 1024
      %65 = vsyncadd [#allocation6], %s64
      %s66 = sshll.u32 [#allocation5], 4
      %s67 = int_to_ptr.vmem [resolvable:$true] %s66
      %72 = dma.hbm_to_vmem [thread:$0]  %s7, 1024, %s67, [#allocation6], 64, 64, 4
    $region33: #{tpu_custom_call.1} parent=1 // pred_fallthru
      _
    // Predicated region
    $region34: #{tpu_custom_call.1} parent=1 // pred_check
      _
    $region35: #{tpu_custom_call.1} parent=1 // pred_check_branch
      %74 = sbr.rel (0) target = $region37
    $region36: #{tpu_custom_call.1} parent=1 // pred_region
      _
    $region37: #{tpu_custom_call.1} parent=1 // pred_fallthru
      _
    // Predicated region
    $region38: #{tpu_custom_call.1} parent=1 // pred_check
      _
    $region39: #{tpu_custom_call.1} parent=1 // pred_check_branch
      %76 = sbr.rel (0) target = $region41
    $region40: #{tpu_custom_call.1} parent=1 // pred_region
      %s78 = ssub.s32 2048, 2048
      %79 = vsyncadd [#allocation6], %s78
      %s80 = sshll.u32 [#allocation7], 4
      %s81 = int_to_ptr.vmem [resolvable:$true] %s80
      %86 = dma.hbm_to_vmem [thread:$0]  %s9, 2048, %s81, [#allocation6], 128, 128, 8
    $region41: #{tpu_custom_call.1} parent=1 // pred_fallthru
      _
    // Predicated region
    $region42: #{tpu_custom_call.1} parent=1 // pred_check
      _
    $region43: #{tpu_custom_call.1} parent=1 // pred_check_branch
      %88 = sbr.rel (0) target = $region45
    $region44: #{tpu_custom_call.1} parent=1 // pred_region
      _
    $region45: #{tpu_custom_call.1} parent=1 // pred_fallthru
      _
    // Predicated region
    $region46: #{tpu_custom_call.1} parent=1 // pred_check
      _
    $region47: #{tpu_custom_call.1} parent=1 // pred_check_branch
      %90 = sbr.rel (0) target = $region49
    $region48: #{tpu_custom_call.1} parent=1 // pred_region
      %s92 = ssub.s32 8192, 8192
      %93 = vsyncadd [#allocation9], %s92
      %s94 = sshll.u32 [#allocation8], 4
      %s95 = int_to_ptr.vmem [resolvable:$true] %s94
      %100 = dma.hbm_to_vmem [thread:$0]  %s11, 8192, %s95, [#allocation9], 256, 256, 16
    $region49: #{tpu_custom_call.1} parent=1 // pred_fallthru
      _
    // Predicated region
    $region50: #{tpu_custom_call.1} parent=1 // pred_check
      _
    $region51: #{tpu_custom_call.1} parent=1 // pred_check_branch
      %102 = sbr.rel (0) target = $region53
    $region52: #{tpu_custom_call.1} parent=1 // pred_region
      _
    $region53: #{tpu_custom_call.1} parent=1 // pred_fallthru
      _
    // Predicated region
    $region54: #{tpu_custom_call.1} parent=1 // pred_check
      _
    $region55: #{tpu_custom_call.1} parent=1 // pred_check_branch
      %104 = sbr.rel (0) target = $region57
    $region56: #{tpu_custom_call.1} parent=1 // pred_region
      %s106 = ssub.s32 4096, 4096
      %107 = vsyncadd [#allocation9], %s106
      %s108 = sshll.u32 [#allocation10], 4
      %s109 = int_to_ptr.vmem [resolvable:$true] %s108
      %114 = dma.hbm_to_vmem [thread:$0]  %s13, 4096, %s109, [#allocation9], 64, 64, 4
    $region57: #{tpu_custom_call.1} parent=1 // pred_fallthru
      _
    // Predicated region
    $region58: #{tpu_custom_call.1} parent=1 // pred_check
      _
    $region59: #{tpu_custom_call.1} parent=1 // pred_check_branch
      %116 = sbr.rel (0) target = $region61
    $region60: #{tpu_custom_call.1} parent=1 // pred_region
      _
    $region61: #{tpu_custom_call.1} parent=1 // pred_fallthru
      _
    // Predicated region
    $region62: #{tpu_custom_call.1} parent=1 // pred_check
      _
    $region63: #{tpu_custom_call.1} parent=1 // pred_check_branch
      %118 = sbr.rel (0) target = $region65
    $region64: #{tpu_custom_call.1} parent=1 // pred_region
      %s120 = ssub.s32 2048, 2048
      %121 = vsyncadd [#allocation12], %s120
      %s122 = sshll.u32 [#allocation11], 4
      %s123 = int_to_ptr.vmem [resolvable:$true] %s122
      %128 = dma.hbm_to_vmem [thread:$0]  %s15, 2048, %s123, [#allocation12], 128, 128, 8
    $region65: #{tpu_custom_call.1} parent=1 // pred_fallthru
      _
    // Predicated region
    $region66: #{tpu_custom_call.1} parent=1 // pred_check
      _
    $region67: #{tpu_custom_call.1} parent=1 // pred_check_branch
      %130 = sbr.rel (0) target = $region69
    $region68: #{tpu_custom_call.1} parent=1 // pred_region
      _
    $region69: #{tpu_custom_call.1} parent=1 // pred_fallthru
      _
    // Predicated region
    $region70: #{tpu_custom_call.1} parent=1 // pred_check
      _
    $region71: #{tpu_custom_call.1} parent=1 // pred_check_branch
      %132 = sbr.rel (0) target = $region73
    $region72: #{tpu_custom_call.1} parent=1 // pred_region
      %s134 = ssub.s32 8192, 8192
      %135 = vsyncadd [#allocation12], %s134
      %s136 = sshll.u32 [#allocation13], 4
      %s137 = int_to_ptr.vmem [resolvable:$true] %s136
      %142 = dma.hbm_to_vmem [thread:$0]  %s17, 8192, %s137, [#allocation12], 256, 256, 16
    $region73: #{tpu_custom_call.1} parent=1 // pred_fallthru
      _
    // Predicated region
    $region74: #{tpu_custom_call.1} parent=1 // pred_check
      _
    $region75: #{tpu_custom_call.1} parent=1 // pred_check_branch
      %144 = sbr.rel (0) target = $region77
    $region76: #{tpu_custom_call.1} parent=1 // pred_region
      _
    $region77: #{tpu_custom_call.1} parent=1 // pred_fallthru
      _
    // Predicated region
    $region78: #{tpu_custom_call.1} parent=1 // pred_check
      _
    $region79: #{tpu_custom_call.1} parent=1 // pred_check_branch
      %146 = sbr.rel (0) target = $region81
    $region80: #{tpu_custom_call.1} parent=1 // pred_region
      %s148 = ssub.s32 4096, 4096
      %149 = vsyncadd [#allocation15], %s148
      %s150 = sshll.u32 [#allocation14], 4
      %s151 = int_to_ptr.vmem [resolvable:$true] %s150
      %156 = dma.hbm_to_vmem [thread:$0]  %s19, 4096, %s151, [#allocation15], 64, 64, 4
    $region81: #{tpu_custom_call.1} parent=1 // pred_fallthru
      _
    // Predicated region
    $region82: #{tpu_custom_call.1} parent=1 // pred_check
      _
    $region83: #{tpu_custom_call.1} parent=1 // pred_check_branch
      %158 = sbr.rel (0) target = $region85
    $region84: #{tpu_custom_call.1} parent=1 // pred_region
      _
    $region85: #{tpu_custom_call.1} parent=1 // pred_fallthru
      _
    // Predicated region
    $region86: #{tpu_custom_call.1} parent=1 // pred_check
      _
    $region87: #{tpu_custom_call.1} parent=1 // pred_check_branch
      %160 = sbr.rel (0) target = $region89
    $region88: #{tpu_custom_call.1} parent=1 // pred_region
      _
    $region89: #{tpu_custom_call.1} parent=1 // pred_fallthru
      _
    // Predicated region
    $region90: #{tpu_custom_call.1} parent=1 // pred_check
      _
    $region91: #{tpu_custom_call.1} parent=1 // pred_check_branch
      %162 = sbr.rel (0) target = $region93
    $region92: #{tpu_custom_call.1} parent=1 // pred_region
      %s164 = ssub.s32 1024, 1024
      %165 = vsyncadd [#allocation15], %s164
      %s166 = sshll.u32 [#allocation16], 4
      %s167 = int_to_ptr.vmem [resolvable:$true] %s166
      %172 = dma.hbm_to_vmem [thread:$0]  %s22, 1024, %s167, [#allocation15], 64, 64, 4
    $region93: #{tpu_custom_call.1} parent=1 // pred_fallthru
      _
    // Predicated region
    $region94: #{tpu_custom_call.1} parent=1 // pred_check
      _
    $region95: #{tpu_custom_call.1} parent=1 // pred_check_branch
      %174 = sbr.rel (0) target = $region97
    $region96: #{tpu_custom_call.1} parent=1 // pred_region
      %s176 = ssub.s32 1024, 1024
      %177 = vsyncadd [#allocation18], %s176
      %s178 = sshll.u32 [#allocation17], 4
      %s179 = int_to_ptr.vmem [resolvable:$true] %s178
      %184 = dma.hbm_to_vmem [thread:$0]  %s23, 1024, %s179, [#allocation18], 64, 64, 4
    $region97: #{tpu_custom_call.1} parent=1 // pred_fallthru
      _
    // Predicated region
    $region98: #{tpu_custom_call.1} parent=1 // pred_check
      _
    $region99: #{tpu_custom_call.1} parent=1 // pred_check_branch
      %186 = sbr.rel (0) target = $region101
    $region100: #{tpu_custom_call.1} parent=1 // pred_region
      _
    $region101: #{tpu_custom_call.1} parent=1 // pred_fallthru
      _
    // Predicated region
    $region102: #{tpu_custom_call.1} parent=1 // pred_check
      _
    $region103: #{tpu_custom_call.1} parent=1 // pred_check_branch
      %188 = sbr.rel (0) target = $region105
    $region104: #{tpu_custom_call.1} parent=1 // pred_region
      %189 = dma.done [#allocation3], 1024
    $region105: #{tpu_custom_call.1} parent=1 // pred_fallthru
      _
    // Predicated region
    $region106: #{tpu_custom_call.1} parent=1 // pred_check
      _
    $region107: #{tpu_custom_call.1} parent=1 // pred_check_branch
      %191 = sbr.rel (0) target = $region109
    $region108: #{tpu_custom_call.1} parent=1 // pred_region
      %192 = dma.done [#allocation6], 1024
    $region109: #{tpu_custom_call.1} parent=1 // pred_fallthru
      _
    // Predicated region
    $region110: #{tpu_custom_call.1} parent=1 // pred_check
      _
    $region111: #{tpu_custom_call.1} parent=1 // pred_check_branch
      %194 = sbr.rel (0) target = $region113
    $region112: #{tpu_custom_call.1} parent=1 // pred_region
      %195 = dma.done [#allocation6], 2048
    $region113: #{tpu_custom_call.1} parent=1 // pred_fallthru
      _
    // Predicated region
    $region114: #{tpu_custom_call.1} parent=1 // pred_check
      _
    $region115: #{tpu_custom_call.1} parent=1 // pred_check_branch
      %197 = sbr.rel (0) target = $region117
    $region116: #{tpu_custom_call.1} parent=1 // pred_region
      %198 = dma.done [#allocation9], 8192
    $region117: #{tpu_custom_call.1} parent=1 // pred_fallthru
      _
    // Predicated region
    $region118: #{tpu_custom_call.1} parent=1 // pred_check
      _
    $region119: #{tpu_custom_call.1} parent=1 // pred_check_branch
      %200 = sbr.rel (0) target = $region121
    $region120: #{tpu_custom_call.1} parent=1 // pred_region
      %201 = dma.done [#allocation9], 4096
    $region121: #{tpu_custom_call.1} parent=1 // pred_fallthru
      _
    // Predicated region
    $region122: #{tpu_custom_call.1} parent=1 // pred_check
      _
    $region123: #{tpu_custom_call.1} parent=1 // pred_check_branch
      %203 = sbr.rel (0) target = $region125
    $region124: #{tpu_custom_call.1} parent=1 // pred_region
      %204 = dma.done [#allocation12], 2048
    $region125: #{tpu_custom_call.1} parent=1 // pred_fallthru
      _
    // Predicated region
    $region126: #{tpu_custom_call.1} parent=1 // pred_check
      _
    $region127: #{tpu_custom_call.1} parent=1 // pred_check_branch
      %206 = sbr.rel (0) target = $region129
    $region128: #{tpu_custom_call.1} parent=1 // pred_region
      %207 = dma.done [#allocation12], 8192
    $region129: #{tpu_custom_call.1} parent=1 // pred_fallthru
      _
    // Predicated region
    $region130: #{tpu_custom_call.1} parent=1 // pred_check
      _
    $region131: #{tpu_custom_call.1} parent=1 // pred_check_branch
      %209 = sbr.rel (0) target = $region133
    $region132: #{tpu_custom_call.1} parent=1 // pred_region
      %210 = dma.done [#allocation15], 4096
    $region133: #{tpu_custom_call.1} parent=1 // pred_fallthru
      _
    // Predicated region
    $region134: #{tpu_custom_call.1} parent=1 // pred_check
      _
    $region135: #{tpu_custom_call.1} parent=1 // pred_check_branch
      %212 = sbr.rel (0) target = $region137
    $region136: #{tpu_custom_call.1} parent=1 // pred_region
      %213 = dma.done [#allocation15], 1024
    $region137: #{tpu_custom_call.1} parent=1 // pred_fallthru
      _
    // Predicated region
    $region138: #{tpu_custom_call.1} parent=1 // pred_check
      _
    $region139: #{tpu_custom_call.1} parent=1 // pred_check_branch
      %215 = sbr.rel (0) target = $region141
    $region140: #{tpu_custom_call.1} parent=1 // pred_region
      %216 = dma.done [#allocation18], 1024
    $region141: #{tpu_custom_call.1} parent=1 // pred_fallthru
      _
    %v218 = vld [vmem:[%s0] sm:$0xf]
    %v219 = vld [vmem:[%s0 + $0x4] sm:$0xf]
    %v220 = vld [vmem:[%s0 + $0x8] sm:$0xf]
    %v221 = vld [vmem:[%s0 + $0xc] sm:$0xf]
    %v222 = vld [vmem:[%s0 + $0x10] sm:$0xf]
    %v223 = vld [vmem:[%s0 + $0x14] sm:$0xf]
    %v224 = vld [vmem:[%s0 + $0x18] sm:$0xf]
    %v225 = vld [vmem:[%s0 + $0x1c] sm:$0xf]
    %v226 = vunpack.c.l.bf16 %v218
    %v227 = vunpack.c.l.bf16 %v219
    %v228 = vunpack.c.l.bf16 %v220
    %v229 = vunpack.c.l.bf16 %v221
    %v230 = vunpack.c.l.bf16 %v222
    %v231 = vunpack.c.l.bf16 %v223
    %v232 = vunpack.c.l.bf16 %v224
    %v233 = vunpack.c.l.bf16 %v225
    %v234 = vld [vmem:[%s3] sm:$0x7]
    %236 = vset.pattern.permute.xlu0 0
    %237 = vperm.xlu0 %236, %v226
    %v238 = vpop.permute.xlu0 %237
    %241 = vset.pattern.permute.xlu0 0
    %242 = vperm.xlu0 %241, %v227
    %v243 = vpop.permute.xlu0 %242
    %246 = vset.pattern.permute.xlu0 0
    %247 = vperm.xlu0 %246, %v228
    %v248 = vpop.permute.xlu0 %247
    %251 = vset.pattern.permute.xlu0 0
    %252 = vperm.xlu0 %251, %v229
    %v253 = vpop.permute.xlu0 %252
    %256 = vset.pattern.permute.xlu0 0
    %257 = vperm.xlu0 %256, %v230
    %v258 = vpop.permute.xlu0 %257
    %261 = vset.pattern.permute.xlu0 0
    %262 = vperm.xlu0 %261, %v231
    %v263 = vpop.permute.xlu0 %262
    %266 = vset.pattern.permute.xlu0 0
    %267 = vperm.xlu0 %266, %v232
    %v268 = vpop.permute.xlu0 %267
    %271 = vset.pattern.permute.xlu0 0
    %272 = vperm.xlu0 %271, %v233
    %v273 = vpop.permute.xlu0 %272
    %v275 = vlaneseq
    %v276 = vshrl.u32 %v275, 7
    %v277 = vsub.s32 0, %v276
    %v278 = vrot.slane %v234, %v277
    %v279 = vmul.f32 %v238, %v278
    %v280 = vmul.f32 %v243, %v278
    %v281 = vmul.f32 %v248, %v278
    %v282 = vmul.f32 %v253, %v278
    %v283 = vmul.f32 %v258, %v278
    %v284 = vmul.f32 %v263, %v278
    %v285 = vmul.f32 %v268, %v278
    %v286 = vmul.f32 %v273, %v278
    %287 = vset.pattern.permute.xlu0 1
    %288 = vperm.xlu0 %287, %v226
    %v289 = vpop.permute.xlu0 %288
    %291 = vset.pattern.permute.xlu0 1
    %292 = vperm.xlu0 %291, %v227
    %v293 = vpop.permute.xlu0 %292
    %295 = vset.pattern.permute.xlu0 1
    %296 = vperm.xlu0 %295, %v228
    %v297 = vpop.permute.xlu0 %296
    %299 = vset.pattern.permute.xlu0 1
    %300 = vperm.xlu0 %299, %v229
    %v301 = vpop.permute.xlu0 %300
    %303 = vset.pattern.permute.xlu0 1
    %304 = vperm.xlu0 %303, %v230
    %v305 = vpop.permute.xlu0 %304
    %307 = vset.pattern.permute.xlu0 1
    %308 = vperm.xlu0 %307, %v231
    %v309 = vpop.permute.xlu0 %308
    %311 = vset.pattern.permute.xlu0 1
    %312 = vperm.xlu0 %311, %v232
    %v313 = vpop.permute.xlu0 %312
    %315 = vset.pattern.permute.xlu0 1
    %316 = vperm.xlu0 %315, %v233
    %v317 = vpop.permute.xlu0 %316
    %v319 = vlaneseq
    %v320 = vshrl.u32 %v319, 7
    %v321 = vsub.s32 1, %v320
    %v322 = vrot.slane %v234, %v321
    %v323 = vmul.f32 %v289, %v322
    %v324 = vmul.f32 %v293, %v322
    %v325 = vmul.f32 %v297, %v322
    %v326 = vmul.f32 %v301, %v322
    %v327 = vmul.f32 %v305, %v322
    %v328 = vmul.f32 %v309, %v322
    %v329 = vmul.f32 %v313, %v322
    %v330 = vmul.f32 %v317, %v322
    %v331 = vadd.f32 %v279, %v323
    %v332 = vadd.f32 %v280, %v324
    %v333 = vadd.f32 %v281, %v325
    %v334 = vadd.f32 %v282, %v326
    %v335 = vadd.f32 %v283, %v327
    %v336 = vadd.f32 %v284, %v328
    %v337 = vadd.f32 %v285, %v329
    %v338 = vadd.f32 %v286, %v330
    %339 = vset.pattern.permute.xlu0 2
    %340 = vperm.xlu0 %339, %v226
    %v341 = vpop.permute.xlu0 %340
    %343 = vset.pattern.permute.xlu0 2
    %344 = vperm.xlu0 %343, %v227
    %v345 = vpop.permute.xlu0 %344
    %347 = vset.pattern.permute.xlu0 2
    %348 = vperm.xlu0 %347, %v228
    %v349 = vpop.permute.xlu0 %348
    %351 = vset.pattern.permute.xlu0 2
    %352 = vperm.xlu0 %351, %v229
    %v353 = vpop.permute.xlu0 %352
    %355 = vset.pattern.permute.xlu0 2
    %356 = vperm.xlu0 %355, %v230
    %v357 = vpop.permute.xlu0 %356
    %359 = vset.pattern.permute.xlu0 2
    %360 = vperm.xlu0 %359, %v231
    %v361 = vpop.permute.xlu0 %360
    %363 = vset.pattern.permute.xlu0 2
    %364 = vperm.xlu0 %363, %v232
    %v365 = vpop.permute.xlu0 %364
    %367 = vset.pattern.permute.xlu0 2
    %368 = vperm.xlu0 %367, %v233
    %v369 = vpop.permute.xlu0 %368
    %v371 = vlaneseq
    %v372 = vshrl.u32 %v371, 7
    %v373 = vsub.s32 2, %v372
    %v374 = vrot.slane %v234, %v373
    %v375 = vmul.f32 %v341, %v374
    %v376 = vmul.f32 %v345, %v374
    %v377 = vmul.f32 %v349, %v374
    %v378 = vmul.f32 %v353, %v374
    %v379 = vmul.f32 %v357, %v374
    %v380 = vmul.f32 %v361, %v374
    %v381 = vmul.f32 %v365, %v374
    %v382 = vmul.f32 %v369, %v374
    %v383 = vadd.f32 %v331, %v375
    %v384 = vadd.f32 %v332, %v376
    %v385 = vadd.f32 %v333, %v377
    %v386 = vadd.f32 %v334, %v378
    %v387 = vadd.f32 %v335, %v379
    %v388 = vadd.f32 %v336, %v380
    %v389 = vadd.f32 %v337, %v381
    %v390 = vadd.f32 %v338, %v382
    %v391 = vld [vmem:[%s4] sm:$0x1]
    %v393 = vlaneseq
    %v394 = vshrl.u32 %v393, 7
    %v395 = vsub.s32 0, %v394
    %v396 = vrot.slane %v391, %v395
    %v398 = vadd.f32 %v383, %v396
    %v399 = vadd.f32 %v384, %v396
    %v400 = vadd.f32 %v385, %v396
    %v401 = vadd.f32 %v386, %v396
    %v402 = vadd.f32 %v387, %v396
    %v403 = vadd.f32 %v388, %v396
    %v404 = vadd.f32 %v389, %v396
    %v405 = vadd.f32 %v390, %v396
    %v406 = vmax.f32 %v398, 0.0
    %v407 = vmax.f32 %v399, 0.0
    %v408 = vmax.f32 %v400, 0.0
    %v409 = vmax.f32 %v401, 0.0
    %v410 = vmax.f32 %v402, 0.0
    %v411 = vmax.f32 %v403, 0.0
    %v412 = vmax.f32 %v404, 0.0
    %v413 = vmax.f32 %v405, 0.0
    %v414 = vpack.c.bf16 %v407, %v406
    %v415 = vpack.c.bf16 %v409, %v408
    %v416 = vpack.c.bf16 %v411, %v410
    %v417 = vpack.c.bf16 %v413, %v412
    %v418 = vld [vmem:[#allocation2] sm:$0xf]
    %v419 = vld [vmem:[#allocation2 + $0x4] sm:$0xf]
    %v420 = vld [vmem:[#allocation2 + $0x8] sm:$0xf]
    %v421 = vld [vmem:[#allocation2 + $0xc] sm:$0xf]
    %v422 = vld [vmem:[#allocation2 + $0x10] sm:$0xf]
    %v423 = vld [vmem:[#allocation2 + $0x14] sm:$0xf]
    %v424 = vld [vmem:[#allocation2 + $0x18] sm:$0xf]
    %v425 = vld [vmem:[#allocation2 + $0x1c] sm:$0xf]
    %v426 = vld [vmem:[#allocation2 + $0x20] sm:$0xf]
    %v427 = vld [vmem:[#allocation2 + $0x24] sm:$0xf]
    %v428 = vld [vmem:[#allocation2 + $0x28] sm:$0xf]
    %v429 = vld [vmem:[#allocation2 + $0x2c] sm:$0xf]
    %v430 = vld [vmem:[#allocation2 + $0x30] sm:$0xf]
    %v431 = vld [vmem:[#allocation2 + $0x34] sm:$0xf]
    %v432 = vld [vmem:[#allocation2 + $0x38] sm:$0xf]
    %v433 = vld [vmem:[#allocation2 + $0x3c] sm:$0xf]
    %v434 = vld [vmem:[%s6] sm:$0x1]
    %v436 = vlaneseq
    %v437 = vshrl.u32 %v436, 7
    %v438 = vsub.s32 0, %v437
    %v439 = vrot.slane %v434, %v438
    %v457 = vunpack.c.l.b16 %v418
    %v458 = vunpack.c.l.b16 %v419
    %v459 = vunpack.c.l.b16 %v420
    %v460 = vunpack.c.l.b16 %v421
    %v461 = vunpack.c.l.b16 %v422
    %v462 = vunpack.c.l.b16 %v423
    %v463 = vunpack.c.l.b16 %v424
    %v464 = vunpack.c.l.b16 %v425
    %v465 = vunpack.c.l.b16 %v426
    %v466 = vunpack.c.l.b16 %v427
    %v467 = vunpack.c.l.b16 %v428
    %v468 = vunpack.c.l.b16 %v429
    %v469 = vunpack.c.l.b16 %v430
    %v470 = vunpack.c.l.b16 %v431
    %v471 = vunpack.c.l.b16 %v432
    %v472 = vunpack.c.l.b16 %v433
    %v473 = vpack.c.b16 %v458, %v457
    %v474 = vpack.c.b16 %v460, %v459
    %v475 = vpack.c.b16 %v462, %v461
    %v476 = vpack.c.b16 %v464, %v463
    %v477 = vpack.c.b16 %v466, %v465
    %v478 = vpack.c.b16 %v468, %v467
    %v479 = vpack.c.b16 %v470, %v469
    %v480 = vpack.c.b16 %v472, %v471
    %489 = vmatprep.subr.bf16.mxu0 0
    %490 = vmatpush1.bf16.msra.mxu0 %v473
    %491 = vmatprep.subr.bf16.mxu0 0
    %492 = vmatpush1.bf16.msra.mxu0 %v474
    %493 = vmatprep.subr.bf16.mxu0 0
    %494 = vmatpush1.bf16.msra.mxu0 %v475
    %495 = vmatprep.subr.bf16.mxu0 0
    %496 = vmatpush1.bf16.msra.mxu0 %v476
    %497 = vmatprep.subr.bf16.mxu0 0
    %498 = vmatpush1.bf16.msra.mxu0 %v477
    %499 = vmatprep.subr.bf16.mxu0 0
    %500 = vmatpush1.bf16.msra.mxu0 %v478
    %501 = vmatprep.subr.bf16.mxu0 0
    %502 = vmatpush1.bf16.msra.mxu0 %v479
    %503 = vmatprep.subr.bf16.mxu0 0
    %504 = vmatpush1.bf16.msra.mxu0 %v480
    %505 = vmatprep.subr.bf16.mxu0 0
    %506 = vmatpush1.bf16.msra.mxu0 0
    %507 = vmatprep.subr.bf16.mxu0 0
    %508 = vmatpush1.bf16.msra.mxu0 0
    %509 = vmatprep.subr.bf16.mxu0 0
    %510 = vmatpush1.bf16.msra.mxu0 0
    %511 = vmatprep.subr.bf16.mxu0 0
    %512 = vmatpush1.bf16.msra.mxu0 0
    %513 = vmatprep.subr.bf16.mxu0 0
    %514 = vmatpush1.bf16.msra.mxu0 0
    %515 = vmatprep.subr.bf16.mxu0 0
    %516 = vmatpush1.bf16.msra.mxu0 0
    %517 = vmatprep.subr.bf16.mxu0 0
    %518 = vmatpush1.bf16.msra.mxu0 0
    %519 = vmatprep.subr.bf16.mxu0 0
    %520 = vmatpush1.bf16.msra.mxu0 0
    %521 = vmatprep.mubr.bf16.mxu0 0
    %522 = vmatmul.mubr.bf16.gmra.mrb[0].mxu0 %v414
    %v523 = vpop.f32.mrb[0].mxu0
    %v524 = vadd.f32 %v439, %v523
    %v525 = vpop.f32.mrb[0].mxu0
    %v526 = vpop.f32.mrb[0].mxu0
    %v527 = vadd.f32 %v439, %v526
    %v528 = vpop.f32.mrb[0].mxu0
    %529 = vmatprep.mubr.bf16.mxu0 0
    %530 = vmatmul.mubr.bf16.gmra.mrb[0].mxu0 %v415
    %v531 = vpop.f32.mrb[0].mxu0
    %v532 = vadd.f32 %v439, %v531
    %v533 = vpop.f32.mrb[0].mxu0
    %v534 = vpop.f32.mrb[0].mxu0
    %v535 = vadd.f32 %v439, %v534
    %v536 = vpop.f32.mrb[0].mxu0
    %537 = vmatprep.mubr.bf16.mxu0 0
    %538 = vmatmul.mubr.bf16.gmra.mrb[0].mxu0 %v416
    %v539 = vpop.f32.mrb[0].mxu0
    %v540 = vadd.f32 %v439, %v539
    %v541 = vpop.f32.mrb[0].mxu0
    %v542 = vpop.f32.mrb[0].mxu0
    %v543 = vadd.f32 %v439, %v542
    %v544 = vpop.f32.mrb[0].mxu0
    %545 = vmatprep.mubr.bf16.mxu0 0
    %546 = vmatmul.mubr.bf16.gmra.mrb[0].mxu0 %v417
    %v547 = vpop.f32.mrb[0].mxu0
    %v548 = vadd.f32 %v439, %v547
    %v549 = vpop.f32.mrb[0].mxu0
    %v550 = vpop.f32.mrb[0].mxu0
    %v551 = vadd.f32 %v439, %v550
    %v552 = vpop.f32.mrb[0].mxu0
    %553 = vdwg.mxu0
    %v554 = vmax.f32 %v524, 0.0
    %v555 = vmax.f32 %v527, 0.0
    %v556 = vmax.f32 %v532, 0.0
    %v557 = vmax.f32 %v535, 0.0
    %v558 = vmax.f32 %v540, 0.0
    %v559 = vmax.f32 %v543, 0.0
    %v560 = vmax.f32 %v548, 0.0
    %v561 = vmax.f32 %v551, 0.0
    %v562 = vpack.c.bf16 %v555, %v554
    %v563 = vpack.c.bf16 %v557, %v556
    %v564 = vpack.c.bf16 %v559, %v558
    %v565 = vpack.c.bf16 %v561, %v560
    %v566 = vld [vmem:[#allocation5] sm:$0xf]
    %v567 = vld [vmem:[#allocation5 + $0x4] sm:$0xf]
    %v568 = vld [vmem:[#allocation5 + $0x8] sm:$0xf]
    %v569 = vld [vmem:[#allocation5 + $0xc] sm:$0xf]
    %v570 = vld [vmem:[#allocation5 + $0x10] sm:$0xf]
    %v571 = vld [vmem:[#allocation5 + $0x14] sm:$0xf]
    %v572 = vld [vmem:[#allocation5 + $0x18] sm:$0xf]
    %v573 = vld [vmem:[#allocation5 + $0x1c] sm:$0xf]
    %v574 = vld [vmem:[#allocation5 + $0x20] sm:$0xf]
    %v575 = vld [vmem:[#allocation5 + $0x24] sm:$0xf]
    %v576 = vld [vmem:[#allocation5 + $0x28] sm:$0xf]
    %v577 = vld [vmem:[#allocation5 + $0x2c] sm:$0xf]
    %v578 = vld [vmem:[#allocation5 + $0x30] sm:$0xf]
    %v579 = vld [vmem:[#allocation5 + $0x34] sm:$0xf]
    %v580 = vld [vmem:[#allocation5 + $0x38] sm:$0xf]
    %v581 = vld [vmem:[#allocation5 + $0x3c] sm:$0xf]
    %v582 = vld [vmem:[%s8] sm:$0x1]
    %v584 = vlaneseq
    %v585 = vshrl.u32 %v584, 7
    %v586 = vsub.s32 0, %v585
    %v587 = vrot.slane %v582, %v586
    %v605 = vunpack.c.l.b16 %v566
    %v606 = vunpack.c.l.b16 %v567
    %v607 = vunpack.c.l.b16 %v568
    %v608 = vunpack.c.l.b16 %v569
    %v609 = vunpack.c.l.b16 %v570
    %v610 = vunpack.c.l.b16 %v571
    %v611 = vunpack.c.l.b16 %v572
    %v612 = vunpack.c.l.b16 %v573
    %v613 = vunpack.c.l.b16 %v574
    %v614 = vunpack.c.l.b16 %v575
    %v615 = vunpack.c.l.b16 %v576
    %v616 = vunpack.c.l.b16 %v577
    %v617 = vunpack.c.l.b16 %v578
    %v618 = vunpack.c.l.b16 %v579
    %v619 = vunpack.c.l.b16 %v580
    %v620 = vunpack.c.l.b16 %v581
    %v621 = vpack.c.b16 %v606, %v605
    %v622 = vpack.c.b16 %v608, %v607
    %v623 = vpack.c.b16 %v610, %v609
    %v624 = vpack.c.b16 %v612, %v611
    %v625 = vpack.c.b16 %v614, %v613
    %v626 = vpack.c.b16 %v616, %v615
    %v627 = vpack.c.b16 %v618, %v617
    %v628 = vpack.c.b16 %v620, %v619
    %637 = vmatprep.subr.bf16.mxu0 0
    %638 = vmatpush1.bf16.msra.mxu0 %v621
    %639 = vmatprep.subr.bf16.mxu0 0
    %640 = vmatpush1.bf16.msra.mxu0 %v622
    %641 = vmatprep.subr.bf16.mxu0 0
    %642 = vmatpush1.bf16.msra.mxu0 %v623
    %643 = vmatprep.subr.bf16.mxu0 0
    %644 = vmatpush1.bf16.msra.mxu0 %v624
    %645 = vmatprep.subr.bf16.mxu0 0
    %646 = vmatpush1.bf16.msra.mxu0 %v625
    %647 = vmatprep.subr.bf16.mxu0 0
    %648 = vmatpush1.bf16.msra.mxu0 %v626
    %649 = vmatprep.subr.bf16.mxu0 0
    %650 = vmatpush1.bf16.msra.mxu0 %v627
    %651 = vmatprep.subr.bf16.mxu0 0
    %652 = vmatpush1.bf16.msra.mxu0 %v628
    %653 = vmatprep.subr.bf16.mxu0 0
    %654 = vmatpush1.bf16.msra.mxu0 0
    %655 = vmatprep.subr.bf16.mxu0 0
    %656 = vmatpush1.bf16.msra.mxu0 0
    %657 = vmatprep.subr.bf16.mxu0 0
    %658 = vmatpush1.bf16.msra.mxu0 0
    %659 = vmatprep.subr.bf16.mxu0 0
    %660 = vmatpush1.bf16.msra.mxu0 0
    %661 = vmatprep.subr.bf16.mxu0 0
    %662 = vmatpush1.bf16.msra.mxu0 0
    %663 = vmatprep.subr.bf16.mxu0 0
    %664 = vmatpush1.bf16.msra.mxu0 0
    %665 = vmatprep.subr.bf16.mxu0 0
    %666 = vmatpush1.bf16.msra.mxu0 0
    %667 = vmatprep.subr.bf16.mxu0 0
    %668 = vmatpush1.bf16.msra.mxu0 0
    %669 = vmatprep.mubr.bf16.mxu0 0
    %670 = vmatmul.mubr.bf16.gmra.mrb[0].mxu0 %v562
    %v671 = vpop.f32.mrb[0].mxu0
    %v672 = vadd.f32 %v587, %v671
    %v673 = vpop.f32.mrb[0].mxu0
    %v674 = vpop.f32.mrb[0].mxu0
    %v675 = vadd.f32 %v587, %v674
    %v676 = vpop.f32.mrb[0].mxu0
    %677 = vmatprep.mubr.bf16.mxu0 0
    %678 = vmatmul.mubr.bf16.gmra.mrb[0].mxu0 %v563
    %v679 = vpop.f32.mrb[0].mxu0
    %v680 = vadd.f32 %v587, %v679
    %v681 = vpop.f32.mrb[0].mxu0
    %v682 = vpop.f32.mrb[0].mxu0
    %v683 = vadd.f32 %v587, %v682
    %v684 = vpop.f32.mrb[0].mxu0
    %685 = vmatprep.mubr.bf16.mxu0 0
    %686 = vmatmul.mubr.bf16.gmra.mrb[0].mxu0 %v564
    %v687 = vpop.f32.mrb[0].mxu0
    %v688 = vadd.f32 %v587, %v687
    %v689 = vpop.f32.mrb[0].mxu0
    %v690 = vpop.f32.mrb[0].mxu0
    %v691 = vadd.f32 %v587, %v690
    %v692 = vpop.f32.mrb[0].mxu0
    %693 = vmatprep.mubr.bf16.mxu0 0
    %694 = vmatmul.mubr.bf16.gmra.mrb[0].mxu0 %v565
    %v695 = vpop.f32.mrb[0].mxu0
    %v696 = vadd.f32 %v587, %v695
    %v697 = vpop.f32.mrb[0].mxu0
    %v698 = vpop.f32.mrb[0].mxu0
    %v699 = vadd.f32 %v587, %v698
    %v700 = vpop.f32.mrb[0].mxu0
    %701 = vdwg.mxu0
    %v702 = vrot.slane %v672, 4
    %v703 = vadd.f32 %v672, %v702
    %v704 = vrot.slane %v703, 2
    %v705 = vadd.f32 %v703, %v704
    %v706 = vrot.slane %v705, 1
    %v707 = vadd.f32 %v705, %v706
    %v708 = vrot.slane %v675, 4
    %v709 = vadd.f32 %v675, %v708
    %v710 = vrot.slane %v709, 2
    %v711 = vadd.f32 %v709, %v710
    %v712 = vrot.slane %v711, 1
    %v713 = vadd.f32 %v711, %v712
    %v714 = vrot.slane %v680, 4
    %v715 = vadd.f32 %v680, %v714
    %v716 = vrot.slane %v715, 2
    %v717 = vadd.f32 %v715, %v716
    %v718 = vrot.slane %v717, 1
    %v719 = vadd.f32 %v717, %v718
    %v720 = vrot.slane %v683, 4
    %v721 = vadd.f32 %v683, %v720
    %v722 = vrot.slane %v721, 2
    %v723 = vadd.f32 %v721, %v722
    %v724 = vrot.slane %v723, 1
    %v725 = vadd.f32 %v723, %v724
    %v726 = vrot.slane %v688, 4
    %v727 = vadd.f32 %v688, %v726
    %v728 = vrot.slane %v727, 2
    %v729 = vadd.f32 %v727, %v728
    %v730 = vrot.slane %v729, 1
    %v731 = vadd.f32 %v729, %v730
    %v732 = vrot.slane %v691, 4
    %v733 = vadd.f32 %v691, %v732
    %v734 = vrot.slane %v733, 2
    %v735 = vadd.f32 %v733, %v734
    %v736 = vrot.slane %v735, 1
    %v737 = vadd.f32 %v735, %v736
    %v738 = vrot.slane %v696, 4
    %v739 = vadd.f32 %v696, %v738
    %v740 = vrot.slane %v739, 2
    %v741 = vadd.f32 %v739, %v740
    %v742 = vrot.slane %v741, 1
    %v743 = vadd.f32 %v741, %v742
    %v744 = vrot.slane %v699, 4
    %v745 = vadd.f32 %v699, %v744
    %v746 = vrot.slane %v745, 2
    %v747 = vadd.f32 %v745, %v746
    %v748 = vrot.slane %v747, 1
    %v749 = vadd.f32 %v747, %v748
    %v750 = vmul.f32 %v707, 0.125
    %v751 = vmul.f32 %v713, 0.125
    %v752 = vmul.f32 %v719, 0.125
    %v753 = vmul.f32 %v725, 0.125
    %v754 = vmul.f32 %v731, 0.125
    %v755 = vmul.f32 %v737, 0.125
    %v756 = vmul.f32 %v743, 0.125
    %v757 = vmul.f32 %v749, 0.125
    %v758 = vld [vmem:[%s1] sm:$0xf]
    %v759 = vld [vmem:[#allocation7] sm:$0xff]
    %v760 = vld [vmem:[#allocation7 + $0x8] sm:$0xff]
    %v761 = vld [vmem:[#allocation7 + $0x10] sm:$0xff]
    %v762 = vld [vmem:[#allocation7 + $0x18] sm:$0xff]
    %v763 = vld [vmem:[#allocation7 + $0x20] sm:$0xff]
    %v764 = vld [vmem:[#allocation7 + $0x28] sm:$0xff]
    %v765 = vld [vmem:[#allocation7 + $0x30] sm:$0xff]
    %v766 = vld [vmem:[#allocation7 + $0x38] sm:$0xff]
    %v767 = vld [vmem:[#allocation7 + $0x40] sm:$0xff]
    %v768 = vld [vmem:[#allocation7 + $0x48] sm:$0xff]
    %v769 = vld [vmem:[#allocation7 + $0x50] sm:$0xff]
    %v770 = vld [vmem:[#allocation7 + $0x58] sm:$0xff]
    %v771 = vld [vmem:[#allocation7 + $0x60] sm:$0xff]
    %v772 = vld [vmem:[#allocation7 + $0x68] sm:$0xff]
    %v773 = vld [vmem:[#allocation7 + $0x70] sm:$0xff]
    %v774 = vld [vmem:[#allocation7 + $0x78] sm:$0xff]
    %v775 = vld [vmem:[%s10] sm:$0x3]
    %v777 = vlaneseq
    %v778 = vshrl.u32 %v777, 7
    %v779 = vsub.s32 0, %v778
    %v780 = vrot.slane %v775, %v779
    %v781 = vlaneseq
    %v782 = vshrl.u32 %v781, 7
    %v783 = vsub.s32 1, %v782
    %v784 = vrot.slane %v775, %v783
    %v803 = vunpack.c.l.b16 %v759
    %v804 = vunpack.c.h.b16 %v759
    %v805 = vunpack.c.l.b16 %v760
    %v806 = vunpack.c.h.b16 %v760
    %v807 = vunpack.c.l.b16 %v761
    %v808 = vunpack.c.h.b16 %v761
    %v809 = vunpack.c.l.b16 %v762
    %v810 = vunpack.c.h.b16 %v762
    %v811 = vunpack.c.l.b16 %v763
    %v812 = vunpack.c.h.b16 %v763
    %v813 = vunpack.c.l.b16 %v764
    %v814 = vunpack.c.h.b16 %v764
    %v815 = vunpack.c.l.b16 %v765
    %v816 = vunpack.c.h.b16 %v765
    %v817 = vunpack.c.l.b16 %v766
    %v818 = vunpack.c.h.b16 %v766
    %v819 = vunpack.c.l.b16 %v767
    %v820 = vunpack.c.h.b16 %v767
    %v821 = vunpack.c.l.b16 %v768
    %v822 = vunpack.c.h.b16 %v768
    %v823 = vunpack.c.l.b16 %v769
    %v824 = vunpack.c.h.b16 %v769
    %v825 = vunpack.c.l.b16 %v770
    %v826 = vunpack.c.h.b16 %v770
    %v827 = vunpack.c.l.b16 %v771
    %v828 = vunpack.c.h.b16 %v771
    %v829 = vunpack.c.l.b16 %v772
    %v830 = vunpack.c.h.b16 %v772
    %v831 = vunpack.c.l.b16 %v773
    %v832 = vunpack.c.h.b16 %v773
    %v833 = vunpack.c.l.b16 %v774
    %v834 = vunpack.c.h.b16 %v774
    %v835 = vpack.c.b16 %v805, %v803
    %v836 = vpack.c.b16 %v806, %v804
    %v837 = vpack.c.b16 %v809, %v807
    %v838 = vpack.c.b16 %v810, %v808
    %v839 = vpack.c.b16 %v813, %v811
    %v840 = vpack.c.b16 %v814, %v812
    %v841 = vpack.c.b16 %v817, %v815
    %v842 = vpack.c.b16 %v818, %v816
    %v843 = vpack.c.b16 %v821, %v819
    %v844 = vpack.c.b16 %v822, %v820
    %v845 = vpack.c.b16 %v825, %v823
    %v846 = vpack.c.b16 %v826, %v824
    %v847 = vpack.c.b16 %v829, %v827
    %v848 = vpack.c.b16 %v830, %v828
    %v849 = vpack.c.b16 %v833, %v831
    %v850 = vpack.c.b16 %v834, %v832
    %867 = vmatprep.subr.bf16.mxu0 %v836
    %868 = vmatpush1.bf16.msra.mxu0 %v835
    %869 = vmatprep.subr.bf16.mxu0 %v838
    %870 = vmatpush1.bf16.msra.mxu0 %v837
    %871 = vmatprep.subr.bf16.mxu0 %v840
    %872 = vmatpush1.bf16.msra.mxu0 %v839
    %873 = vmatprep.subr.bf16.mxu0 %v842
    %874 = vmatpush1.bf16.msra.mxu0 %v841
    %875 = vmatprep.subr.bf16.mxu0 %v844
    %876 = vmatpush1.bf16.msra.mxu0 %v843
    %877 = vmatprep.subr.bf16.mxu0 %v846
    %878 = vmatpush1.bf16.msra.mxu0 %v845
    %879 = vmatprep.subr.bf16.mxu0 %v848
    %880 = vmatpush1.bf16.msra.mxu0 %v847
    %881 = vmatprep.subr.bf16.mxu0 %v850
    %882 = vmatpush1.bf16.msra.mxu0 %v849
    %883 = vmatprep.subr.bf16.mxu0 0
    %884 = vmatpush1.bf16.msra.mxu0 0
    %885 = vmatprep.subr.bf16.mxu0 0
    %886 = vmatpush1.bf16.msra.mxu0 0
    %887 = vmatprep.subr.bf16.mxu0 0
    %888 = vmatpush1.bf16.msra.mxu0 0
    %889 = vmatprep.subr.bf16.mxu0 0
    %890 = vmatpush1.bf16.msra.mxu0 0
    %891 = vmatprep.subr.bf16.mxu0 0
    %892 = vmatpush1.bf16.msra.mxu0 0
    %893 = vmatprep.subr.bf16.mxu0 0
    %894 = vmatpush1.bf16.msra.mxu0 0
    %895 = vmatprep.subr.bf16.mxu0 0
    %896 = vmatpush1.bf16.msra.mxu0 0
    %897 = vmatprep.subr.bf16.mxu0 0
    %898 = vmatpush1.bf16.msra.mxu0 0
    %899 = vmatprep.mubr.bf16.mxu0 0
    %900 = vmatmul.mubr.bf16.gmra.mrb[0].mxu0 %v758
    %v901 = vpop.f32.mrb[0].mxu0
    %v902 = vadd.f32 %v780, %v901
    %v903 = vpop.f32.mrb[0].mxu0
    %v904 = vadd.f32 %v784, %v903
    %v905 = vpop.f32.mrb[0].mxu0
    %v906 = vpop.f32.mrb[0].mxu0
    %907 = vdwg.mxu0
    %v908 = vmax.f32 %v902, 0.0
    %v909 = vmax.f32 %v904, 0.0
    %v910 = vpack.c.bf16 %v908, %v908
    %v911 = vpack.c.bf16 %v909, %v909
    %v912 = vld [vmem:[#allocation8] sm:$0xff]
    %v913 = vld [vmem:[#allocation8 + $0x8] sm:$0xff]
    %v914 = vld [vmem:[#allocation8 + $0x10] sm:$0xff]
    %v915 = vld [vmem:[#allocation8 + $0x18] sm:$0xff]
    %v916 = vld [vmem:[#allocation8 + $0x20] sm:$0xff]
    %v917 = vld [vmem:[#allocation8 + $0x28] sm:$0xff]
    %v918 = vld [vmem:[#allocation8 + $0x30] sm:$0xff]
    %v919 = vld [vmem:[#allocation8 + $0x38] sm:$0xff]
    %v920 = vld [vmem:[#allocation8 + $0x40] sm:$0xff]
    %v921 = vld [vmem:[#allocation8 + $0x48] sm:$0xff]
    %v922 = vld [vmem:[#allocation8 + $0x50] sm:$0xff]
    %v923 = vld [vmem:[#allocation8 + $0x58] sm:$0xff]
    %v924 = vld [vmem:[#allocation8 + $0x60] sm:$0xff]
    %v925 = vld [vmem:[#allocation8 + $0x68] sm:$0xff]
    %v926 = vld [vmem:[#allocation8 + $0x70] sm:$0xff]
    %v927 = vld [vmem:[#allocation8 + $0x78] sm:$0xff]
    %v928 = vld [vmem:[#allocation8 + $0x80] sm:$0xff]
    %v929 = vld [vmem:[#allocation8 + $0x88] sm:$0xff]
    %v930 = vld [vmem:[#allocation8 + $0x90] sm:$0xff]
    %v931 = vld [vmem:[#allocation8 + $0x98] sm:$0xff]
    %v932 = vld [vmem:[#allocation8 + $0xa0] sm:$0xff]
    %v933 = vld [vmem:[#allocation8 + $0xa8] sm:$0xff]
    %v934 = vld [vmem:[#allocation8 + $0xb0] sm:$0xff]
    %v935 = vld [vmem:[#allocation8 + $0xb8] sm:$0xff]
    %v936 = vld [vmem:[#allocation8 + $0xc0] sm:$0xff]
    %v937 = vld [vmem:[#allocation8 + $0xc8] sm:$0xff]
    %v938 = vld [vmem:[#allocation8 + $0xd0] sm:$0xff]
    %v939 = vld [vmem:[#allocation8 + $0xd8] sm:$0xff]
    %v940 = vld [vmem:[#allocation8 + $0xe0] sm:$0xff]
    %v941 = vld [vmem:[#allocation8 + $0xe8] sm:$0xff]
    %v942 = vld [vmem:[#allocation8 + $0xf0] sm:$0xff]
    %v943 = vld [vmem:[#allocation8 + $0xf8] sm:$0xff]
    %v944 = vld [vmem:[#allocation8 + $0x100] sm:$0xff]
    %v945 = vld [vmem:[#allocation8 + $0x108] sm:$0xff]
    %v946 = vld [vmem:[#allocation8 + $0x110] sm:$0xff]
    %v947 = vld [vmem:[#allocation8 + $0x118] sm:$0xff]
    %v948 = vld [vmem:[#allocation8 + $0x120] sm:$0xff]
    %v949 = vld [vmem:[#allocation8 + $0x128] sm:$0xff]
    %v950 = vld [vmem:[#allocation8 + $0x130] sm:$0xff]
    %v951 = vld [vmem:[#allocation8 + $0x138] sm:$0xff]
    %v952 = vld [vmem:[#allocation8 + $0x140] sm:$0xff]
    %v953 = vld [vmem:[#allocation8 + $0x148] sm:$0xff]
    %v954 = vld [vmem:[#allocation8 + $0x150] sm:$0xff]
    %v955 = vld [vmem:[#allocation8 + $0x158] sm:$0xff]
    %v956 = vld [vmem:[#allocation8 + $0x160] sm:$0xff]
    %v957 = vld [vmem:[#allocation8 + $0x168] sm:$0xff]
    %v958 = vld [vmem:[#allocation8 + $0x170] sm:$0xff]
    %v959 = vld [vmem:[#allocation8 + $0x178] sm:$0xff]
    %v960 = vld [vmem:[#allocation8 + $0x180] sm:$0xff]
    %v961 = vld [vmem:[#allocation8 + $0x188] sm:$0xff]
    %v962 = vld [vmem:[#allocation8 + $0x190] sm:$0xff]
    %v963 = vld [vmem:[#allocation8 + $0x198] sm:$0xff]
    %v964 = vld [vmem:[#allocation8 + $0x1a0] sm:$0xff]
    %v965 = vld [vmem:[#allocation8 + $0x1a8] sm:$0xff]
    %v966 = vld [vmem:[#allocation8 + $0x1b0] sm:$0xff]
    %v967 = vld [vmem:[#allocation8 + $0x1b8] sm:$0xff]
    %v968 = vld [vmem:[#allocation8 + $0x1c0] sm:$0xff]
    %v969 = vld [vmem:[#allocation8 + $0x1c8] sm:$0xff]
    %v970 = vld [vmem:[#allocation8 + $0x1d0] sm:$0xff]
    %v971 = vld [vmem:[#allocation8 + $0x1d8] sm:$0xff]
    %v972 = vld [vmem:[#allocation8 + $0x1e0] sm:$0xff]
    %v973 = vld [vmem:[#allocation8 + $0x1e8] sm:$0xff]
    %v974 = vld [vmem:[#allocation8 + $0x1f0] sm:$0xff]
    %v975 = vld [vmem:[#allocation8 + $0x1f8] sm:$0xff]
    %v976 = vld [vmem:[%s12] sm:$0xf]
    %v978 = vlaneseq
    %v979 = vshrl.u32 %v978, 7
    %v980 = vsub.s32 0, %v979
    %v981 = vrot.slane %v976, %v980
    %v982 = vlaneseq
    %v983 = vshrl.u32 %v982, 7
    %v984 = vsub.s32 1, %v983
    %v985 = vrot.slane %v976, %v984
    %v986 = vlaneseq
    %v987 = vshrl.u32 %v986, 7
    %v988 = vsub.s32 2, %v987
    %v989 = vrot.slane %v976, %v988
    %v990 = vlaneseq
    %v991 = vshrl.u32 %v990, 7
    %v992 = vsub.s32 3, %v991
    %v993 = vrot.slane %v976, %v992
    %v1062 = vunpack.c.l.b16 %v912
    %v1063 = vunpack.c.h.b16 %v912
    %v1064 = vunpack.c.l.b16 %v913
    %v1065 = vunpack.c.h.b16 %v913
    %v1066 = vunpack.c.l.b16 %v914
    %v1067 = vunpack.c.h.b16 %v914
    %v1068 = vunpack.c.l.b16 %v915
    %v1069 = vunpack.c.h.b16 %v915
    %v1070 = vunpack.c.l.b16 %v916
    %v1071 = vunpack.c.h.b16 %v916
    %v1072 = vunpack.c.l.b16 %v917
    %v1073 = vunpack.c.h.b16 %v917
    %v1074 = vunpack.c.l.b16 %v918
    %v1075 = vunpack.c.h.b16 %v918
    %v1076 = vunpack.c.l.b16 %v919
    %v1077 = vunpack.c.h.b16 %v919
    %v1078 = vunpack.c.l.b16 %v920
    %v1079 = vunpack.c.h.b16 %v920
    %v1080 = vunpack.c.l.b16 %v921
    %v1081 = vunpack.c.h.b16 %v921
    %v1082 = vunpack.c.l.b16 %v922
    %v1083 = vunpack.c.h.b16 %v922
    %v1084 = vunpack.c.l.b16 %v923
    %v1085 = vunpack.c.h.b16 %v923
    %v1086 = vunpack.c.l.b16 %v924
    %v1087 = vunpack.c.h.b16 %v924
    %v1088 = vunpack.c.l.b16 %v925
    %v1089 = vunpack.c.h.b16 %v925
    %v1090 = vunpack.c.l.b16 %v926
    %v1091 = vunpack.c.h.b16 %v926
    %v1092 = vunpack.c.l.b16 %v927
    %v1093 = vunpack.c.h.b16 %v927
    %v1094 = vunpack.c.l.b16 %v928
    %v1095 = vunpack.c.h.b16 %v928
    %v1096 = vunpack.c.l.b16 %v929
    %v1097 = vunpack.c.h.b16 %v929
    %v1098 = vunpack.c.l.b16 %v930
    %v1099 = vunpack.c.h.b16 %v930
    %v1100 = vunpack.c.l.b16 %v931
    %v1101 = vunpack.c.h.b16 %v931
    %v1102 = vunpack.c.l.b16 %v932
    %v1103 = vunpack.c.h.b16 %v932
    %v1104 = vunpack.c.l.b16 %v933
    %v1105 = vunpack.c.h.b16 %v933
    %v1106 = vunpack.c.l.b16 %v934
    %v1107 = vunpack.c.h.b16 %v934
    %v1108 = vunpack.c.l.b16 %v935
    %v1109 = vunpack.c.h.b16 %v935
    %v1110 = vunpack.c.l.b16 %v936
    %v1111 = vunpack.c.h.b16 %v936
    %v1112 = vunpack.c.l.b16 %v937
    %v1113 = vunpack.c.h.b16 %v937
    %v1114 = vunpack.c.l.b16 %v938
    %v1115 = vunpack.c.h.b16 %v938
    %v1116 = vunpack.c.l.b16 %v939
    %v1117 = vunpack.c.h.b16 %v939
    %v1118 = vunpack.c.l.b16 %v940
    %v1119 = vunpack.c.h.b16 %v940
    %v1120 = vunpack.c.l.b16 %v941
    %v1121 = vunpack.c.h.b16 %v941
    %v1122 = vunpack.c.l.b16 %v942
    %v1123 = vunpack.c.h.b16 %v942
    %v1124 = vunpack.c.l.b16 %v943
    %v1125 = vunpack.c.h.b16 %v943
    %v1126 = vunpack.c.l.b16 %v944
    %v1127 = vunpack.c.h.b16 %v944
    %v1128 = vunpack.c.l.b16 %v945
    %v1129 = vunpack.c.h.b16 %v945
    %v1130 = vunpack.c.l.b16 %v946
    %v1131 = vunpack.c.h.b16 %v946
    %v1132 = vunpack.c.l.b16 %v947
    %v1133 = vunpack.c.h.b16 %v947
    %v1134 = vunpack.c.l.b16 %v948
    %v1135 = vunpack.c.h.b16 %v948
    %v1136 = vunpack.c.l.b16 %v949
    %v1137 = vunpack.c.h.b16 %v949
    %v1138 = vunpack.c.l.b16 %v950
    %v1139 = vunpack.c.h.b16 %v950
    %v1140 = vunpack.c.l.b16 %v951
    %v1141 = vunpack.c.h.b16 %v951
    %v1142 = vunpack.c.l.b16 %v952
    %v1143 = vunpack.c.h.b16 %v952
    %v1144 = vunpack.c.l.b16 %v953
    %v1145 = vunpack.c.h.b16 %v953
    %v1146 = vunpack.c.l.b16 %v954
    %v1147 = vunpack.c.h.b16 %v954
    %v1148 = vunpack.c.l.b16 %v955
    %v1149 = vunpack.c.h.b16 %v955
    %v1150 = vunpack.c.l.b16 %v956
    %v1151 = vunpack.c.h.b16 %v956
    %v1152 = vunpack.c.l.b16 %v957
    %v1153 = vunpack.c.h.b16 %v957
    %v1154 = vunpack.c.l.b16 %v958
    %v1155 = vunpack.c.h.b16 %v958
    %v1156 = vunpack.c.l.b16 %v959
    %v1157 = vunpack.c.h.b16 %v959
    %v1158 = vunpack.c.l.b16 %v960
    %v1159 = vunpack.c.h.b16 %v960
    %v1160 = vunpack.c.l.b16 %v961
    %v1161 = vunpack.c.h.b16 %v961
    %v1162 = vunpack.c.l.b16 %v962
    %v1163 = vunpack.c.h.b16 %v962
    %v1164 = vunpack.c.l.b16 %v963
    %v1165 = vunpack.c.h.b16 %v963
    %v1166 = vunpack.c.l.b16 %v964
    %v1167 = vunpack.c.h.b16 %v964
    %v1168 = vunpack.c.l.b16 %v965
    %v1169 = vunpack.c.h.b16 %v965
    %v1170 = vunpack.c.l.b16 %v966
    %v1171 = vunpack.c.h.b16 %v966
    %v1172 = vunpack.c.l.b16 %v967
    %v1173 = vunpack.c.h.b16 %v967
    %v1174 = vunpack.c.l.b16 %v968
    %v1175 = vunpack.c.h.b16 %v968
    %v1176 = vunpack.c.l.b16 %v969
    %v1177 = vunpack.c.h.b16 %v969
    %v1178 = vunpack.c.l.b16 %v970
    %v1179 = vunpack.c.h.b16 %v970
    %v1180 = vunpack.c.l.b16 %v971
    %v1181 = vunpack.c.h.b16 %v971
    %v1182 = vunpack.c.l.b16 %v972
    %v1183 = vunpack.c.h.b16 %v972
    %v1184 = vunpack.c.l.b16 %v973
    %v1185 = vunpack.c.h.b16 %v973
    %v1186 = vunpack.c.l.b16 %v974
    %v1187 = vunpack.c.h.b16 %v974
    %v1188 = vunpack.c.l.b16 %v975
    %v1189 = vunpack.c.h.b16 %v975
    %v1190 = vpack.c.b16 %v1066, %v1062
    %v1191 = vpack.c.b16 %v1067, %v1063
    %v1192 = vpack.c.b16 %v1068, %v1064
    %v1193 = vpack.c.b16 %v1069, %v1065
    %v1194 = vpack.c.b16 %v1074, %v1070
    %v1195 = vpack.c.b16 %v1075, %v1071
    %v1196 = vpack.c.b16 %v1076, %v1072
    %v1197 = vpack.c.b16 %v1077, %v1073
    %v1198 = vpack.c.b16 %v1082, %v1078
    %v1199 = vpack.c.b16 %v1083, %v1079
    %v1200 = vpack.c.b16 %v1084, %v1080
    %v1201 = vpack.c.b16 %v1085, %v1081
    %v1202 = vpack.c.b16 %v1090, %v1086
    %v1203 = vpack.c.b16 %v1091, %v1087
    %v1204 = vpack.c.b16 %v1092, %v1088
    %v1205 = vpack.c.b16 %v1093, %v1089
    %v1206 = vpack.c.b16 %v1098, %v1094
    %v1207 = vpack.c.b16 %v1099, %v1095
    %v1208 = vpack.c.b16 %v1100, %v1096
    %v1209 = vpack.c.b16 %v1101, %v1097
    %v1210 = vpack.c.b16 %v1106, %v1102
    %v1211 = vpack.c.b16 %v1107, %v1103
    %v1212 = vpack.c.b16 %v1108, %v1104
    %v1213 = vpack.c.b16 %v1109, %v1105
    %v1214 = vpack.c.b16 %v1114, %v1110
    %v1215 = vpack.c.b16 %v1115, %v1111
    %v1216 = vpack.c.b16 %v1116, %v1112
    %v1217 = vpack.c.b16 %v1117, %v1113
    %v1218 = vpack.c.b16 %v1122, %v1118
    %v1219 = vpack.c.b16 %v1123, %v1119
    %v1220 = vpack.c.b16 %v1124, %v1120
    %v1221 = vpack.c.b16 %v1125, %v1121
    %v1222 = vpack.c.b16 %v1130, %v1126
    %v1223 = vpack.c.b16 %v1131, %v1127
    %v1224 = vpack.c.b16 %v1132, %v1128
    %v1225 = vpack.c.b16 %v1133, %v1129
    %v1226 = vpack.c.b16 %v1138, %v1134
    %v1227 = vpack.c.b16 %v1139, %v1135
    %v1228 = vpack.c.b16 %v1140, %v1136
    %v1229 = vpack.c.b16 %v1141, %v1137
    %v1230 = vpack.c.b16 %v1146, %v1142
    %v1231 = vpack.c.b16 %v1147, %v1143
    %v1232 = vpack.c.b16 %v1148, %v1144
    %v1233 = vpack.c.b16 %v1149, %v1145
    %v1234 = vpack.c.b16 %v1154, %v1150
    %v1235 = vpack.c.b16 %v1155, %v1151
    %v1236 = vpack.c.b16 %v1156, %v1152
    %v1237 = vpack.c.b16 %v1157, %v1153
    %v1238 = vpack.c.b16 %v1162, %v1158
    %v1239 = vpack.c.b16 %v1163, %v1159
    %v1240 = vpack.c.b16 %v1164, %v1160
    %v1241 = vpack.c.b16 %v1165, %v1161
    %v1242 = vpack.c.b16 %v1170, %v1166
    %v1243 = vpack.c.b16 %v1171, %v1167
    %v1244 = vpack.c.b16 %v1172, %v1168
    %v1245 = vpack.c.b16 %v1173, %v1169
    %v1246 = vpack.c.b16 %v1178, %v1174
    %v1247 = vpack.c.b16 %v1179, %v1175
    %v1248 = vpack.c.b16 %v1180, %v1176
    %v1249 = vpack.c.b16 %v1181, %v1177
    %v1250 = vpack.c.b16 %v1186, %v1182
    %v1251 = vpack.c.b16 %v1187, %v1183
    %v1252 = vpack.c.b16 %v1188, %v1184
    %v1253 = vpack.c.b16 %v1189, %v1185
    %1318 = vmatprep.subr.bf16.mxu0 %v1191
    %1319 = vmatpush1.bf16.msra.mxu0 %v1190
    %1320 = vmatprep.subr.bf16.mxu0 %v1195
    %1321 = vmatpush1.bf16.msra.mxu0 %v1194
    %1322 = vmatprep.subr.bf16.mxu0 %v1199
    %1323 = vmatpush1.bf16.msra.mxu0 %v1198
    %1324 = vmatprep.subr.bf16.mxu0 %v1203
    %1325 = vmatpush1.bf16.msra.mxu0 %v1202
    %1326 = vmatprep.subr.bf16.mxu0 %v1207
    %1327 = vmatpush1.bf16.msra.mxu0 %v1206
    %1328 = vmatprep.subr.bf16.mxu0 %v1211
    %1329 = vmatpush1.bf16.msra.mxu0 %v1210
    %1330 = vmatprep.subr.bf16.mxu0 %v1215
    %1331 = vmatpush1.bf16.msra.mxu0 %v1214
    %1332 = vmatprep.subr.bf16.mxu0 %v1219
    %1333 = vmatpush1.bf16.msra.mxu0 %v1218
    %1334 = vmatprep.subr.bf16.mxu0 %v1223
    %1335 = vmatpush1.bf16.msra.mxu0 %v1222
    %1336 = vmatprep.subr.bf16.mxu0 %v1227
    %1337 = vmatpush1.bf16.msra.mxu0 %v1226
    %1338 = vmatprep.subr.bf16.mxu0 %v1231
    %1339 = vmatpush1.bf16.msra.mxu0 %v1230
    %1340 = vmatprep.subr.bf16.mxu0 %v1235
    %1341 = vmatpush1.bf16.msra.mxu0 %v1234
    %1342 = vmatprep.subr.bf16.mxu0 %v1239
    %1343 = vmatpush1.bf16.msra.mxu0 %v1238
    %1344 = vmatprep.subr.bf16.mxu0 %v1243
    %1345 = vmatpush1.bf16.msra.mxu0 %v1242
    %1346 = vmatprep.subr.bf16.mxu0 %v1247
    %1347 = vmatpush1.bf16.msra.mxu0 %v1246
    %1348 = vmatprep.subr.bf16.mxu0 %v1251
    %1349 = vmatpush1.bf16.msra.mxu0 %v1250
    %1350 = vmatprep.mubr.bf16.mxu0 %v911
    %1351 = vmatmul.mubr.bf16.gmra.mrb[0].mxu0 %v910
    %v1352 = vpop.f32.mrb[0].mxu0
    %v1353 = vadd.f32 %v981, %v1352
    %v1354 = vpop.f32.mrb[0].mxu0
    %v1355 = vadd.f32 %v985, %v1354
    %v1356 = vpop.f32.mrb[0].mxu0
    %v1357 = vpop.f32.mrb[0].mxu0
    %1358 = vdwg.mxu0
    %1359 = vmatprep.subr.bf16.mxu0 %v1193
    %1360 = vmatpush1.bf16.msra.mxu0 %v1192
    %1361 = vmatprep.subr.bf16.mxu0 %v1197
    %1362 = vmatpush1.bf16.msra.mxu0 %v1196
    %1363 = vmatprep.subr.bf16.mxu0 %v1201
    %1364 = vmatpush1.bf16.msra.mxu0 %v1200
    %1365 = vmatprep.subr.bf16.mxu0 %v1205
    %1366 = vmatpush1.bf16.msra.mxu0 %v1204
    %1367 = vmatprep.subr.bf16.mxu0 %v1209
    %1368 = vmatpush1.bf16.msra.mxu0 %v1208
    %1369 = vmatprep.subr.bf16.mxu0 %v1213
    %1370 = vmatpush1.bf16.msra.mxu0 %v1212
    %1371 = vmatprep.subr.bf16.mxu0 %v1217
    %1372 = vmatpush1.bf16.msra.mxu0 %v1216
    %1373 = vmatprep.subr.bf16.mxu0 %v1221
    %1374 = vmatpush1.bf16.msra.mxu0 %v1220
    %1375 = vmatprep.subr.bf16.mxu0 %v1225
    %1376 = vmatpush1.bf16.msra.mxu0 %v1224
    %1377 = vmatprep.subr.bf16.mxu0 %v1229
    %1378 = vmatpush1.bf16.msra.mxu0 %v1228
    %1379 = vmatprep.subr.bf16.mxu0 %v1233
    %1380 = vmatpush1.bf16.msra.mxu0 %v1232
    %1381 = vmatprep.subr.bf16.mxu0 %v1237
    %1382 = vmatpush1.bf16.msra.mxu0 %v1236
    %1383 = vmatprep.subr.bf16.mxu0 %v1241
    %1384 = vmatpush1.bf16.msra.mxu0 %v1240
    %1385 = vmatprep.subr.bf16.mxu0 %v1245
    %1386 = vmatpush1.bf16.msra.mxu0 %v1244
    %1387 = vmatprep.subr.bf16.mxu0 %v1249
    %1388 = vmatpush1.bf16.msra.mxu0 %v1248
    %1389 = vmatprep.subr.bf16.mxu0 %v1253
    %1390 = vmatpush1.bf16.msra.mxu0 %v1252
    %1391 = vmatprep.mubr.bf16.mxu0 %v911
    %1392 = vmatmul.mubr.bf16.gmra.mrb[0].mxu0 %v910
    %v1393 = vpop.f32.mrb[0].mxu0
    %v1394 = vadd.f32 %v989, %v1393
    %v1395 = vpop.f32.mrb[0].mxu0
    %v1396 = vadd.f32 %v993, %v1395
    %v1397 = vpop.f32.mrb[0].mxu0
    %v1398 = vpop.f32.mrb[0].mxu0
    %1399 = vdwg.mxu0
    %v1400 = vmax.f32 %v1353, 0.0
    %v1401 = vmax.f32 %v1355, 0.0
    %v1402 = vmax.f32 %v1394, 0.0
    %v1403 = vmax.f32 %v1396, 0.0
    %v1404 = vpack.c.bf16 %v1400, %v1400
    %v1405 = vpack.c.bf16 %v1401, %v1401
    %v1406 = vpack.c.bf16 %v1402, %v1402
    %v1407 = vpack.c.bf16 %v1403, %v1403
    %v1408 = vld [vmem:[#allocation10] sm:$0xf]
    %v1409 = vld [vmem:[#allocation10 + $0x4] sm:$0xf]
    %v1410 = vld [vmem:[#allocation10 + $0x8] sm:$0xf]
    %v1411 = vld [vmem:[#allocation10 + $0xc] sm:$0xf]
    %v1412 = vld [vmem:[#allocation10 + $0x10] sm:$0xf]
    %v1413 = vld [vmem:[#allocation10 + $0x14] sm:$0xf]
    %v1414 = vld [vmem:[#allocation10 + $0x18] sm:$0xf]
    %v1415 = vld [vmem:[#allocation10 + $0x1c] sm:$0xf]
    %v1416 = vld [vmem:[#allocation10 + $0x20] sm:$0xf]
    %v1417 = vld [vmem:[#allocation10 + $0x24] sm:$0xf]
    %v1418 = vld [vmem:[#allocation10 + $0x28] sm:$0xf]
    %v1419 = vld [vmem:[#allocation10 + $0x2c] sm:$0xf]
    %v1420 = vld [vmem:[#allocation10 + $0x30] sm:$0xf]
    %v1421 = vld [vmem:[#allocation10 + $0x34] sm:$0xf]
    %v1422 = vld [vmem:[#allocation10 + $0x38] sm:$0xf]
    %v1423 = vld [vmem:[#allocation10 + $0x3c] sm:$0xf]
    %v1424 = vld [vmem:[#allocation10 + $0x40] sm:$0xf]
    %v1425 = vld [vmem:[#allocation10 + $0x44] sm:$0xf]
    %v1426 = vld [vmem:[#allocation10 + $0x48] sm:$0xf]
    %v1427 = vld [vmem:[#allocation10 + $0x4c] sm:$0xf]
    %v1428 = vld [vmem:[#allocation10 + $0x50] sm:$0xf]
    %v1429 = vld [vmem:[#allocation10 + $0x54] sm:$0xf]
    %v1430 = vld [vmem:[#allocation10 + $0x58] sm:$0xf]
    %v1431 = vld [vmem:[#allocation10 + $0x5c] sm:$0xf]
    %v1432 = vld [vmem:[#allocation10 + $0x60] sm:$0xf]
    %v1433 = vld [vmem:[#allocation10 + $0x64] sm:$0xf]
    %v1434 = vld [vmem:[#allocation10 + $0x68] sm:$0xf]
    %v1435 = vld [vmem:[#allocation10 + $0x6c] sm:$0xf]
    %v1436 = vld [vmem:[#allocation10 + $0x70] sm:$0xf]
    %v1437 = vld [vmem:[#allocation10 + $0x74] sm:$0xf]
    %v1438 = vld [vmem:[#allocation10 + $0x78] sm:$0xf]
    %v1439 = vld [vmem:[#allocation10 + $0x7c] sm:$0xf]
    %v1440 = vld [vmem:[#allocation10 + $0x80] sm:$0xf]
    %v1441 = vld [vmem:[#allocation10 + $0x84] sm:$0xf]
    %v1442 = vld [vmem:[#allocation10 + $0x88] sm:$0xf]
    %v1443 = vld [vmem:[#allocation10 + $0x8c] sm:$0xf]
    %v1444 = vld [vmem:[#allocation10 + $0x90] sm:$0xf]
    %v1445 = vld [vmem:[#allocation10 + $0x94] sm:$0xf]
    %v1446 = vld [vmem:[#allocation10 + $0x98] sm:$0xf]
    %v1447 = vld [vmem:[#allocation10 + $0x9c] sm:$0xf]
    %v1448 = vld [vmem:[#allocation10 + $0xa0] sm:$0xf]
    %v1449 = vld [vmem:[#allocation10 + $0xa4] sm:$0xf]
    %v1450 = vld [vmem:[#allocation10 + $0xa8] sm:$0xf]
    %v1451 = vld [vmem:[#allocation10 + $0xac] sm:$0xf]
    %v1452 = vld [vmem:[#allocation10 + $0xb0] sm:$0xf]
    %v1453 = vld [vmem:[#allocation10 + $0xb4] sm:$0xf]
    %v1454 = vld [vmem:[#allocation10 + $0xb8] sm:$0xf]
    %v1455 = vld [vmem:[#allocation10 + $0xbc] sm:$0xf]
    %v1456 = vld [vmem:[#allocation10 + $0xc0] sm:$0xf]
    %v1457 = vld [vmem:[#allocation10 + $0xc4] sm:$0xf]
    %v1458 = vld [vmem:[#allocation10 + $0xc8] sm:$0xf]
    %v1459 = vld [vmem:[#allocation10 + $0xcc] sm:$0xf]
    %v1460 = vld [vmem:[#allocation10 + $0xd0] sm:$0xf]
    %v1461 = vld [vmem:[#allocation10 + $0xd4] sm:$0xf]
    %v1462 = vld [vmem:[#allocation10 + $0xd8] sm:$0xf]
    %v1463 = vld [vmem:[#allocation10 + $0xdc] sm:$0xf]
    %v1464 = vld [vmem:[#allocation10 + $0xe0] sm:$0xf]
    %v1465 = vld [vmem:[#allocation10 + $0xe4] sm:$0xf]
    %v1466 = vld [vmem:[#allocation10 + $0xe8] sm:$0xf]
    %v1467 = vld [vmem:[#allocation10 + $0xec] sm:$0xf]
    %v1468 = vld [vmem:[#allocation10 + $0xf0] sm:$0xf]
    %v1469 = vld [vmem:[#allocation10 + $0xf4] sm:$0xf]
    %v1470 = vld [vmem:[#allocation10 + $0xf8] sm:$0xf]
    %v1471 = vld [vmem:[#allocation10 + $0xfc] sm:$0xf]
    %v1472 = vld [vmem:[%s14] sm:$0x1]
    %v1474 = vlaneseq
    %v1475 = vshrl.u32 %v1474, 7
    %v1476 = vsub.s32 0, %v1475
    %v1477 = vrot.slane %v1472, %v1476
    %v1543 = vunpack.c.l.b16 %v1408
    %v1544 = vunpack.c.l.b16 %v1409
    %v1545 = vunpack.c.l.b16 %v1410
    %v1546 = vunpack.c.l.b16 %v1411
    %v1547 = vunpack.c.l.b16 %v1412
    %v1548 = vunpack.c.l.b16 %v1413
    %v1549 = vunpack.c.l.b16 %v1414
    %v1550 = vunpack.c.l.b16 %v1415
    %v1551 = vunpack.c.l.b16 %v1416
    %v1552 = vunpack.c.l.b16 %v1417
    %v1553 = vunpack.c.l.b16 %v1418
    %v1554 = vunpack.c.l.b16 %v1419
    %v1555 = vunpack.c.l.b16 %v1420
    %v1556 = vunpack.c.l.b16 %v1421
    %v1557 = vunpack.c.l.b16 %v1422
    %v1558 = vunpack.c.l.b16 %v1423
    %v1559 = vunpack.c.l.b16 %v1424
    %v1560 = vunpack.c.l.b16 %v1425
    %v1561 = vunpack.c.l.b16 %v1426
    %v1562 = vunpack.c.l.b16 %v1427
    %v1563 = vunpack.c.l.b16 %v1428
    %v1564 = vunpack.c.l.b16 %v1429
    %v1565 = vunpack.c.l.b16 %v1430
    %v1566 = vunpack.c.l.b16 %v1431
    %v1567 = vunpack.c.l.b16 %v1432
    %v1568 = vunpack.c.l.b16 %v1433
    %v1569 = vunpack.c.l.b16 %v1434
    %v1570 = vunpack.c.l.b16 %v1435
    %v1571 = vunpack.c.l.b16 %v1436
    %v1572 = vunpack.c.l.b16 %v1437
    %v1573 = vunpack.c.l.b16 %v1438
    %v1574 = vunpack.c.l.b16 %v1439
    %v1575 = vunpack.c.l.b16 %v1440
    %v1576 = vunpack.c.l.b16 %v1441
    %v1577 = vunpack.c.l.b16 %v1442
    %v1578 = vunpack.c.l.b16 %v1443
    %v1579 = vunpack.c.l.b16 %v1444
    %v1580 = vunpack.c.l.b16 %v1445
    %v1581 = vunpack.c.l.b16 %v1446
    %v1582 = vunpack.c.l.b16 %v1447
    %v1583 = vunpack.c.l.b16 %v1448
    %v1584 = vunpack.c.l.b16 %v1449
    %v1585 = vunpack.c.l.b16 %v1450
    %v1586 = vunpack.c.l.b16 %v1451
    %v1587 = vunpack.c.l.b16 %v1452
    %v1588 = vunpack.c.l.b16 %v1453
    %v1589 = vunpack.c.l.b16 %v1454
    %v1590 = vunpack.c.l.b16 %v1455
    %v1591 = vunpack.c.l.b16 %v1456
    %v1592 = vunpack.c.l.b16 %v1457
    %v1593 = vunpack.c.l.b16 %v1458
    %v1594 = vunpack.c.l.b16 %v1459
    %v1595 = vunpack.c.l.b16 %v1460
    %v1596 = vunpack.c.l.b16 %v1461
    %v1597 = vunpack.c.l.b16 %v1462
    %v1598 = vunpack.c.l.b16 %v1463
    %v1599 = vunpack.c.l.b16 %v1464
    %v1600 = vunpack.c.l.b16 %v1465
    %v1601 = vunpack.c.l.b16 %v1466
    %v1602 = vunpack.c.l.b16 %v1467
    %v1603 = vunpack.c.l.b16 %v1468
    %v1604 = vunpack.c.l.b16 %v1469
    %v1605 = vunpack.c.l.b16 %v1470
    %v1606 = vunpack.c.l.b16 %v1471
    %v1607 = vpack.c.b16 %v1544, %v1543
    %v1608 = vpack.c.b16 %v1546, %v1545
    %v1609 = vpack.c.b16 %v1548, %v1547
    %v1610 = vpack.c.b16 %v1550, %v1549
    %v1611 = vpack.c.b16 %v1552, %v1551
    %v1612 = vpack.c.b16 %v1554, %v1553
    %v1613 = vpack.c.b16 %v1556, %v1555
    %v1614 = vpack.c.b16 %v1558, %v1557
    %v1615 = vpack.c.b16 %v1560, %v1559
    %v1616 = vpack.c.b16 %v1562, %v1561
    %v1617 = vpack.c.b16 %v1564, %v1563
    %v1618 = vpack.c.b16 %v1566, %v1565
    %v1619 = vpack.c.b16 %v1568, %v1567
    %v1620 = vpack.c.b16 %v1570, %v1569
    %v1621 = vpack.c.b16 %v1572, %v1571
    %v1622 = vpack.c.b16 %v1574, %v1573
    %v1623 = vpack.c.b16 %v1576, %v1575
    %v1624 = vpack.c.b16 %v1578, %v1577
    %v1625 = vpack.c.b16 %v1580, %v1579
    %v1626 = vpack.c.b16 %v1582, %v1581
    %v1627 = vpack.c.b16 %v1584, %v1583
    %v1628 = vpack.c.b16 %v1586, %v1585
    %v1629 = vpack.c.b16 %v1588, %v1587
    %v1630 = vpack.c.b16 %v1590, %v1589
    %v1631 = vpack.c.b16 %v1592, %v1591
    %v1632 = vpack.c.b16 %v1594, %v1593
    %v1633 = vpack.c.b16 %v1596, %v1595
    %v1634 = vpack.c.b16 %v1598, %v1597
    %v1635 = vpack.c.b16 %v1600, %v1599
    %v1636 = vpack.c.b16 %v1602, %v1601
    %v1637 = vpack.c.b16 %v1604, %v1603
    %v1638 = vpack.c.b16 %v1606, %v1605
    %1671 = vmatprep.subr.bf16.mxu0 0
    %1672 = vmatpush1.bf16.msra.mxu0 %v1607
    %1673 = vmatprep.subr.bf16.mxu0 0
    %1674 = vmatpush1.bf16.msra.mxu0 %v1608
    %1675 = vmatprep.subr.bf16.mxu0 0
    %1676 = vmatpush1.bf16.msra.mxu0 %v1609
    %1677 = vmatprep.subr.bf16.mxu0 0
    %1678 = vmatpush1.bf16.msra.mxu0 %v1610
    %1679 = vmatprep.subr.bf16.mxu0 0
    %1680 = vmatpush1.bf16.msra.mxu0 %v1611
    %1681 = vmatprep.subr.bf16.mxu0 0
    %1682 = vmatpush1.bf16.msra.mxu0 %v1612
    %1683 = vmatprep.subr.bf16.mxu0 0
    %1684 = vmatpush1.bf16.msra.mxu0 %v1613
    %1685 = vmatprep.subr.bf16.mxu0 0
    %1686 = vmatpush1.bf16.msra.mxu0 %v1614
    %1687 = vmatprep.subr.bf16.mxu0 0
    %1688 = vmatpush1.bf16.msra.mxu0 %v1615
    %1689 = vmatprep.subr.bf16.mxu0 0
    %1690 = vmatpush1.bf16.msra.mxu0 %v1616
    %1691 = vmatprep.subr.bf16.mxu0 0
    %1692 = vmatpush1.bf16.msra.mxu0 %v1617
    %1693 = vmatprep.subr.bf16.mxu0 0
    %1694 = vmatpush1.bf16.msra.mxu0 %v1618
    %1695 = vmatprep.subr.bf16.mxu0 0
    %1696 = vmatpush1.bf16.msra.mxu0 %v1619
    %1697 = vmatprep.subr.bf16.mxu0 0
    %1698 = vmatpush1.bf16.msra.mxu0 %v1620
    %1699 = vmatprep.subr.bf16.mxu0 0
    %1700 = vmatpush1.bf16.msra.mxu0 %v1621
    %1701 = vmatprep.subr.bf16.mxu0 0
    %1702 = vmatpush1.bf16.msra.mxu0 %v1622
    %1703 = vmatprep.mubr.bf16.mxu0 %v1405
    %1704 = vmatmul.mubr.bf16.gmra.mrb[0].mxu0 %v1404
    %v1705 = vpop.f32.mrb[0].mxu0
    %v1706 = vadd.f32 %v1477, %v1705
    %v1707 = vpop.f32.mrb[0].mxu0
    %v1708 = vpop.f32.mrb[0].mxu0
    %v1709 = vpop.f32.mrb[0].mxu0
    %1710 = vdwg.mxu0
    %1711 = vmatprep.subr.bf16.mxu0 0
    %1712 = vmatpush1.bf16.msra.mxu0 %v1623
    %1713 = vmatprep.subr.bf16.mxu0 0
    %1714 = vmatpush1.bf16.msra.mxu0 %v1624
    %1715 = vmatprep.subr.bf16.mxu0 0
    %1716 = vmatpush1.bf16.msra.mxu0 %v1625
    %1717 = vmatprep.subr.bf16.mxu0 0
    %1718 = vmatpush1.bf16.msra.mxu0 %v1626
    %1719 = vmatprep.subr.bf16.mxu0 0
    %1720 = vmatpush1.bf16.msra.mxu0 %v1627
    %1721 = vmatprep.subr.bf16.mxu0 0
    %1722 = vmatpush1.bf16.msra.mxu0 %v1628
    %1723 = vmatprep.subr.bf16.mxu0 0
    %1724 = vmatpush1.bf16.msra.mxu0 %v1629
    %1725 = vmatprep.subr.bf16.mxu0 0
    %1726 = vmatpush1.bf16.msra.mxu0 %v1630
    %1727 = vmatprep.subr.bf16.mxu0 0
    %1728 = vmatpush1.bf16.msra.mxu0 %v1631
    %1729 = vmatprep.subr.bf16.mxu0 0
    %1730 = vmatpush1.bf16.msra.mxu0 %v1632
    %1731 = vmatprep.subr.bf16.mxu0 0
    %1732 = vmatpush1.bf16.msra.mxu0 %v1633
    %1733 = vmatprep.subr.bf16.mxu0 0
    %1734 = vmatpush1.bf16.msra.mxu0 %v1634
    %1735 = vmatprep.subr.bf16.mxu0 0
    %1736 = vmatpush1.bf16.msra.mxu0 %v1635
    %1737 = vmatprep.subr.bf16.mxu0 0
    %1738 = vmatpush1.bf16.msra.mxu0 %v1636
    %1739 = vmatprep.subr.bf16.mxu0 0
    %1740 = vmatpush1.bf16.msra.mxu0 %v1637
    %1741 = vmatprep.subr.bf16.mxu0 0
    %1742 = vmatpush1.bf16.msra.mxu0 %v1638
    %1743 = vmatprep.mubr.bf16.mxu0 %v1407
    %1744 = vmatmul.mubr.bf16.gmra.mrb[0].mxu0 %v1406
    %v1745 = vpop.f32.mrb[0].mxu0
    %v1746 = vadd.f32 %v1706, %v1745
    %v1747 = vpop.f32.mrb[0].mxu0
    %v1748 = vpop.f32.mrb[0].mxu0
    %v1749 = vpop.f32.mrb[0].mxu0
    %1750 = vdwg.mxu0
    %v1751 = vld [vmem:[%s2] sm:$0xf]
    %v1752 = vld [vmem:[#allocation11] sm:$0xff]
    %v1753 = vld [vmem:[#allocation11 + $0x8] sm:$0xff]
    %v1754 = vld [vmem:[#allocation11 + $0x10] sm:$0xff]
    %v1755 = vld [vmem:[#allocation11 + $0x18] sm:$0xff]
    %v1756 = vld [vmem:[#allocation11 + $0x20] sm:$0xff]
    %v1757 = vld [vmem:[#allocation11 + $0x28] sm:$0xff]
    %v1758 = vld [vmem:[#allocation11 + $0x30] sm:$0xff]
    %v1759 = vld [vmem:[#allocation11 + $0x38] sm:$0xff]
    %v1760 = vld [vmem:[#allocation11 + $0x40] sm:$0xff]
    %v1761 = vld [vmem:[#allocation11 + $0x48] sm:$0xff]
    %v1762 = vld [vmem:[#allocation11 + $0x50] sm:$0xff]
    %v1763 = vld [vmem:[#allocation11 + $0x58] sm:$0xff]
    %v1764 = vld [vmem:[#allocation11 + $0x60] sm:$0xff]
    %v1765 = vld [vmem:[#allocation11 + $0x68] sm:$0xff]
    %v1766 = vld [vmem:[#allocation11 + $0x70] sm:$0xff]
    %v1767 = vld [vmem:[#allocation11 + $0x78] sm:$0xff]
    %v1768 = vld [vmem:[%s16] sm:$0x3]
    %v1770 = vlaneseq
    %v1771 = vshrl.u32 %v1770, 7
    %v1772 = vsub.s32 0, %v1771
    %v1773 = vrot.slane %v1768, %v1772
    %v1774 = vlaneseq
    %v1775 = vshrl.u32 %v1774, 7
    %v1776 = vsub.s32 1, %v1775
    %v1777 = vrot.slane %v1768, %v1776
    %v1796 = vunpack.c.l.b16 %v1752
    %v1797 = vunpack.c.h.b16 %v1752
    %v1798 = vunpack.c.l.b16 %v1753
    %v1799 = vunpack.c.h.b16 %v1753
    %v1800 = vunpack.c.l.b16 %v1754
    %v1801 = vunpack.c.h.b16 %v1754
    %v1802 = vunpack.c.l.b16 %v1755
    %v1803 = vunpack.c.h.b16 %v1755
    %v1804 = vunpack.c.l.b16 %v1756
    %v1805 = vunpack.c.h.b16 %v1756
    %v1806 = vunpack.c.l.b16 %v1757
    %v1807 = vunpack.c.h.b16 %v1757
    %v1808 = vunpack.c.l.b16 %v1758
    %v1809 = vunpack.c.h.b16 %v1758
    %v1810 = vunpack.c.l.b16 %v1759
    %v1811 = vunpack.c.h.b16 %v1759
    %v1812 = vunpack.c.l.b16 %v1760
    %v1813 = vunpack.c.h.b16 %v1760
    %v1814 = vunpack.c.l.b16 %v1761
    %v1815 = vunpack.c.h.b16 %v1761
    %v1816 = vunpack.c.l.b16 %v1762
    %v1817 = vunpack.c.h.b16 %v1762
    %v1818 = vunpack.c.l.b16 %v1763
    %v1819 = vunpack.c.h.b16 %v1763
    %v1820 = vunpack.c.l.b16 %v1764
    %v1821 = vunpack.c.h.b16 %v1764
    %v1822 = vunpack.c.l.b16 %v1765
    %v1823 = vunpack.c.h.b16 %v1765
    %v1824 = vunpack.c.l.b16 %v1766
    %v1825 = vunpack.c.h.b16 %v1766
    %v1826 = vunpack.c.l.b16 %v1767
    %v1827 = vunpack.c.h.b16 %v1767
    %v1828 = vpack.c.b16 %v1798, %v1796
    %v1829 = vpack.c.b16 %v1799, %v1797
    %v1830 = vpack.c.b16 %v1802, %v1800
    %v1831 = vpack.c.b16 %v1803, %v1801
    %v1832 = vpack.c.b16 %v1806, %v1804
    %v1833 = vpack.c.b16 %v1807, %v1805
    %v1834 = vpack.c.b16 %v1810, %v1808
    %v1835 = vpack.c.b16 %v1811, %v1809
    %v1836 = vpack.c.b16 %v1814, %v1812
    %v1837 = vpack.c.b16 %v1815, %v1813
    %v1838 = vpack.c.b16 %v1818, %v1816
    %v1839 = vpack.c.b16 %v1819, %v1817
    %v1840 = vpack.c.b16 %v1822, %v1820
    %v1841 = vpack.c.b16 %v1823, %v1821
    %v1842 = vpack.c.b16 %v1826, %v1824
    %v1843 = vpack.c.b16 %v1827, %v1825
    %1860 = vmatprep.subr.bf16.mxu0 %v1829
    %1861 = vmatpush1.bf16.msra.mxu0 %v1828
    %1862 = vmatprep.subr.bf16.mxu0 %v1831
    %1863 = vmatpush1.bf16.msra.mxu0 %v1830
    %1864 = vmatprep.subr.bf16.mxu0 %v1833
    %1865 = vmatpush1.bf16.msra.mxu0 %v1832
    %1866 = vmatprep.subr.bf16.mxu0 %v1835
    %1867 = vmatpush1.bf16.msra.mxu0 %v1834
    %1868 = vmatprep.subr.bf16.mxu0 %v1837
    %1869 = vmatpush1.bf16.msra.mxu0 %v1836
    %1870 = vmatprep.subr.bf16.mxu0 %v1839
    %1871 = vmatpush1.bf16.msra.mxu0 %v1838
    %1872 = vmatprep.subr.bf16.mxu0 %v1841
    %1873 = vmatpush1.bf16.msra.mxu0 %v1840
    %1874 = vmatprep.subr.bf16.mxu0 %v1843
    %1875 = vmatpush1.bf16.msra.mxu0 %v1842
    %1876 = vmatprep.subr.bf16.mxu0 0
    %1877 = vmatpush1.bf16.msra.mxu0 0
    %1878 = vmatprep.subr.bf16.mxu0 0
    %1879 = vmatpush1.bf16.msra.mxu0 0
    %1880 = vmatprep.subr.bf16.mxu0 0
    %1881 = vmatpush1.bf16.msra.mxu0 0
    %1882 = vmatprep.subr.bf16.mxu0 0
    %1883 = vmatpush1.bf16.msra.mxu0 0
    %1884 = vmatprep.subr.bf16.mxu0 0
    %1885 = vmatpush1.bf16.msra.mxu0 0
    %1886 = vmatprep.subr.bf16.mxu0 0
    %1887 = vmatpush1.bf16.msra.mxu0 0
    %1888 = vmatprep.subr.bf16.mxu0 0
    %1889 = vmatpush1.bf16.msra.mxu0 0
    %1890 = vmatprep.subr.bf16.mxu0 0
    %1891 = vmatpush1.bf16.msra.mxu0 0
    %1892 = vmatprep.mubr.bf16.mxu0 0
    %1893 = vmatmul.mubr.bf16.gmra.mrb[0].mxu0 %v1751
    %v1894 = vpop.f32.mrb[0].mxu0
    %v1895 = vadd.f32 %v1773, %v1894
    %v1896 = vpop.f32.mrb[0].mxu0
    %v1897 = vadd.f32 %v1777, %v1896
    %v1898 = vpop.f32.mrb[0].mxu0
    %v1899 = vpop.f32.mrb[0].mxu0
    %1900 = vdwg.mxu0
    %v1901 = vmax.f32 %v1895, 0.0
    %v1902 = vmax.f32 %v1897, 0.0
    %v1903 = vpack.c.bf16 %v1901, %v1901
    %v1904 = vpack.c.bf16 %v1902, %v1902
    %v1905 = vld [vmem:[#allocation13] sm:$0xff]
    %v1906 = vld [vmem:[#allocation13 + $0x8] sm:$0xff]
    %v1907 = vld [vmem:[#allocation13 + $0x10] sm:$0xff]
    %v1908 = vld [vmem:[#allocation13 + $0x18] sm:$0xff]
    %v1909 = vld [vmem:[#allocation13 + $0x20] sm:$0xff]
    %v1910 = vld [vmem:[#allocation13 + $0x28] sm:$0xff]
    %v1911 = vld [vmem:[#allocation13 + $0x30] sm:$0xff]
    %v1912 = vld [vmem:[#allocation13 + $0x38] sm:$0xff]
    %v1913 = vld [vmem:[#allocation13 + $0x40] sm:$0xff]
    %v1914 = vld [vmem:[#allocation13 + $0x48] sm:$0xff]
    %v1915 = vld [vmem:[#allocation13 + $0x50] sm:$0xff]
    %v1916 = vld [vmem:[#allocation13 + $0x58] sm:$0xff]
    %v1917 = vld [vmem:[#allocation13 + $0x60] sm:$0xff]
    %v1918 = vld [vmem:[#allocation13 + $0x68] sm:$0xff]
    %v1919 = vld [vmem:[#allocation13 + $0x70] sm:$0xff]
    %v1920 = vld [vmem:[#allocation13 + $0x78] sm:$0xff]
    %v1921 = vld [vmem:[#allocation13 + $0x80] sm:$0xff]
    %v1922 = vld [vmem:[#allocation13 + $0x88] sm:$0xff]
    %v1923 = vld [vmem:[#allocation13 + $0x90] sm:$0xff]
    %v1924 = vld [vmem:[#allocation13 + $0x98] sm:$0xff]
    %v1925 = vld [vmem:[#allocation13 + $0xa0] sm:$0xff]
    %v1926 = vld [vmem:[#allocation13 + $0xa8] sm:$0xff]
    %v1927 = vld [vmem:[#allocation13 + $0xb0] sm:$0xff]
    %v1928 = vld [vmem:[#allocation13 + $0xb8] sm:$0xff]
    %v1929 = vld [vmem:[#allocation13 + $0xc0] sm:$0xff]
    %v1930 = vld [vmem:[#allocation13 + $0xc8] sm:$0xff]
    %v1931 = vld [vmem:[#allocation13 + $0xd0] sm:$0xff]
    %v1932 = vld [vmem:[#allocation13 + $0xd8] sm:$0xff]
    %v1933 = vld [vmem:[#allocation13 + $0xe0] sm:$0xff]
    %v1934 = vld [vmem:[#allocation13 + $0xe8] sm:$0xff]
    %v1935 = vld [vmem:[#allocation13 + $0xf0] sm:$0xff]
    %v1936 = vld [vmem:[#allocation13 + $0xf8] sm:$0xff]
    %v1937 = vld [vmem:[#allocation13 + $0x100] sm:$0xff]
    %v1938 = vld [vmem:[#allocation13 + $0x108] sm:$0xff]
    %v1939 = vld [vmem:[#allocation13 + $0x110] sm:$0xff]
    %v1940 = vld [vmem:[#allocation13 + $0x118] sm:$0xff]
    %v1941 = vld [vmem:[#allocation13 + $0x120] sm:$0xff]
    %v1942 = vld [vmem:[#allocation13 + $0x128] sm:$0xff]
    %v1943 = vld [vmem:[#allocation13 + $0x130] sm:$0xff]
    %v1944 = vld [vmem:[#allocation13 + $0x138] sm:$0xff]
    %v1945 = vld [vmem:[#allocation13 + $0x140] sm:$0xff]
    %v1946 = vld [vmem:[#allocation13 + $0x148] sm:$0xff]
    %v1947 = vld [vmem:[#allocation13 + $0x150] sm:$0xff]
    %v1948 = vld [vmem:[#allocation13 + $0x158] sm:$0xff]
    %v1949 = vld [vmem:[#allocation13 + $0x160] sm:$0xff]
    %v1950 = vld [vmem:[#allocation13 + $0x168] sm:$0xff]
    %v1951 = vld [vmem:[#allocation13 + $0x170] sm:$0xff]
    %v1952 = vld [vmem:[#allocation13 + $0x178] sm:$0xff]
    %v1953 = vld [vmem:[#allocation13 + $0x180] sm:$0xff]
    %v1954 = vld [vmem:[#allocation13 + $0x188] sm:$0xff]
    %v1955 = vld [vmem:[#allocation13 + $0x190] sm:$0xff]
    %v1956 = vld [vmem:[#allocation13 + $0x198] sm:$0xff]
    %v1957 = vld [vmem:[#allocation13 + $0x1a0] sm:$0xff]
    %v1958 = vld [vmem:[#allocation13 + $0x1a8] sm:$0xff]
    %v1959 = vld [vmem:[#allocation13 + $0x1b0] sm:$0xff]
    %v1960 = vld [vmem:[#allocation13 + $0x1b8] sm:$0xff]
    %v1961 = vld [vmem:[#allocation13 + $0x1c0] sm:$0xff]
    %v1962 = vld [vmem:[#allocation13 + $0x1c8] sm:$0xff]
    %v1963 = vld [vmem:[#allocation13 + $0x1d0] sm:$0xff]
    %v1964 = vld [vmem:[#allocation13 + $0x1d8] sm:$0xff]
    %v1965 = vld [vmem:[#allocation13 + $0x1e0] sm:$0xff]
    %v1966 = vld [vmem:[#allocation13 + $0x1e8] sm:$0xff]
    %v1967 = vld [vmem:[#allocation13 + $0x1f0] sm:$0xff]
    %v1968 = vld [vmem:[#allocation13 + $0x1f8] sm:$0xff]
    %v1969 = vld [vmem:[%s18] sm:$0xf]
    %v1971 = vlaneseq
    %v1972 = vshrl.u32 %v1971, 7
    %v1973 = vsub.s32 0, %v1972
    %v1974 = vrot.slane %v1969, %v1973
    %v1975 = vlaneseq
    %v1976 = vshrl.u32 %v1975, 7
    %v1977 = vsub.s32 1, %v1976
    %v1978 = vrot.slane %v1969, %v1977
    %v1979 = vlaneseq
    %v1980 = vshrl.u32 %v1979, 7
    %v1981 = vsub.s32 2, %v1980
    %v1982 = vrot.slane %v1969, %v1981
    %v1983 = vlaneseq
    %v1984 = vshrl.u32 %v1983, 7
    %v1985 = vsub.s32 3, %v1984
    %v1986 = vrot.slane %v1969, %v1985
    %v2055 = vunpack.c.l.b16 %v1905
    %v2056 = vunpack.c.h.b16 %v1905
    %v2057 = vunpack.c.l.b16 %v1906
    %v2058 = vunpack.c.h.b16 %v1906
    %v2059 = vunpack.c.l.b16 %v1907
    %v2060 = vunpack.c.h.b16 %v1907
    %v2061 = vunpack.c.l.b16 %v1908
    %v2062 = vunpack.c.h.b16 %v1908
    %v2063 = vunpack.c.l.b16 %v1909
    %v2064 = vunpack.c.h.b16 %v1909
    %v2065 = vunpack.c.l.b16 %v1910
    %v2066 = vunpack.c.h.b16 %v1910
    %v2067 = vunpack.c.l.b16 %v1911
    %v2068 = vunpack.c.h.b16 %v1911
    %v2069 = vunpack.c.l.b16 %v1912
    %v2070 = vunpack.c.h.b16 %v1912
    %v2071 = vunpack.c.l.b16 %v1913
    %v2072 = vunpack.c.h.b16 %v1913
    %v2073 = vunpack.c.l.b16 %v1914
    %v2074 = vunpack.c.h.b16 %v1914
    %v2075 = vunpack.c.l.b16 %v1915
    %v2076 = vunpack.c.h.b16 %v1915
    %v2077 = vunpack.c.l.b16 %v1916
    %v2078 = vunpack.c.h.b16 %v1916
    %v2079 = vunpack.c.l.b16 %v1917
    %v2080 = vunpack.c.h.b16 %v1917
    %v2081 = vunpack.c.l.b16 %v1918
    %v2082 = vunpack.c.h.b16 %v1918
    %v2083 = vunpack.c.l.b16 %v1919
    %v2084 = vunpack.c.h.b16 %v1919
    %v2085 = vunpack.c.l.b16 %v1920
    %v2086 = vunpack.c.h.b16 %v1920
    %v2087 = vunpack.c.l.b16 %v1921
    %v2088 = vunpack.c.h.b16 %v1921
    %v2089 = vunpack.c.l.b16 %v1922
    %v2090 = vunpack.c.h.b16 %v1922
    %v2091 = vunpack.c.l.b16 %v1923
    %v2092 = vunpack.c.h.b16 %v1923
    %v2093 = vunpack.c.l.b16 %v1924
    %v2094 = vunpack.c.h.b16 %v1924
    %v2095 = vunpack.c.l.b16 %v1925
    %v2096 = vunpack.c.h.b16 %v1925
    %v2097 = vunpack.c.l.b16 %v1926
    %v2098 = vunpack.c.h.b16 %v1926
    %v2099 = vunpack.c.l.b16 %v1927
    %v2100 = vunpack.c.h.b16 %v1927
    %v2101 = vunpack.c.l.b16 %v1928
    %v2102 = vunpack.c.h.b16 %v1928
    %v2103 = vunpack.c.l.b16 %v1929
    %v2104 = vunpack.c.h.b16 %v1929
    %v2105 = vunpack.c.l.b16 %v1930
    %v2106 = vunpack.c.h.b16 %v1930
    %v2107 = vunpack.c.l.b16 %v1931
    %v2108 = vunpack.c.h.b16 %v1931
    %v2109 = vunpack.c.l.b16 %v1932
    %v2110 = vunpack.c.h.b16 %v1932
    %v2111 = vunpack.c.l.b16 %v1933
    %v2112 = vunpack.c.h.b16 %v1933
    %v2113 = vunpack.c.l.b16 %v1934
    %v2114 = vunpack.c.h.b16 %v1934
    %v2115 = vunpack.c.l.b16 %v1935
    %v2116 = vunpack.c.h.b16 %v1935
    %v2117 = vunpack.c.l.b16 %v1936
    %v2118 = vunpack.c.h.b16 %v1936
    %v2119 = vunpack.c.l.b16 %v1937
    %v2120 = vunpack.c.h.b16 %v1937
    %v2121 = vunpack.c.l.b16 %v1938
    %v2122 = vunpack.c.h.b16 %v1938
    %v2123 = vunpack.c.l.b16 %v1939
    %v2124 = vunpack.c.h.b16 %v1939
    %v2125 = vunpack.c.l.b16 %v1940
    %v2126 = vunpack.c.h.b16 %v1940
    %v2127 = vunpack.c.l.b16 %v1941
    %v2128 = vunpack.c.h.b16 %v1941
    %v2129 = vunpack.c.l.b16 %v1942
    %v2130 = vunpack.c.h.b16 %v1942
    %v2131 = vunpack.c.l.b16 %v1943
    %v2132 = vunpack.c.h.b16 %v1943
    %v2133 = vunpack.c.l.b16 %v1944
    %v2134 = vunpack.c.h.b16 %v1944
    %v2135 = vunpack.c.l.b16 %v1945
    %v2136 = vunpack.c.h.b16 %v1945
    %v2137 = vunpack.c.l.b16 %v1946
    %v2138 = vunpack.c.h.b16 %v1946
    %v2139 = vunpack.c.l.b16 %v1947
    %v2140 = vunpack.c.h.b16 %v1947
    %v2141 = vunpack.c.l.b16 %v1948
    %v2142 = vunpack.c.h.b16 %v1948
    %v2143 = vunpack.c.l.b16 %v1949
    %v2144 = vunpack.c.h.b16 %v1949
    %v2145 = vunpack.c.l.b16 %v1950
    %v2146 = vunpack.c.h.b16 %v1950
    %v2147 = vunpack.c.l.b16 %v1951
    %v2148 = vunpack.c.h.b16 %v1951
    %v2149 = vunpack.c.l.b16 %v1952
    %v2150 = vunpack.c.h.b16 %v1952
    %v2151 = vunpack.c.l.b16 %v1953
    %v2152 = vunpack.c.h.b16 %v1953
    %v2153 = vunpack.c.l.b16 %v1954
    %v2154 = vunpack.c.h.b16 %v1954
    %v2155 = vunpack.c.l.b16 %v1955
    %v2156 = vunpack.c.h.b16 %v1955
    %v2157 = vunpack.c.l.b16 %v1956
    %v2158 = vunpack.c.h.b16 %v1956
    %v2159 = vunpack.c.l.b16 %v1957
    %v2160 = vunpack.c.h.b16 %v1957
    %v2161 = vunpack.c.l.b16 %v1958
    %v2162 = vunpack.c.h.b16 %v1958
    %v2163 = vunpack.c.l.b16 %v1959
    %v2164 = vunpack.c.h.b16 %v1959
    %v2165 = vunpack.c.l.b16 %v1960
    %v2166 = vunpack.c.h.b16 %v1960
    %v2167 = vunpack.c.l.b16 %v1961
    %v2168 = vunpack.c.h.b16 %v1961
    %v2169 = vunpack.c.l.b16 %v1962
    %v2170 = vunpack.c.h.b16 %v1962
    %v2171 = vunpack.c.l.b16 %v1963
    %v2172 = vunpack.c.h.b16 %v1963
    %v2173 = vunpack.c.l.b16 %v1964
    %v2174 = vunpack.c.h.b16 %v1964
    %v2175 = vunpack.c.l.b16 %v1965
    %v2176 = vunpack.c.h.b16 %v1965
    %v2177 = vunpack.c.l.b16 %v1966
    %v2178 = vunpack.c.h.b16 %v1966
    %v2179 = vunpack.c.l.b16 %v1967
    %v2180 = vunpack.c.h.b16 %v1967
    %v2181 = vunpack.c.l.b16 %v1968
    %v2182 = vunpack.c.h.b16 %v1968
    %v2183 = vpack.c.b16 %v2059, %v2055
    %v2184 = vpack.c.b16 %v2060, %v2056
    %v2185 = vpack.c.b16 %v2061, %v2057
    %v2186 = vpack.c.b16 %v2062, %v2058
    %v2187 = vpack.c.b16 %v2067, %v2063
    %v2188 = vpack.c.b16 %v2068, %v2064
    %v2189 = vpack.c.b16 %v2069, %v2065
    %v2190 = vpack.c.b16 %v2070, %v2066
    %v2191 = vpack.c.b16 %v2075, %v2071
    %v2192 = vpack.c.b16 %v2076, %v2072
    %v2193 = vpack.c.b16 %v2077, %v2073
    %v2194 = vpack.c.b16 %v2078, %v2074
    %v2195 = vpack.c.b16 %v2083, %v2079
    %v2196 = vpack.c.b16 %v2084, %v2080
    %v2197 = vpack.c.b16 %v2085, %v2081
    %v2198 = vpack.c.b16 %v2086, %v2082
    %v2199 = vpack.c.b16 %v2091, %v2087
    %v2200 = vpack.c.b16 %v2092, %v2088
    %v2201 = vpack.c.b16 %v2093, %v2089
    %v2202 = vpack.c.b16 %v2094, %v2090
    %v2203 = vpack.c.b16 %v2099, %v2095
    %v2204 = vpack.c.b16 %v2100, %v2096
    %v2205 = vpack.c.b16 %v2101, %v2097
    %v2206 = vpack.c.b16 %v2102, %v2098
    %v2207 = vpack.c.b16 %v2107, %v2103
    %v2208 = vpack.c.b16 %v2108, %v2104
    %v2209 = vpack.c.b16 %v2109, %v2105
    %v2210 = vpack.c.b16 %v2110, %v2106
    %v2211 = vpack.c.b16 %v2115, %v2111
    %v2212 = vpack.c.b16 %v2116, %v2112
    %v2213 = vpack.c.b16 %v2117, %v2113
    %v2214 = vpack.c.b16 %v2118, %v2114
    %v2215 = vpack.c.b16 %v2123, %v2119
    %v2216 = vpack.c.b16 %v2124, %v2120
    %v2217 = vpack.c.b16 %v2125, %v2121
    %v2218 = vpack.c.b16 %v2126, %v2122
    %v2219 = vpack.c.b16 %v2131, %v2127
    %v2220 = vpack.c.b16 %v2132, %v2128
    %v2221 = vpack.c.b16 %v2133, %v2129
    %v2222 = vpack.c.b16 %v2134, %v2130
    %v2223 = vpack.c.b16 %v2139, %v2135
    %v2224 = vpack.c.b16 %v2140, %v2136
    %v2225 = vpack.c.b16 %v2141, %v2137
    %v2226 = vpack.c.b16 %v2142, %v2138
    %v2227 = vpack.c.b16 %v2147, %v2143
    %v2228 = vpack.c.b16 %v2148, %v2144
    %v2229 = vpack.c.b16 %v2149, %v2145
    %v2230 = vpack.c.b16 %v2150, %v2146
    %v2231 = vpack.c.b16 %v2155, %v2151
    %v2232 = vpack.c.b16 %v2156, %v2152
    %v2233 = vpack.c.b16 %v2157, %v2153
    %v2234 = vpack.c.b16 %v2158, %v2154
    %v2235 = vpack.c.b16 %v2163, %v2159
    %v2236 = vpack.c.b16 %v2164, %v2160
    %v2237 = vpack.c.b16 %v2165, %v2161
    %v2238 = vpack.c.b16 %v2166, %v2162
    %v2239 = vpack.c.b16 %v2171, %v2167
    %v2240 = vpack.c.b16 %v2172, %v2168
    %v2241 = vpack.c.b16 %v2173, %v2169
    %v2242 = vpack.c.b16 %v2174, %v2170
    %v2243 = vpack.c.b16 %v2179, %v2175
    %v2244 = vpack.c.b16 %v2180, %v2176
    %v2245 = vpack.c.b16 %v2181, %v2177
    %v2246 = vpack.c.b16 %v2182, %v2178
    %2311 = vmatprep.subr.bf16.mxu0 %v2184
    %2312 = vmatpush1.bf16.msra.mxu0 %v2183
    %2313 = vmatprep.subr.bf16.mxu0 %v2188
    %2314 = vmatpush1.bf16.msra.mxu0 %v2187
    %2315 = vmatprep.subr.bf16.mxu0 %v2192
    %2316 = vmatpush1.bf16.msra.mxu0 %v2191
    %2317 = vmatprep.subr.bf16.mxu0 %v2196
    %2318 = vmatpush1.bf16.msra.mxu0 %v2195
    %2319 = vmatprep.subr.bf16.mxu0 %v2200
    %2320 = vmatpush1.bf16.msra.mxu0 %v2199
    %2321 = vmatprep.subr.bf16.mxu0 %v2204
    %2322 = vmatpush1.bf16.msra.mxu0 %v2203
    %2323 = vmatprep.subr.bf16.mxu0 %v2208
    %2324 = vmatpush1.bf16.msra.mxu0 %v2207
    %2325 = vmatprep.subr.bf16.mxu0 %v2212
    %2326 = vmatpush1.bf16.msra.mxu0 %v2211
    %2327 = vmatprep.subr.bf16.mxu0 %v2216
    %2328 = vmatpush1.bf16.msra.mxu0 %v2215
    %2329 = vmatprep.subr.bf16.mxu0 %v2220
    %2330 = vmatpush1.bf16.msra.mxu0 %v2219
    %2331 = vmatprep.subr.bf16.mxu0 %v2224
    %2332 = vmatpush1.bf16.msra.mxu0 %v2223
    %2333 = vmatprep.subr.bf16.mxu0 %v2228
    %2334 = vmatpush1.bf16.msra.mxu0 %v2227
    %2335 = vmatprep.subr.bf16.mxu0 %v2232
    %2336 = vmatpush1.bf16.msra.mxu0 %v2231
    %2337 = vmatprep.subr.bf16.mxu0 %v2236
    %2338 = vmatpush1.bf16.msra.mxu0 %v2235
    %2339 = vmatprep.subr.bf16.mxu0 %v2240
    %2340 = vmatpush1.bf16.msra.mxu0 %v2239
    %2341 = vmatprep.subr.bf16.mxu0 %v2244
    %2342 = vmatpush1.bf16.msra.mxu0 %v2243
    %2343 = vmatprep.mubr.bf16.mxu0 %v1904
    %2344 = vmatmul.mubr.bf16.gmra.mrb[0].mxu0 %v1903
    %v2345 = vpop.f32.mrb[0].mxu0
    %v2346 = vadd.f32 %v1974, %v2345
    %v2347 = vpop.f32.mrb[0].mxu0
    %v2348 = vadd.f32 %v1978, %v2347
    %v2349 = vpop.f32.mrb[0].mxu0
    %v2350 = vpop.f32.mrb[0].mxu0
    %2351 = vdwg.mxu0
    %2352 = vmatprep.subr.bf16.mxu0 %v2186
    %2353 = vmatpush1.bf16.msra.mxu0 %v2185
    %2354 = vmatprep.subr.bf16.mxu0 %v2190
    %2355 = vmatpush1.bf16.msra.mxu0 %v2189
    %2356 = vmatprep.subr.bf16.mxu0 %v2194
    %2357 = vmatpush1.bf16.msra.mxu0 %v2193
    %2358 = vmatprep.subr.bf16.mxu0 %v2198
    %2359 = vmatpush1.bf16.msra.mxu0 %v2197
    %2360 = vmatprep.subr.bf16.mxu0 %v2202
    %2361 = vmatpush1.bf16.msra.mxu0 %v2201
    %2362 = vmatprep.subr.bf16.mxu0 %v2206
    %2363 = vmatpush1.bf16.msra.mxu0 %v2205
    %2364 = vmatprep.subr.bf16.mxu0 %v2210
    %2365 = vmatpush1.bf16.msra.mxu0 %v2209
    %2366 = vmatprep.subr.bf16.mxu0 %v2214
    %2367 = vmatpush1.bf16.msra.mxu0 %v2213
    %2368 = vmatprep.subr.bf16.mxu0 %v2218
    %2369 = vmatpush1.bf16.msra.mxu0 %v2217
    %2370 = vmatprep.subr.bf16.mxu0 %v2222
    %2371 = vmatpush1.bf16.msra.mxu0 %v2221
    %2372 = vmatprep.subr.bf16.mxu0 %v2226
    %2373 = vmatpush1.bf16.msra.mxu0 %v2225
    %2374 = vmatprep.subr.bf16.mxu0 %v2230
    %2375 = vmatpush1.bf16.msra.mxu0 %v2229
    %2376 = vmatprep.subr.bf16.mxu0 %v2234
    %2377 = vmatpush1.bf16.msra.mxu0 %v2233
    %2378 = vmatprep.subr.bf16.mxu0 %v2238
    %2379 = vmatpush1.bf16.msra.mxu0 %v2237
    %2380 = vmatprep.subr.bf16.mxu0 %v2242
    %2381 = vmatpush1.bf16.msra.mxu0 %v2241
    %2382 = vmatprep.subr.bf16.mxu0 %v2246
    %2383 = vmatpush1.bf16.msra.mxu0 %v2245
    %2384 = vmatprep.mubr.bf16.mxu0 %v1904
    %2385 = vmatmul.mubr.bf16.gmra.mrb[0].mxu0 %v1903
    %v2386 = vpop.f32.mrb[0].mxu0
    %v2387 = vadd.f32 %v1982, %v2386
    %v2388 = vpop.f32.mrb[0].mxu0
    %v2389 = vadd.f32 %v1986, %v2388
    %v2390 = vpop.f32.mrb[0].mxu0
    %v2391 = vpop.f32.mrb[0].mxu0
    %2392 = vdwg.mxu0
    %v2393 = vmax.f32 %v2346, 0.0
    %v2394 = vmax.f32 %v2348, 0.0
    %v2395 = vmax.f32 %v2387, 0.0
    %v2396 = vmax.f32 %v2389, 0.0
    %v2397 = vpack.c.bf16 %v2393, %v2393
    %v2398 = vpack.c.bf16 %v2394, %v2394
    %v2399 = vpack.c.bf16 %v2395, %v2395
    %v2400 = vpack.c.bf16 %v2396, %v2396
    %v2401 = vld [vmem:[#allocation14] sm:$0xf]
    %v2402 = vld [vmem:[#allocation14 + $0x4] sm:$0xf]
    %v2403 = vld [vmem:[#allocation14 + $0x8] sm:$0xf]
    %v2404 = vld [vmem:[#allocation14 + $0xc] sm:$0xf]
    %v2405 = vld [vmem:[#allocation14 + $0x10] sm:$0xf]
    %v2406 = vld [vmem:[#allocation14 + $0x14] sm:$0xf]
    %v2407 = vld [vmem:[#allocation14 + $0x18] sm:$0xf]
    %v2408 = vld [vmem:[#allocation14 + $0x1c] sm:$0xf]
    %v2409 = vld [vmem:[#allocation14 + $0x20] sm:$0xf]
    %v2410 = vld [vmem:[#allocation14 + $0x24] sm:$0xf]
    %v2411 = vld [vmem:[#allocation14 + $0x28] sm:$0xf]
    %v2412 = vld [vmem:[#allocation14 + $0x2c] sm:$0xf]
    %v2413 = vld [vmem:[#allocation14 + $0x30] sm:$0xf]
    %v2414 = vld [vmem:[#allocation14 + $0x34] sm:$0xf]
    %v2415 = vld [vmem:[#allocation14 + $0x38] sm:$0xf]
    %v2416 = vld [vmem:[#allocation14 + $0x3c] sm:$0xf]
    %v2417 = vld [vmem:[#allocation14 + $0x40] sm:$0xf]
    %v2418 = vld [vmem:[#allocation14 + $0x44] sm:$0xf]
    %v2419 = vld [vmem:[#allocation14 + $0x48] sm:$0xf]
    %v2420 = vld [vmem:[#allocation14 + $0x4c] sm:$0xf]
    %v2421 = vld [vmem:[#allocation14 + $0x50] sm:$0xf]
    %v2422 = vld [vmem:[#allocation14 + $0x54] sm:$0xf]
    %v2423 = vld [vmem:[#allocation14 + $0x58] sm:$0xf]
    %v2424 = vld [vmem:[#allocation14 + $0x5c] sm:$0xf]
    %v2425 = vld [vmem:[#allocation14 + $0x60] sm:$0xf]
    %v2426 = vld [vmem:[#allocation14 + $0x64] sm:$0xf]
    %v2427 = vld [vmem:[#allocation14 + $0x68] sm:$0xf]
    %v2428 = vld [vmem:[#allocation14 + $0x6c] sm:$0xf]
    %v2429 = vld [vmem:[#allocation14 + $0x70] sm:$0xf]
    %v2430 = vld [vmem:[#allocation14 + $0x74] sm:$0xf]
    %v2431 = vld [vmem:[#allocation14 + $0x78] sm:$0xf]
    %v2432 = vld [vmem:[#allocation14 + $0x7c] sm:$0xf]
    %v2433 = vld [vmem:[#allocation14 + $0x80] sm:$0xf]
    %v2434 = vld [vmem:[#allocation14 + $0x84] sm:$0xf]
    %v2435 = vld [vmem:[#allocation14 + $0x88] sm:$0xf]
    %v2436 = vld [vmem:[#allocation14 + $0x8c] sm:$0xf]
    %v2437 = vld [vmem:[#allocation14 + $0x90] sm:$0xf]
    %v2438 = vld [vmem:[#allocation14 + $0x94] sm:$0xf]
    %v2439 = vld [vmem:[#allocation14 + $0x98] sm:$0xf]
    %v2440 = vld [vmem:[#allocation14 + $0x9c] sm:$0xf]
    %v2441 = vld [vmem:[#allocation14 + $0xa0] sm:$0xf]
    %v2442 = vld [vmem:[#allocation14 + $0xa4] sm:$0xf]
    %v2443 = vld [vmem:[#allocation14 + $0xa8] sm:$0xf]
    %v2444 = vld [vmem:[#allocation14 + $0xac] sm:$0xf]
    %v2445 = vld [vmem:[#allocation14 + $0xb0] sm:$0xf]
    %v2446 = vld [vmem:[#allocation14 + $0xb4] sm:$0xf]
    %v2447 = vld [vmem:[#allocation14 + $0xb8] sm:$0xf]
    %v2448 = vld [vmem:[#allocation14 + $0xbc] sm:$0xf]
    %v2449 = vld [vmem:[#allocation14 + $0xc0] sm:$0xf]
    %v2450 = vld [vmem:[#allocation14 + $0xc4] sm:$0xf]
    %v2451 = vld [vmem:[#allocation14 + $0xc8] sm:$0xf]
    %v2452 = vld [vmem:[#allocation14 + $0xcc] sm:$0xf]
    %v2453 = vld [vmem:[#allocation14 + $0xd0] sm:$0xf]
    %v2454 = vld [vmem:[#allocation14 + $0xd4] sm:$0xf]
    %v2455 = vld [vmem:[#allocation14 + $0xd8] sm:$0xf]
    %v2456 = vld [vmem:[#allocation14 + $0xdc] sm:$0xf]
    %v2457 = vld [vmem:[#allocation14 + $0xe0] sm:$0xf]
    %v2458 = vld [vmem:[#allocation14 + $0xe4] sm:$0xf]
    %v2459 = vld [vmem:[#allocation14 + $0xe8] sm:$0xf]
    %v2460 = vld [vmem:[#allocation14 + $0xec] sm:$0xf]
    %v2461 = vld [vmem:[#allocation14 + $0xf0] sm:$0xf]
    %v2462 = vld [vmem:[#allocation14 + $0xf4] sm:$0xf]
    %v2463 = vld [vmem:[#allocation14 + $0xf8] sm:$0xf]
    %v2464 = vld [vmem:[#allocation14 + $0xfc] sm:$0xf]
    %v2465 = vld [vmem:[%s20] sm:$0x1]
    %v2467 = vlaneseq
    %v2468 = vshrl.u32 %v2467, 7
    %v2469 = vsub.s32 0, %v2468
    %v2470 = vrot.slane %v2465, %v2469
    %v2536 = vunpack.c.l.b16 %v2401
    %v2537 = vunpack.c.l.b16 %v2402
    %v2538 = vunpack.c.l.b16 %v2403
    %v2539 = vunpack.c.l.b16 %v2404
    %v2540 = vunpack.c.l.b16 %v2405
    %v2541 = vunpack.c.l.b16 %v2406
    %v2542 = vunpack.c.l.b16 %v2407
    %v2543 = vunpack.c.l.b16 %v2408
    %v2544 = vunpack.c.l.b16 %v2409
    %v2545 = vunpack.c.l.b16 %v2410
    %v2546 = vunpack.c.l.b16 %v2411
    %v2547 = vunpack.c.l.b16 %v2412
    %v2548 = vunpack.c.l.b16 %v2413
    %v2549 = vunpack.c.l.b16 %v2414
    %v2550 = vunpack.c.l.b16 %v2415
    %v2551 = vunpack.c.l.b16 %v2416
    %v2552 = vunpack.c.l.b16 %v2417
    %v2553 = vunpack.c.l.b16 %v2418
    %v2554 = vunpack.c.l.b16 %v2419
    %v2555 = vunpack.c.l.b16 %v2420
    %v2556 = vunpack.c.l.b16 %v2421
    %v2557 = vunpack.c.l.b16 %v2422
    %v2558 = vunpack.c.l.b16 %v2423
    %v2559 = vunpack.c.l.b16 %v2424
    %v2560 = vunpack.c.l.b16 %v2425
    %v2561 = vunpack.c.l.b16 %v2426
    %v2562 = vunpack.c.l.b16 %v2427
    %v2563 = vunpack.c.l.b16 %v2428
    %v2564 = vunpack.c.l.b16 %v2429
    %v2565 = vunpack.c.l.b16 %v2430
    %v2566 = vunpack.c.l.b16 %v2431
    %v2567 = vunpack.c.l.b16 %v2432
    %v2568 = vunpack.c.l.b16 %v2433
    %v2569 = vunpack.c.l.b16 %v2434
    %v2570 = vunpack.c.l.b16 %v2435
    %v2571 = vunpack.c.l.b16 %v2436
    %v2572 = vunpack.c.l.b16 %v2437
    %v2573 = vunpack.c.l.b16 %v2438
    %v2574 = vunpack.c.l.b16 %v2439
    %v2575 = vunpack.c.l.b16 %v2440
    %v2576 = vunpack.c.l.b16 %v2441
    %v2577 = vunpack.c.l.b16 %v2442
    %v2578 = vunpack.c.l.b16 %v2443
    %v2579 = vunpack.c.l.b16 %v2444
    %v2580 = vunpack.c.l.b16 %v2445
    %v2581 = vunpack.c.l.b16 %v2446
    %v2582 = vunpack.c.l.b16 %v2447
    %v2583 = vunpack.c.l.b16 %v2448
    %v2584 = vunpack.c.l.b16 %v2449
    %v2585 = vunpack.c.l.b16 %v2450
    %v2586 = vunpack.c.l.b16 %v2451
    %v2587 = vunpack.c.l.b16 %v2452
    %v2588 = vunpack.c.l.b16 %v2453
    %v2589 = vunpack.c.l.b16 %v2454
    %v2590 = vunpack.c.l.b16 %v2455
    %v2591 = vunpack.c.l.b16 %v2456
    %v2592 = vunpack.c.l.b16 %v2457
    %v2593 = vunpack.c.l.b16 %v2458
    %v2594 = vunpack.c.l.b16 %v2459
    %v2595 = vunpack.c.l.b16 %v2460
    %v2596 = vunpack.c.l.b16 %v2461
    %v2597 = vunpack.c.l.b16 %v2462
    %v2598 = vunpack.c.l.b16 %v2463
    %v2599 = vunpack.c.l.b16 %v2464
    %v2600 = vpack.c.b16 %v2537, %v2536
    %v2601 = vpack.c.b16 %v2539, %v2538
    %v2602 = vpack.c.b16 %v2541, %v2540
    %v2603 = vpack.c.b16 %v2543, %v2542
    %v2604 = vpack.c.b16 %v2545, %v2544
    %v2605 = vpack.c.b16 %v2547, %v2546
    %v2606 = vpack.c.b16 %v2549, %v2548
    %v2607 = vpack.c.b16 %v2551, %v2550
    %v2608 = vpack.c.b16 %v2553, %v2552
    %v2609 = vpack.c.b16 %v2555, %v2554
    %v2610 = vpack.c.b16 %v2557, %v2556
    %v2611 = vpack.c.b16 %v2559, %v2558
    %v2612 = vpack.c.b16 %v2561, %v2560
    %v2613 = vpack.c.b16 %v2563, %v2562
    %v2614 = vpack.c.b16 %v2565, %v2564
    %v2615 = vpack.c.b16 %v2567, %v2566
    %v2616 = vpack.c.b16 %v2569, %v2568
    %v2617 = vpack.c.b16 %v2571, %v2570
    %v2618 = vpack.c.b16 %v2573, %v2572
    %v2619 = vpack.c.b16 %v2575, %v2574
    %v2620 = vpack.c.b16 %v2577, %v2576
    %v2621 = vpack.c.b16 %v2579, %v2578
    %v2622 = vpack.c.b16 %v2581, %v2580
    %v2623 = vpack.c.b16 %v2583, %v2582
    %v2624 = vpack.c.b16 %v2585, %v2584
    %v2625 = vpack.c.b16 %v2587, %v2586
    %v2626 = vpack.c.b16 %v2589, %v2588
    %v2627 = vpack.c.b16 %v2591, %v2590
    %v2628 = vpack.c.b16 %v2593, %v2592
    %v2629 = vpack.c.b16 %v2595, %v2594
    %v2630 = vpack.c.b16 %v2597, %v2596
    %v2631 = vpack.c.b16 %v2599, %v2598
    %2664 = vmatprep.subr.bf16.mxu0 0
    %2665 = vmatpush1.bf16.msra.mxu0 %v2600
    %2666 = vmatprep.subr.bf16.mxu0 0
    %2667 = vmatpush1.bf16.msra.mxu0 %v2601
    %2668 = vmatprep.subr.bf16.mxu0 0
    %2669 = vmatpush1.bf16.msra.mxu0 %v2602
    %2670 = vmatprep.subr.bf16.mxu0 0
    %2671 = vmatpush1.bf16.msra.mxu0 %v2603
    %2672 = vmatprep.subr.bf16.mxu0 0
    %2673 = vmatpush1.bf16.msra.mxu0 %v2604
    %2674 = vmatprep.subr.bf16.mxu0 0
    %2675 = vmatpush1.bf16.msra.mxu0 %v2605
    %2676 = vmatprep.subr.bf16.mxu0 0
    %2677 = vmatpush1.bf16.msra.mxu0 %v2606
    %2678 = vmatprep.subr.bf16.mxu0 0
    %2679 = vmatpush1.bf16.msra.mxu0 %v2607
    %2680 = vmatprep.subr.bf16.mxu0 0
    %2681 = vmatpush1.bf16.msra.mxu0 %v2608
    %2682 = vmatprep.subr.bf16.mxu0 0
    %2683 = vmatpush1.bf16.msra.mxu0 %v2609
    %2684 = vmatprep.subr.bf16.mxu0 0
    %2685 = vmatpush1.bf16.msra.mxu0 %v2610
    %2686 = vmatprep.subr.bf16.mxu0 0
    %2687 = vmatpush1.bf16.msra.mxu0 %v2611
    %2688 = vmatprep.subr.bf16.mxu0 0
    %2689 = vmatpush1.bf16.msra.mxu0 %v2612
    %2690 = vmatprep.subr.bf16.mxu0 0
    %2691 = vmatpush1.bf16.msra.mxu0 %v2613
    %2692 = vmatprep.subr.bf16.mxu0 0
    %2693 = vmatpush1.bf16.msra.mxu0 %v2614
    %2694 = vmatprep.subr.bf16.mxu0 0
    %2695 = vmatpush1.bf16.msra.mxu0 %v2615
    %2696 = vmatprep.mubr.bf16.mxu0 %v2398
    %2697 = vmatmul.mubr.bf16.gmra.mrb[0].mxu0 %v2397
    %v2698 = vpop.f32.mrb[0].mxu0
    %v2699 = vadd.f32 %v2470, %v2698
    %v2700 = vpop.f32.mrb[0].mxu0
    %v2701 = vpop.f32.mrb[0].mxu0
    %v2702 = vpop.f32.mrb[0].mxu0
    %2703 = vdwg.mxu0
    %2704 = vmatprep.subr.bf16.mxu0 0
    %2705 = vmatpush1.bf16.msra.mxu0 %v2616
    %2706 = vmatprep.subr.bf16.mxu0 0
    %2707 = vmatpush1.bf16.msra.mxu0 %v2617
    %2708 = vmatprep.subr.bf16.mxu0 0
    %2709 = vmatpush1.bf16.msra.mxu0 %v2618
    %2710 = vmatprep.subr.bf16.mxu0 0
    %2711 = vmatpush1.bf16.msra.mxu0 %v2619
    %2712 = vmatprep.subr.bf16.mxu0 0
    %2713 = vmatpush1.bf16.msra.mxu0 %v2620
    %2714 = vmatprep.subr.bf16.mxu0 0
    %2715 = vmatpush1.bf16.msra.mxu0 %v2621
    %2716 = vmatprep.subr.bf16.mxu0 0
    %2717 = vmatpush1.bf16.msra.mxu0 %v2622
    %2718 = vmatprep.subr.bf16.mxu0 0
    %2719 = vmatpush1.bf16.msra.mxu0 %v2623
    %2720 = vmatprep.subr.bf16.mxu0 0
    %2721 = vmatpush1.bf16.msra.mxu0 %v2624
    %2722 = vmatprep.subr.bf16.mxu0 0
    %2723 = vmatpush1.bf16.msra.mxu0 %v2625
    %2724 = vmatprep.subr.bf16.mxu0 0
    %2725 = vmatpush1.bf16.msra.mxu0 %v2626
    %2726 = vmatprep.subr.bf16.mxu0 0
    %2727 = vmatpush1.bf16.msra.mxu0 %v2627
    %2728 = vmatprep.subr.bf16.mxu0 0
    %2729 = vmatpush1.bf16.msra.mxu0 %v2628
    %2730 = vmatprep.subr.bf16.mxu0 0
    %2731 = vmatpush1.bf16.msra.mxu0 %v2629
    %2732 = vmatprep.subr.bf16.mxu0 0
    %2733 = vmatpush1.bf16.msra.mxu0 %v2630
    %2734 = vmatprep.subr.bf16.mxu0 0
    %2735 = vmatpush1.bf16.msra.mxu0 %v2631
    %2736 = vmatprep.mubr.bf16.mxu0 %v2400
    %2737 = vmatmul.mubr.bf16.gmra.mrb[0].mxu0 %v2399
    %v2738 = vpop.f32.mrb[0].mxu0
    %v2739 = vadd.f32 %v2699, %v2738
    %v2740 = vpop.f32.mrb[0].mxu0
    %v2741 = vpop.f32.mrb[0].mxu0
    %v2742 = vpop.f32.mrb[0].mxu0
    %2743 = vdwg.mxu0
    %v2744 = vpack.c.bf16 %v750, %v750
    %v2745 = vpack.c.bf16 %v751, %v751
    %v2746 = vpack.c.bf16 %v752, %v752
    %v2747 = vpack.c.bf16 %v753, %v753
    %v2748 = vpack.c.bf16 %v754, %v754
    %v2749 = vpack.c.bf16 %v755, %v755
    %v2750 = vpack.c.bf16 %v756, %v756
    %v2751 = vpack.c.bf16 %v757, %v757
    %v2752 = vld [vmem:[%s21] sm:$0xf]
    %v2753 = vld [vmem:[%s21 + $0x4] sm:$0xf]
    %v2754 = vld [vmem:[%s21 + $0x8] sm:$0xf]
    %v2755 = vld [vmem:[%s21 + $0xc] sm:$0xf]
    %v2756 = vld [vmem:[%s21 + $0x10] sm:$0xf]
    %v2757 = vld [vmem:[%s21 + $0x14] sm:$0xf]
    %v2758 = vld [vmem:[%s21 + $0x18] sm:$0xf]
    %v2759 = vld [vmem:[%s21 + $0x1c] sm:$0xf]
    %v2760 = vld [vmem:[%s21 + $0x20] sm:$0xf]
    %v2761 = vld [vmem:[%s21 + $0x24] sm:$0xf]
    %v2762 = vld [vmem:[%s21 + $0x28] sm:$0xf]
    %v2763 = vld [vmem:[%s21 + $0x2c] sm:$0xf]
    %v2764 = vld [vmem:[%s21 + $0x30] sm:$0xf]
    %v2765 = vld [vmem:[%s21 + $0x34] sm:$0xf]
    %v2766 = vld [vmem:[%s21 + $0x38] sm:$0xf]
    %v2767 = vld [vmem:[%s21 + $0x3c] sm:$0xf]
    %v2768 = vpack.c.bf16 %v1746, %v1746
    %v2769 = vld [vmem:[#allocation16] sm:$0xf]
    %v2770 = vld [vmem:[#allocation16 + $0x4] sm:$0xf]
    %v2771 = vld [vmem:[#allocation16 + $0x8] sm:$0xf]
    %v2772 = vld [vmem:[#allocation16 + $0xc] sm:$0xf]
    %v2773 = vld [vmem:[#allocation16 + $0x10] sm:$0xf]
    %v2774 = vld [vmem:[#allocation16 + $0x14] sm:$0xf]
    %v2775 = vld [vmem:[#allocation16 + $0x18] sm:$0xf]
    %v2776 = vld [vmem:[#allocation16 + $0x1c] sm:$0xf]
    %v2777 = vld [vmem:[#allocation16 + $0x20] sm:$0xf]
    %v2778 = vld [vmem:[#allocation16 + $0x24] sm:$0xf]
    %v2779 = vld [vmem:[#allocation16 + $0x28] sm:$0xf]
    %v2780 = vld [vmem:[#allocation16 + $0x2c] sm:$0xf]
    %v2781 = vld [vmem:[#allocation16 + $0x30] sm:$0xf]
    %v2782 = vld [vmem:[#allocation16 + $0x34] sm:$0xf]
    %v2783 = vld [vmem:[#allocation16 + $0x38] sm:$0xf]
    %v2784 = vld [vmem:[#allocation16 + $0x3c] sm:$0xf]
    %v2801 = vunpack.c.l.b16 %v2769
    %v2802 = vunpack.c.l.b16 %v2770
    %v2803 = vunpack.c.l.b16 %v2771
    %v2804 = vunpack.c.l.b16 %v2772
    %v2805 = vunpack.c.l.b16 %v2773
    %v2806 = vunpack.c.l.b16 %v2774
    %v2807 = vunpack.c.l.b16 %v2775
    %v2808 = vunpack.c.l.b16 %v2776
    %v2809 = vunpack.c.l.b16 %v2777
    %v2810 = vunpack.c.l.b16 %v2778
    %v2811 = vunpack.c.l.b16 %v2779
    %v2812 = vunpack.c.l.b16 %v2780
    %v2813 = vunpack.c.l.b16 %v2781
    %v2814 = vunpack.c.l.b16 %v2782
    %v2815 = vunpack.c.l.b16 %v2783
    %v2816 = vunpack.c.l.b16 %v2784
    %v2817 = vpack.c.b16 %v2802, %v2801
    %v2818 = vpack.c.b16 %v2804, %v2803
    %v2819 = vpack.c.b16 %v2806, %v2805
    %v2820 = vpack.c.b16 %v2808, %v2807
    %v2821 = vpack.c.b16 %v2810, %v2809
    %v2822 = vpack.c.b16 %v2812, %v2811
    %v2823 = vpack.c.b16 %v2814, %v2813
    %v2824 = vpack.c.b16 %v2816, %v2815
    %2833 = vmatprep.subr.bf16.mxu0 0
    %2834 = vmatpush1.bf16.msra.mxu0 %v2817
    %2835 = vmatprep.subr.bf16.mxu0 0
    %2836 = vmatpush1.bf16.msra.mxu0 %v2818
    %2837 = vmatprep.subr.bf16.mxu0 0
    %2838 = vmatpush1.bf16.msra.mxu0 %v2819
    %2839 = vmatprep.subr.bf16.mxu0 0
    %2840 = vmatpush1.bf16.msra.mxu0 %v2820
    %2841 = vmatprep.subr.bf16.mxu0 0
    %2842 = vmatpush1.bf16.msra.mxu0 %v2821
    %2843 = vmatprep.subr.bf16.mxu0 0
    %2844 = vmatpush1.bf16.msra.mxu0 %v2822
    %2845 = vmatprep.subr.bf16.mxu0 0
    %2846 = vmatpush1.bf16.msra.mxu0 %v2823
    %2847 = vmatprep.subr.bf16.mxu0 0
    %2848 = vmatpush1.bf16.msra.mxu0 %v2824
    %2849 = vmatprep.subr.bf16.mxu0 0
    %2850 = vmatpush1.bf16.msra.mxu0 0
    %2851 = vmatprep.subr.bf16.mxu0 0
    %2852 = vmatpush1.bf16.msra.mxu0 0
    %2853 = vmatprep.subr.bf16.mxu0 0
    %2854 = vmatpush1.bf16.msra.mxu0 0
    %2855 = vmatprep.subr.bf16.mxu0 0
    %2856 = vmatpush1.bf16.msra.mxu0 0
    %2857 = vmatprep.subr.bf16.mxu0 0
    %2858 = vmatpush1.bf16.msra.mxu0 0
    %2859 = vmatprep.subr.bf16.mxu0 0
    %2860 = vmatpush1.bf16.msra.mxu0 0
    %2861 = vmatprep.subr.bf16.mxu0 0
    %2862 = vmatpush1.bf16.msra.mxu0 0
    %2863 = vmatprep.subr.bf16.mxu0 0
    %2864 = vmatpush1.bf16.msra.mxu0 0
    %2865 = vmatprep.mubr.bf16.mxu0 0
    %2866 = vmatmul.mubr.bf16.gmra.mrb[0].mxu0 %v2768
    %v2867 = vpop.f32.mrb[0].mxu0
    %v2868 = vadd.f32 0.0, %v2867
    %v2869 = vpop.f32.mrb[0].mxu0
    %v2870 = vpop.f32.mrb[0].mxu0
    %v2871 = vpop.f32.mrb[0].mxu0
    %2872 = vdwg.mxu0
    %v2881 = vunpack.c.l.b16 %v2744
    %v2882 = vunpack.c.l.b16 %v2745
    %v2883 = vunpack.c.l.b16 %v2746
    %v2884 = vunpack.c.l.b16 %v2747
    %v2885 = vunpack.c.l.b16 %v2748
    %v2886 = vunpack.c.l.b16 %v2749
    %v2887 = vunpack.c.l.b16 %v2750
    %v2888 = vunpack.c.l.b16 %v2751
    %vm2889 = vcmask 1041409
    %v2890 = vsel %vm2889, %v2882, %v2881
    %vm2891 = vcmask 1042434
    %v2892 = vsel %vm2891, %v2883, %v2890
    %vm2893 = vcmask 1043459
    %v2894 = vsel %vm2893, %v2884, %v2892
    %vm2895 = vcmask 1044484
    %v2896 = vsel %vm2895, %v2885, %v2894
    %vm2897 = vcmask 1045509
    %v2898 = vsel %vm2897, %v2886, %v2896
    %vm2899 = vcmask 1046534
    %v2900 = vsel %vm2899, %v2887, %v2898
    %vm2901 = vcmask 1047559
    %v2902 = vsel %vm2901, %v2888, %v2900
    %v2903 = vpack.c.b16 %v2902, %v2902
    %v2921 = vunpack.c.l.b16 %v2752
    %v2922 = vunpack.c.l.b16 %v2753
    %v2923 = vunpack.c.l.b16 %v2754
    %v2924 = vunpack.c.l.b16 %v2755
    %v2925 = vunpack.c.l.b16 %v2756
    %v2926 = vunpack.c.l.b16 %v2757
    %v2927 = vunpack.c.l.b16 %v2758
    %v2928 = vunpack.c.l.b16 %v2759
    %v2929 = vunpack.c.l.b16 %v2760
    %v2930 = vunpack.c.l.b16 %v2761
    %v2931 = vunpack.c.l.b16 %v2762
    %v2932 = vunpack.c.l.b16 %v2763
    %v2933 = vunpack.c.l.b16 %v2764
    %v2934 = vunpack.c.l.b16 %v2765
    %v2935 = vunpack.c.l.b16 %v2766
    %v2936 = vunpack.c.l.b16 %v2767
    %v2937 = vpack.c.b16 %v2922, %v2921
    %v2938 = vpack.c.b16 %v2924, %v2923
    %v2939 = vpack.c.b16 %v2926, %v2925
    %v2940 = vpack.c.b16 %v2928, %v2927
    %v2941 = vpack.c.b16 %v2930, %v2929
    %v2942 = vpack.c.b16 %v2932, %v2931
    %v2943 = vpack.c.b16 %v2934, %v2933
    %v2944 = vpack.c.b16 %v2936, %v2935
    %2953 = vmatprep.subr.bf16.mxu0 0
    %2954 = vmatpush1.bf16.msra.mxu0 %v2937
    %2955 = vmatprep.subr.bf16.mxu0 0
    %2956 = vmatpush1.bf16.msra.mxu0 %v2938
    %2957 = vmatprep.subr.bf16.mxu0 0
    %2958 = vmatpush1.bf16.msra.mxu0 %v2939
    %2959 = vmatprep.subr.bf16.mxu0 0
    %2960 = vmatpush1.bf16.msra.mxu0 %v2940
    %2961 = vmatprep.subr.bf16.mxu0 0
    %2962 = vmatpush1.bf16.msra.mxu0 %v2941
    %2963 = vmatprep.subr.bf16.mxu0 0
    %2964 = vmatpush1.bf16.msra.mxu0 %v2942
    %2965 = vmatprep.subr.bf16.mxu0 0
    %2966 = vmatpush1.bf16.msra.mxu0 %v2943
    %2967 = vmatprep.subr.bf16.mxu0 0
    %2968 = vmatpush1.bf16.msra.mxu0 %v2944
    %2969 = vmatprep.subr.bf16.mxu0 0
    %2970 = vmatpush1.bf16.msra.mxu0 0
    %2971 = vmatprep.subr.bf16.mxu0 0
    %2972 = vmatpush1.bf16.msra.mxu0 0
    %2973 = vmatprep.subr.bf16.mxu0 0
    %2974 = vmatpush1.bf16.msra.mxu0 0
    %2975 = vmatprep.subr.bf16.mxu0 0
    %2976 = vmatpush1.bf16.msra.mxu0 0
    %2977 = vmatprep.subr.bf16.mxu0 0
    %2978 = vmatpush1.bf16.msra.mxu0 0
    %2979 = vmatprep.subr.bf16.mxu0 0
    %2980 = vmatpush1.bf16.msra.mxu0 0
    %2981 = vmatprep.subr.bf16.mxu0 0
    %2982 = vmatpush1.bf16.msra.mxu0 0
    %2983 = vmatprep.subr.bf16.mxu0 0
    %2984 = vmatpush1.bf16.msra.mxu0 0
    %2985 = vmatprep.mubr.bf16.mxu0 0
    %2986 = vmatmul.mubr.bf16.gmra.mrb[0].mxu0 %v2903
    %v2987 = vpop.f32.mrb[0].mxu0
    %v2988 = vadd.f32 %v2868, %v2987
    %v2989 = vpop.f32.mrb[0].mxu0
    %v2990 = vpop.f32.mrb[0].mxu0
    %v2991 = vpop.f32.mrb[0].mxu0
    %2992 = vdwg.mxu0
    %v2993 = vpack.c.bf16 %v2739, %v2739
    %v2994 = vld [vmem:[#allocation17] sm:$0xf]
    %v2995 = vld [vmem:[#allocation17 + $0x4] sm:$0xf]
    %v2996 = vld [vmem:[#allocation17 + $0x8] sm:$0xf]
    %v2997 = vld [vmem:[#allocation17 + $0xc] sm:$0xf]
    %v2998 = vld [vmem:[#allocation17 + $0x10] sm:$0xf]
    %v2999 = vld [vmem:[#allocation17 + $0x14] sm:$0xf]
    %v3000 = vld [vmem:[#allocation17 + $0x18] sm:$0xf]
    %v3001 = vld [vmem:[#allocation17 + $0x1c] sm:$0xf]
    %v3002 = vld [vmem:[#allocation17 + $0x20] sm:$0xf]
    %v3003 = vld [vmem:[#allocation17 + $0x24] sm:$0xf]
    %v3004 = vld [vmem:[#allocation17 + $0x28] sm:$0xf]
    %v3005 = vld [vmem:[#allocation17 + $0x2c] sm:$0xf]
    %v3006 = vld [vmem:[#allocation17 + $0x30] sm:$0xf]
    %v3007 = vld [vmem:[#allocation17 + $0x34] sm:$0xf]
    %v3008 = vld [vmem:[#allocation17 + $0x38] sm:$0xf]
    %v3009 = vld [vmem:[#allocation17 + $0x3c] sm:$0xf]
    %v3026 = vunpack.c.l.b16 %v2994
    %v3027 = vunpack.c.l.b16 %v2995
    %v3028 = vunpack.c.l.b16 %v2996
    %v3029 = vunpack.c.l.b16 %v2997
    %v3030 = vunpack.c.l.b16 %v2998
    %v3031 = vunpack.c.l.b16 %v2999
    %v3032 = vunpack.c.l.b16 %v3000
    %v3033 = vunpack.c.l.b16 %v3001
    %v3034 = vunpack.c.l.b16 %v3002
    %v3035 = vunpack.c.l.b16 %v3003
    %v3036 = vunpack.c.l.b16 %v3004
    %v3037 = vunpack.c.l.b16 %v3005
    %v3038 = vunpack.c.l.b16 %v3006
    %v3039 = vunpack.c.l.b16 %v3007
    %v3040 = vunpack.c.l.b16 %v3008
    %v3041 = vunpack.c.l.b16 %v3009
    %v3042 = vpack.c.b16 %v3027, %v3026
    %v3043 = vpack.c.b16 %v3029, %v3028
    %v3044 = vpack.c.b16 %v3031, %v3030
    %v3045 = vpack.c.b16 %v3033, %v3032
    %v3046 = vpack.c.b16 %v3035, %v3034
    %v3047 = vpack.c.b16 %v3037, %v3036
    %v3048 = vpack.c.b16 %v3039, %v3038
    %v3049 = vpack.c.b16 %v3041, %v3040
    %3058 = vmatprep.subr.bf16.mxu0 0
    %3059 = vmatpush1.bf16.msra.mxu0 %v3042
    %3060 = vmatprep.subr.bf16.mxu0 0
    %3061 = vmatpush1.bf16.msra.mxu0 %v3043
    %3062 = vmatprep.subr.bf16.mxu0 0
    %3063 = vmatpush1.bf16.msra.mxu0 %v3044
    %3064 = vmatprep.subr.bf16.mxu0 0
    %3065 = vmatpush1.bf16.msra.mxu0 %v3045
    %3066 = vmatprep.subr.bf16.mxu0 0
    %3067 = vmatpush1.bf16.msra.mxu0 %v3046
    %3068 = vmatprep.subr.bf16.mxu0 0
    %3069 = vmatpush1.bf16.msra.mxu0 %v3047
    %3070 = vmatprep.subr.bf16.mxu0 0
    %3071 = vmatpush1.bf16.msra.mxu0 %v3048
    %3072 = vmatprep.subr.bf16.mxu0 0
    %3073 = vmatpush1.bf16.msra.mxu0 %v3049
    %3074 = vmatprep.subr.bf16.mxu0 0
    %3075 = vmatpush1.bf16.msra.mxu0 0
    %3076 = vmatprep.subr.bf16.mxu0 0
    %3077 = vmatpush1.bf16.msra.mxu0 0
    %3078 = vmatprep.subr.bf16.mxu0 0
    %3079 = vmatpush1.bf16.msra.mxu0 0
    %3080 = vmatprep.subr.bf16.mxu0 0
    %3081 = vmatpush1.bf16.msra.mxu0 0
    %3082 = vmatprep.subr.bf16.mxu0 0
    %3083 = vmatpush1.bf16.msra.mxu0 0
    %3084 = vmatprep.subr.bf16.mxu0 0
    %3085 = vmatpush1.bf16.msra.mxu0 0
    %3086 = vmatprep.subr.bf16.mxu0 0
    %3087 = vmatpush1.bf16.msra.mxu0 0
    %3088 = vmatprep.subr.bf16.mxu0 0
    %3089 = vmatpush1.bf16.msra.mxu0 0
    %3090 = vmatprep.mubr.bf16.mxu0 0
    %3091 = vmatmul.mubr.bf16.gmra.mrb[0].mxu0 %v2993
    %v3092 = vpop.f32.mrb[0].mxu0
    %v3093 = vadd.f32 0.0, %v3092
    %v3094 = vpop.f32.mrb[0].mxu0
    %v3095 = vpop.f32.mrb[0].mxu0
    %v3096 = vpop.f32.mrb[0].mxu0
    %3097 = vdwg.mxu0
    %v3098 = vadd.f32 %v2988, %v3093
    %v3099 = vld [vmem:[%s24] sm:$0x1]
    %v3101 = vlaneseq
    %v3102 = vshrl.u32 %v3101, 7
    %v3103 = vsub.s32 0, %v3102
    %v3104 = vrot.slane %v3099, %v3103
    %v3106 = vadd.f32 %v3098, %v3104
    %3107 = vst [vmem:[#allocation19] sm:$0xff] %v3106
    %v3116 = vsel %vm2889, %v751, %v750
    %v3117 = vsel %vm2891, %v752, %v3116
    %v3118 = vsel %vm2893, %v753, %v3117
    %v3119 = vsel %vm2895, %v754, %v3118
    %v3120 = vsel %vm2897, %v755, %v3119
    %v3121 = vsel %vm2899, %v756, %v3120
    %v3122 = vsel %vm2901, %v757, %v3121
    %3124 = vst [vmem:[#allocation19 + $0x8] sm:$0xff] %v3122
    %3125 = vst [vmem:[#allocation19 + $0x10] sm:$0xff] %v1746
    %3126 = vst [vmem:[#allocation19 + $0x18] sm:$0xff] %v2739
    // Predicated region
    $region142: #{tpu_custom_call.1} parent=1 // pred_check
      _
    $region143: #{tpu_custom_call.1} parent=1 // pred_check_branch
      %3128 = sbr.rel (0) target = $region145
    $region144: #{tpu_custom_call.1} parent=1 // pred_region
      %s3130 = ssub.s32 512, 512
      %3131 = vsyncadd [#allocation4], %s3130
      %s3133 = sshll.u32 [#allocation19], 4
      %s3134 = int_to_ptr.vmem [resolvable:$true] %s3133
      %3136 = dma.vmem_to_hbm [thread:$0]  %s3134, 512, %s25, [#allocation4]
    $region145: #{tpu_custom_call.1} parent=1 // pred_fallthru
      _
    // Predicated region
    $region146: #{tpu_custom_call.1} parent=1 // pred_check
      _
    $region147: #{tpu_custom_call.1} parent=1 // pred_check_branch
      %3138 = sbr.rel (0) target = $region149
    $region148: #{tpu_custom_call.1} parent=1 // pred_region
      %3139 = dma.done [#allocation4], 512
    $region149: #{tpu_custom_call.1} parent=1 // pred_fallthru
      _
    %3140 = vsyncpa [#allocation3], 1
    %3141 = vsyncpa [#allocation6], 1
    %3142 = vsyncpa [#allocation9], 1
    %3143 = vsyncpa [#allocation12], 1
    %3144 = vsyncpa [#allocation15], 1
    %3145 = vsyncpa [#allocation18], 1
    %3146 = vsyncpa [#allocation4], 1

</llo_original>
